<compile_context>
chip_gen: v6e
topology: v6e:2x2x1
jax: 0.10.0
libtpu: 0.0.40
codegen_flags: <defaults>
</compile_context>

<pallas_src>
import functools
import math

import jax
import jax.numpy as jnp
from jax.experimental import pallas as pl
from jax.experimental.pallas import tpu as pltpu


# ---------------------------------------------------------------------------
# Fused Pallas kernel: in_proj + multi-head attention + merge + out_proj
# ---------------------------------------------------------------------------

def _fused_self_attention_kernel(tok_ref, w_in_ref, b_in_ref, w_out_ref, b_out_ref,
                                 o_ref, p_ref, merged_ref, *, num_heads):
    # tok_ref   : (1, L, C)   tokens for one batch element
    # w_in_ref  : (C, 3C)     in-proj weight, pre-transposed, q-part pre-scaled
    # b_in_ref  : (1, 3C)     in-proj bias, q-part pre-scaled
    # w_out_ref : (C, C)      out-proj weight, pre-transposed
    # b_out_ref : (1, C)      out-proj bias
    # o_ref     : (1, L, C)   attention output (merged-head layout, lane-dense)
    # p_ref     : (1, L, L)   head-averaged attention weights
    # merged_ref: (L, C)      VMEM scratch for the merged per-head outputs
    L, C = merged_ref.shape
    Dh = C // num_heads

    tok = tok_ref[0]                                                    # (L, C)

    # in-projection: (L, 3C)
    qkv = jnp.dot(tok, w_in_ref[...],
                  preferred_element_type=jnp.float32) + b_in_ref[...]
    q = qkv[:, 0:C]            # 1/sqrt(Dh) already folded into w_in / b_in
    k = qkv[:, C:2 * C]
    v = qkv[:, 2 * C:3 * C]

    p_sum = jnp.zeros((L, L), dtype=jnp.float32)
    for h in range(num_heads):                      # static unroll, heads on lanes
        lo, hi = h * Dh, (h + 1) * Dh
        qh = q[:, lo:hi]                                                # (L, Dh)
        kh = k[:, lo:hi]
        vh = v[:, lo:hi]
        # scores: contract head dim directly (no explicit transpose)
        s = jax.lax.dot_general(qh, kh, (((1,), (1,)), ((), ())),
                                preferred_element_type=jnp.float32)     # (L, L)
        m = jnp.max(s, axis=-1, keepdims=True)
        e = jnp.exp(s - m)
        denom = jnp.sum(e, axis=-1, keepdims=True)
        p = e * pl.reciprocal(denom, approx=True)                       # softmax
        p_sum = p_sum + p
        merged_ref[:, lo:hi] = jnp.dot(p, vh,
                                       preferred_element_type=jnp.float32)

    # out-projection on the merged (L, C) slab, written lane-dense
    out = jnp.dot(merged_ref[...], w_out_ref[...],
                  preferred_element_type=jnp.float32) + b_out_ref[...]
    o_ref[0] = out
    p_ref[0] = p_sum * (1.0 / num_heads)           # PyTorch average_attn_weights=True


def fused_self_attention(tokens, w_in_t, b_in, w_out_t, b_out, *, num_heads):
    """tokens: (B, L, C). Returns (attn_out (B, L, C), attn_weights (B, L, L))."""
    B, L, C = tokens.shape
    kernel = functools.partial(_fused_self_attention_kernel, num_heads=num_heads)
    return pl.pallas_call(
        kernel,
        out_shape=(
            jax.ShapeDtypeStruct((B, L, C), jnp.float32),
            jax.ShapeDtypeStruct((B, L, L), jnp.float32),
        ),
        grid=(B,),
        in_specs=[
            pl.BlockSpec((1, L, C), lambda b: (b, 0, 0)),
            pl.BlockSpec((C, 3 * C), lambda b: (0, 0)),
            pl.BlockSpec((1, 3 * C), lambda b: (0, 0)),
            pl.BlockSpec((C, C), lambda b: (0, 0)),
            pl.BlockSpec((1, C), lambda b: (0, 0)),
        ],
        out_specs=(
            pl.BlockSpec((1, L, C), lambda b: (b, 0, 0)),
            pl.BlockSpec((1, L, L), lambda b: (b, 0, 0)),
        ),
        scratch_shapes=[pltpu.VMEM((L, C), jnp.float32)],
        compiler_params=pltpu.CompilerParams(
            dimension_semantics=("parallel",),
        ),
    )(tokens, w_in_t, b_in, w_out_t, b_out)


# ---------------------------------------------------------------------------
# SelfAttention forward (layout plumbing in JAX wrapper, everything else fused)
# ---------------------------------------------------------------------------

def self_attention_forward(x, params, *, num_heads):
    """x: (B, C, H, W) float32 -> (attn_output (B,C,H,W), attn_weights (B,L,L))."""
    B, C, H, W = x.shape
    L = H * W
    Dh = C // num_heads
    scale = 1.0 / math.sqrt(Dh)

    # (B, C, H, W) -> (B, C, L) -> (B, L, C): per-batch token slabs
    tokens = jnp.transpose(x.reshape(B, C, L), (0, 2, 1))

    # Pre-transpose weights to (K, N) and fold the 1/sqrt(Dh) scale into the
    # q third of the in-projection (weights + bias) so it is free in-kernel.
    scale_vec = jnp.concatenate([
        jnp.full((C,), scale, jnp.float32),
        jnp.ones((2 * C,), jnp.float32),
    ])
    w_in_t = params["in_proj_weight"].T * scale_vec[None, :]       # (C, 3C)
    b_in = (params["in_proj_bias"] * scale_vec).reshape(1, 3 * C)
    w_out_t = params["out_proj_weight"].T                          # (C, C)
    b_out = params["out_proj_bias"].reshape(1, C)

    attn_out, attn_weights = fused_self_attention(
        tokens, w_in_t, b_in, w_out_t, b_out, num_heads=num_heads)

    # (B, L, C) -> (B, C, L) -> (B, C, H, W)
    attn_out = jnp.transpose(attn_out, (0, 2, 1)).reshape(B, C, H, W)
    return attn_out, attn_weights


# ---------------------------------------------------------------------------
# Pure-JAX reference (correctness check only)
# ---------------------------------------------------------------------------

def self_attention_reference(x, params, *, num_heads):
    B, C, H, W = x.shape
    L = H * W
    Dh = C // num_heads
    tok = jnp.transpose(x.reshape(B, C, L), (0, 2, 1))             # (B, L, C)
    qkv = tok @ params["in_proj_weight"].T + params["in_proj_bias"]
    q, k, v = jnp.split(qkv, 3, axis=-1)

    def to_heads(t):
        return t.reshape(B, L, num_heads, Dh).transpose(0, 2, 1, 3)

    qh, kh, vh = to_heads(q), to_heads(k), to_heads(v)
    s = jnp.einsum("bhld,bhmd->bhlm", qh, kh) / math.sqrt(Dh)
    p = jax.nn.softmax(s, axis=-1)
    oh = jnp.einsum("bhlm,bhmd->bhld", p, vh)
    out = oh.transpose(0, 2, 1, 3).reshape(B, L, C)
    out = out @ params["out_proj_weight"].T + params["out_proj_bias"]
    weights = p.mean(axis=1)
    out = jnp.transpose(out, (0, 2, 1)).reshape(B, C, H, W)
    return out, weights


# ---------------------------------------------------------------------------
# Parameter init (deterministic, synthetic; mirrors nn.MultiheadAttention shapes)
# ---------------------------------------------------------------------------

def init_params(key, channels):
    # num_heads is a static Python int and deliberately NOT stored here (it must
    # not become a traced value under jit).
    k1, k2 = jax.random.split(key)
    bound = 1.0 / math.sqrt(channels)
    return {
        # in_proj_weight: (3C, C), in_proj_bias: (3C,)
        "in_proj_weight": jax.random.uniform(k1, (3 * channels, channels),
                                             jnp.float32, -bound, bound),
        "in_proj_bias": jnp.zeros((3 * channels,), jnp.float32),
        # out_proj: (C, C) weight, (C,) bias
        "out_proj_weight": jax.random.uniform(k2, (channels, channels),
                                              jnp.float32, -bound, bound),
        "out_proj_bias": jnp.zeros((channels,), jnp.float32),
    }
    # TODO(synk): spectral_norm is imported but never applied in the reference
    # module's forward, so no spectral normalization is modeled here.


# ---------------------------------------------------------------------------
# Main
# ---------------------------------------------------------------------------

if __name__ == "__main__":
    key = jax.random.PRNGKey(0)
    kx, kp = jax.random.split(key)

    B, C, H, W = 2, 32, 8, 8        # channels=32, num_heads=8 -> head_dim=4, seq=64
    num_heads = 8

    x = jax.random.normal(kx, (B, C, H, W), dtype=jnp.float32)
    params = init_params(kp, C)

    fwd = jax.jit(functools.partial(self_attention_forward, num_heads=num_heads))
    attn_out, attn_w = fwd(x, params)
    jax.block_until_ready((attn_out, attn_w))

    ref_out, ref_w = self_attention_reference(x, params, num_heads=num_heads)
    assert attn_out.shape == (B, C, H, W)
    assert attn_w.shape == (B, H * W, H * W)
    # Tolerance slightly relaxed vs 1e-4 because the softmax denominator uses the
    # EUP approximate reciprocal (pl.reciprocal(..., approx=True)).
    assert jnp.allclose(attn_out, ref_out, atol=2e-3, rtol=2e-3)
    assert jnp.allclose(attn_w, ref_w, atol=2e-3, rtol=2e-3)

    print("KERNEL_OK")
</pallas_src>

<mosaic_0001>
module attributes {stable_mosaic.version = 11 : i64} {
  func.func @_fused_self_attention_kernel(%arg0: i32, %arg1: memref<1x64x32xf32, #tpu.memory_space<vmem>>, %arg2: memref<32x96xf32, #tpu.memory_space<vmem>>, %arg3: memref<1x96xf32, #tpu.memory_space<vmem>>, %arg4: memref<32x32xf32, #tpu.memory_space<vmem>>, %arg5: memref<1x32xf32, #tpu.memory_space<vmem>>, %arg6: memref<1x64x32xf32, #tpu.memory_space<vmem>>, %arg7: memref<1x64x64xf32, #tpu.memory_space<vmem>>, %arg8: memref<64x32xf32, #tpu.memory_space<vmem>>) attributes {dimension_semantics = [#tpu.dimension_semantics<parallel>], iteration_bounds = array<i64: 2>, scalar_prefetch = 0 : i64, scratch_operands = 1 : i64, tpu.core_type = #tpu.core_type<tc>, window_params = [{transform_indices = @transform_0, window_bounds = array<i64: 1, 64, 32>}, {pipeline_mode = #tpu.pipeline_mode<synchronous>, transform_indices = @transform_1, window_bounds = array<i64: 32, 96>}, {pipeline_mode = #tpu.pipeline_mode<synchronous>, transform_indices = @transform_2, window_bounds = array<i64: 1, 96>}, {pipeline_mode = #tpu.pipeline_mode<synchronous>, transform_indices = @transform_3, window_bounds = array<i64: 32, 32>}, {pipeline_mode = #tpu.pipeline_mode<synchronous>, transform_indices = @transform_4, window_bounds = array<i64: 1, 32>}, {transform_indices = @transform_5, window_bounds = array<i64: 1, 64, 32>}, {transform_indices = @transform_6, window_bounds = array<i64: 1, 64, 64>}]} {
    %c0 = arith.constant 0 : index
    %c0_0 = arith.constant 0 : index
    %c0_1 = arith.constant 0 : index
    %0 = vector.load %arg1[%c0, %c0_0, %c0_1] : memref<1x64x32xf32, #tpu.memory_space<vmem>>, vector<1x64x32xf32>
    %1 = vector.shape_cast %0 : vector<1x64x32xf32> to vector<64x32xf32>
    %c0_2 = arith.constant 0 : index
    %c0_3 = arith.constant 0 : index
    %2 = vector.load %arg2[%c0_2, %c0_3] : memref<32x96xf32, #tpu.memory_space<vmem>>, vector<32x96xf32>
    %cst = arith.constant dense<0.000000e+00> : vector<64x96xf32>
    %3 = tpu.matmul %1, %2, %cst {dimension_numbers = #tpu.dot_dimension_numbers<[1], [0], [0], [1], [0, 0, 1, 1], [], []>} : vector<64x32xf32>, vector<32x96xf32>, vector<64x96xf32> -> vector<64x96xf32>
    %c0_4 = arith.constant 0 : index
    %c0_5 = arith.constant 0 : index
    %4 = vector.load %arg3[%c0_4, %c0_5] : memref<1x96xf32, #tpu.memory_space<vmem>>, vector<1x96xf32>
    %5 = vector.broadcast %4 : vector<1x96xf32> to vector<64x96xf32>
    %6 = arith.addf %3, %5 : vector<64x96xf32>
    %7 = vector.extract_strided_slice %6 {offsets = [0, 0], sizes = [64, 32], strides = [1, 1]} : vector<64x96xf32> to vector<64x32xf32>
    %8 = vector.extract_strided_slice %6 {offsets = [0, 32], sizes = [64, 32], strides = [1, 1]} : vector<64x96xf32> to vector<64x32xf32>
    %9 = vector.extract_strided_slice %6 {offsets = [0, 64], sizes = [64, 32], strides = [1, 1]} : vector<64x96xf32> to vector<64x32xf32>
    %cst_6 = arith.constant 0.000000e+00 : f32
    %10 = vector.broadcast %cst_6 : f32 to vector<64x64xf32>
    %11 = vector.extract_strided_slice %7 {offsets = [0, 0], sizes = [64, 4], strides = [1, 1]} : vector<64x32xf32> to vector<64x4xf32>
    %12 = vector.extract_strided_slice %8 {offsets = [0, 0], sizes = [64, 4], strides = [1, 1]} : vector<64x32xf32> to vector<64x4xf32>
    %13 = vector.extract_strided_slice %9 {offsets = [0, 0], sizes = [64, 4], strides = [1, 1]} : vector<64x32xf32> to vector<64x4xf32>
    %cst_7 = arith.constant dense<0.000000e+00> : vector<64x64xf32>
    %14 = tpu.matmul %11, %12, %cst_7 {dimension_numbers = #tpu.dot_dimension_numbers<[1], [1], [0], [0], [0, 0, 1, 0], [], []>} : vector<64x4xf32>, vector<64x4xf32>, vector<64x64xf32> -> vector<64x64xf32>
    %cst_8 = arith.constant dense<0xFF800000> : vector<64xf32>
    %15 = vector.multi_reduction <maximumf>, %14, %cst_8 [1] : vector<64x64xf32> to vector<64xf32>
    %16 = vector.shape_cast %15 : vector<64xf32> to vector<64x1xf32>
    %17 = vector.broadcast %16 : vector<64x1xf32> to vector<64x64xf32>
    %18 = arith.subf %14, %17 : vector<64x64xf32>
    %19 = math.exp %18 : vector<64x64xf32>
    %cst_9 = arith.constant dense<0.000000e+00> : vector<64xf32>
    %20 = vector.multi_reduction <add>, %19, %cst_9 [1] : vector<64x64xf32> to vector<64xf32>
    %21 = vector.shape_cast %20 : vector<64xf32> to vector<64x1xf32>
    %22 = tpu.reciprocal %21 {approx = true} : vector<64x1xf32> -> vector<64x1xf32>
    %23 = vector.broadcast %22 : vector<64x1xf32> to vector<64x64xf32>
    %24 = arith.mulf %19, %23 : vector<64x64xf32>
    %25 = arith.addf %10, %24 : vector<64x64xf32>
    %cst_10 = arith.constant dense<0.000000e+00> : vector<64x4xf32>
    %26 = tpu.matmul %24, %13, %cst_10 {dimension_numbers = #tpu.dot_dimension_numbers<[1], [0], [0], [1], [0, 0, 1, 1], [], []>} : vector<64x64xf32>, vector<64x4xf32>, vector<64x4xf32> -> vector<64x4xf32>
    %c0_11 = arith.constant 0 : index
    %c0_12 = arith.constant 0 : index
    %27 = vector.load %arg8[%c0_11, %c0_12] : memref<64x32xf32, #tpu.memory_space<vmem>>, vector<64x4xf32>
    tpu.vector_store %arg8[%c0_11, %c0_12], %26 {strides = array<i32>} : memref<64x32xf32, #tpu.memory_space<vmem>>, vector<64x4xf32>,
    %28 = vector.extract_strided_slice %7 {offsets = [0, 4], sizes = [64, 4], strides = [1, 1]} : vector<64x32xf32> to vector<64x4xf32>
    %29 = vector.extract_strided_slice %8 {offsets = [0, 4], sizes = [64, 4], strides = [1, 1]} : vector<64x32xf32> to vector<64x4xf32>
    %30 = vector.extract_strided_slice %9 {offsets = [0, 4], sizes = [64, 4], strides = [1, 1]} : vector<64x32xf32> to vector<64x4xf32>
    %cst_13 = arith.constant dense<0.000000e+00> : vector<64x64xf32>
    %31 = tpu.matmul %28, %29, %cst_13 {dimension_numbers = #tpu.dot_dimension_numbers<[1], [1], [0], [0], [0, 0, 1, 0], [], []>} : vector<64x4xf32>, vector<64x4xf32>, vector<64x64xf32> -> vector<64x64xf32>
    %cst_14 = arith.constant dense<0xFF800000> : vector<64xf32>
    %32 = vector.multi_reduction <maximumf>, %31, %cst_14 [1] : vector<64x64xf32> to vector<64xf32>
    %33 = vector.shape_cast %32 : vector<64xf32> to vector<64x1xf32>
    %34 = vector.broadcast %33 : vector<64x1xf32> to vector<64x64xf32>
    %35 = arith.subf %31, %34 : vector<64x64xf32>
    %36 = math.exp %35 : vector<64x64xf32>
    %cst_15 = arith.constant dense<0.000000e+00> : vector<64xf32>
    %37 = vector.multi_reduction <add>, %36, %cst_15 [1] : vector<64x64xf32> to vector<64xf32>
    %38 = vector.shape_cast %37 : vector<64xf32> to vector<64x1xf32>
    %39 = tpu.reciprocal %38 {approx = true} : vector<64x1xf32> -> vector<64x1xf32>
    %40 = vector.broadcast %39 : vector<64x1xf32> to vector<64x64xf32>
    %41 = arith.mulf %36, %40 : vector<64x64xf32>
    %42 = arith.addf %25, %41 : vector<64x64xf32>
    %cst_16 = arith.constant dense<0.000000e+00> : vector<64x4xf32>
    %43 = tpu.matmul %41, %30, %cst_16 {dimension_numbers = #tpu.dot_dimension_numbers<[1], [0], [0], [1], [0, 0, 1, 1], [], []>} : vector<64x64xf32>, vector<64x4xf32>, vector<64x4xf32> -> vector<64x4xf32>
    %c0_17 = arith.constant 0 : index
    %c4 = arith.constant 4 : index
    %44 = vector.load %arg8[%c0_17, %c4] : memref<64x32xf32, #tpu.memory_space<vmem>>, vector<64x4xf32>
    tpu.vector_store %arg8[%c0_17, %c4], %43 {strides = array<i32>} : memref<64x32xf32, #tpu.memory_space<vmem>>, vector<64x4xf32>,
    %45 = vector.extract_strided_slice %7 {offsets = [0, 8], sizes = [64, 4], strides = [1, 1]} : vector<64x32xf32> to vector<64x4xf32>
    %46 = vector.extract_strided_slice %8 {offsets = [0, 8], sizes = [64, 4], strides = [1, 1]} : vector<64x32xf32> to vector<64x4xf32>
    %47 = vector.extract_strided_slice %9 {offsets = [0, 8], sizes = [64, 4], strides = [1, 1]} : vector<64x32xf32> to vector<64x4xf32>
    %cst_18 = arith.constant dense<0.000000e+00> : vector<64x64xf32>
    %48 = tpu.matmul %45, %46, %cst_18 {dimension_numbers = #tpu.dot_dimension_numbers<[1], [1], [0], [0], [0, 0, 1, 0], [], []>} : vector<64x4xf32>, vector<64x4xf32>, vector<64x64xf32> -> vector<64x64xf32>
    %cst_19 = arith.constant dense<0xFF800000> : vector<64xf32>
    %49 = vector.multi_reduction <maximumf>, %48, %cst_19 [1] : vector<64x64xf32> to vector<64xf32>
    %50 = vector.shape_cast %49 : vector<64xf32> to vector<64x1xf32>
    %51 = vector.broadcast %50 : vector<64x1xf32> to vector<64x64xf32>
    %52 = arith.subf %48, %51 : vector<64x64xf32>
    %53 = math.exp %52 : vector<64x64xf32>
    %cst_20 = arith.constant dense<0.000000e+00> : vector<64xf32>
    %54 = vector.multi_reduction <add>, %53, %cst_20 [1] : vector<64x64xf32> to vector<64xf32>
    %55 = vector.shape_cast %54 : vector<64xf32> to vector<64x1xf32>
    %56 = tpu.reciprocal %55 {approx = true} : vector<64x1xf32> -> vector<64x1xf32>
    %57 = vector.broadcast %56 : vector<64x1xf32> to vector<64x64xf32>
    %58 = arith.mulf %53, %57 : vector<64x64xf32>
    %59 = arith.addf %42, %58 : vector<64x64xf32>
    %cst_21 = arith.constant dense<0.000000e+00> : vector<64x4xf32>
    %60 = tpu.matmul %58, %47, %cst_21 {dimension_numbers = #tpu.dot_dimension_numbers<[1], [0], [0], [1], [0, 0, 1, 1], [], []>} : vector<64x64xf32>, vector<64x4xf32>, vector<64x4xf32> -> vector<64x4xf32>
    %c0_22 = arith.constant 0 : index
    %c8 = arith.constant 8 : index
    %61 = vector.load %arg8[%c0_22, %c8] : memref<64x32xf32, #tpu.memory_space<vmem>>, vector<64x4xf32>
    tpu.vector_store %arg8[%c0_22, %c8], %60 {strides = array<i32>} : memref<64x32xf32, #tpu.memory_space<vmem>>, vector<64x4xf32>,
    %62 = vector.extract_strided_slice %7 {offsets = [0, 12], sizes = [64, 4], strides = [1, 1]} : vector<64x32xf32> to vector<64x4xf32>
    %63 = vector.extract_strided_slice %8 {offsets = [0, 12], sizes = [64, 4], strides = [1, 1]} : vector<64x32xf32> to vector<64x4xf32>
    %64 = vector.extract_strided_slice %9 {offsets = [0, 12], sizes = [64, 4], strides = [1, 1]} : vector<64x32xf32> to vector<64x4xf32>
    %cst_23 = arith.constant dense<0.000000e+00> : vector<64x64xf32>
    %65 = tpu.matmul %62, %63, %cst_23 {dimension_numbers = #tpu.dot_dimension_numbers<[1], [1], [0], [0], [0, 0, 1, 0], [], []>} : vector<64x4xf32>, vector<64x4xf32>, vector<64x64xf32> -> vector<64x64xf32>
    %cst_24 = arith.constant dense<0xFF800000> : vector<64xf32>
    %66 = vector.multi_reduction <maximumf>, %65, %cst_24 [1] : vector<64x64xf32> to vector<64xf32>
    %67 = vector.shape_cast %66 : vector<64xf32> to vector<64x1xf32>
    %68 = vector.broadcast %67 : vector<64x1xf32> to vector<64x64xf32>
    %69 = arith.subf %65, %68 : vector<64x64xf32>
    %70 = math.exp %69 : vector<64x64xf32>
    %cst_25 = arith.constant dense<0.000000e+00> : vector<64xf32>
    %71 = vector.multi_reduction <add>, %70, %cst_25 [1] : vector<64x64xf32> to vector<64xf32>
    %72 = vector.shape_cast %71 : vector<64xf32> to vector<64x1xf32>
    %73 = tpu.reciprocal %72 {approx = true} : vector<64x1xf32> -> vector<64x1xf32>
    %74 = vector.broadcast %73 : vector<64x1xf32> to vector<64x64xf32>
    %75 = arith.mulf %70, %74 : vector<64x64xf32>
    %76 = arith.addf %59, %75 : vector<64x64xf32>
    %cst_26 = arith.constant dense<0.000000e+00> : vector<64x4xf32>
    %77 = tpu.matmul %75, %64, %cst_26 {dimension_numbers = #tpu.dot_dimension_numbers<[1], [0], [0], [1], [0, 0, 1, 1], [], []>} : vector<64x64xf32>, vector<64x4xf32>, vector<64x4xf32> -> vector<64x4xf32>
    %c0_27 = arith.constant 0 : index
    %c12 = arith.constant 12 : index
    %78 = vector.load %arg8[%c0_27, %c12] : memref<64x32xf32, #tpu.memory_space<vmem>>, vector<64x4xf32>
    tpu.vector_store %arg8[%c0_27, %c12], %77 {strides = array<i32>} : memref<64x32xf32, #tpu.memory_space<vmem>>, vector<64x4xf32>,
    %79 = vector.extract_strided_slice %7 {offsets = [0, 16], sizes = [64, 4], strides = [1, 1]} : vector<64x32xf32> to vector<64x4xf32>
    %80 = vector.extract_strided_slice %8 {offsets = [0, 16], sizes = [64, 4], strides = [1, 1]} : vector<64x32xf32> to vector<64x4xf32>
    %81 = vector.extract_strided_slice %9 {offsets = [0, 16], sizes = [64, 4], strides = [1, 1]} : vector<64x32xf32> to vector<64x4xf32>
    %cst_28 = arith.constant dense<0.000000e+00> : vector<64x64xf32>
    %82 = tpu.matmul %79, %80, %cst_28 {dimension_numbers = #tpu.dot_dimension_numbers<[1], [1], [0], [0], [0, 0, 1, 0], [], []>} : vector<64x4xf32>, vector<64x4xf32>, vector<64x64xf32> -> vector<64x64xf32>
    %cst_29 = arith.constant dense<0xFF800000> : vector<64xf32>
    %83 = vector.multi_reduction <maximumf>, %82, %cst_29 [1] : vector<64x64xf32> to vector<64xf32>
    %84 = vector.shape_cast %83 : vector<64xf32> to vector<64x1xf32>
    %85 = vector.broadcast %84 : vector<64x1xf32> to vector<64x64xf32>
    %86 = arith.subf %82, %85 : vector<64x64xf32>
    %87 = math.exp %86 : vector<64x64xf32>
    %cst_30 = arith.constant dense<0.000000e+00> : vector<64xf32>
    %88 = vector.multi_reduction <add>, %87, %cst_30 [1] : vector<64x64xf32> to vector<64xf32>
    %89 = vector.shape_cast %88 : vector<64xf32> to vector<64x1xf32>
    %90 = tpu.reciprocal %89 {approx = true} : vector<64x1xf32> -> vector<64x1xf32>
    %91 = vector.broadcast %90 : vector<64x1xf32> to vector<64x64xf32>
    %92 = arith.mulf %87, %91 : vector<64x64xf32>
    %93 = arith.addf %76, %92 : vector<64x64xf32>
    %cst_31 = arith.constant dense<0.000000e+00> : vector<64x4xf32>
    %94 = tpu.matmul %92, %81, %cst_31 {dimension_numbers = #tpu.dot_dimension_numbers<[1], [0], [0], [1], [0, 0, 1, 1], [], []>} : vector<64x64xf32>, vector<64x4xf32>, vector<64x4xf32> -> vector<64x4xf32>
    %c0_32 = arith.constant 0 : index
    %c16 = arith.constant 16 : index
    %95 = vector.load %arg8[%c0_32, %c16] : memref<64x32xf32, #tpu.memory_space<vmem>>, vector<64x4xf32>
    tpu.vector_store %arg8[%c0_32, %c16], %94 {strides = array<i32>} : memref<64x32xf32, #tpu.memory_space<vmem>>, vector<64x4xf32>,
    %96 = vector.extract_strided_slice %7 {offsets = [0, 20], sizes = [64, 4], strides = [1, 1]} : vector<64x32xf32> to vector<64x4xf32>
    %97 = vector.extract_strided_slice %8 {offsets = [0, 20], sizes = [64, 4], strides = [1, 1]} : vector<64x32xf32> to vector<64x4xf32>
    %98 = vector.extract_strided_slice %9 {offsets = [0, 20], sizes = [64, 4], strides = [1, 1]} : vector<64x32xf32> to vector<64x4xf32>
    %cst_33 = arith.constant dense<0.000000e+00> : vector<64x64xf32>
    %99 = tpu.matmul %96, %97, %cst_33 {dimension_numbers = #tpu.dot_dimension_numbers<[1], [1], [0], [0], [0, 0, 1, 0], [], []>} : vector<64x4xf32>, vector<64x4xf32>, vector<64x64xf32> -> vector<64x64xf32>
    %cst_34 = arith.constant dense<0xFF800000> : vector<64xf32>
    %100 = vector.multi_reduction <maximumf>, %99, %cst_34 [1] : vector<64x64xf32> to vector<64xf32>
    %101 = vector.shape_cast %100 : vector<64xf32> to vector<64x1xf32>
    %102 = vector.broadcast %101 : vector<64x1xf32> to vector<64x64xf32>
    %103 = arith.subf %99, %102 : vector<64x64xf32>
    %104 = math.exp %103 : vector<64x64xf32>
    %cst_35 = arith.constant dense<0.000000e+00> : vector<64xf32>
    %105 = vector.multi_reduction <add>, %104, %cst_35 [1] : vector<64x64xf32> to vector<64xf32>
    %106 = vector.shape_cast %105 : vector<64xf32> to vector<64x1xf32>
    %107 = tpu.reciprocal %106 {approx = true} : vector<64x1xf32> -> vector<64x1xf32>
    %108 = vector.broadcast %107 : vector<64x1xf32> to vector<64x64xf32>
    %109 = arith.mulf %104, %108 : vector<64x64xf32>
    %110 = arith.addf %93, %109 : vector<64x64xf32>
    %cst_36 = arith.constant dense<0.000000e+00> : vector<64x4xf32>
    %111 = tpu.matmul %109, %98, %cst_36 {dimension_numbers = #tpu.dot_dimension_numbers<[1], [0], [0], [1], [0, 0, 1, 1], [], []>} : vector<64x64xf32>, vector<64x4xf32>, vector<64x4xf32> -> vector<64x4xf32>
    %c0_37 = arith.constant 0 : index
    %c20 = arith.constant 20 : index
    %112 = vector.load %arg8[%c0_37, %c20] : memref<64x32xf32, #tpu.memory_space<vmem>>, vector<64x4xf32>
    tpu.vector_store %arg8[%c0_37, %c20], %111 {strides = array<i32>} : memref<64x32xf32, #tpu.memory_space<vmem>>, vector<64x4xf32>,
    %113 = vector.extract_strided_slice %7 {offsets = [0, 24], sizes = [64, 4], strides = [1, 1]} : vector<64x32xf32> to vector<64x4xf32>
    %114 = vector.extract_strided_slice %8 {offsets = [0, 24], sizes = [64, 4], strides = [1, 1]} : vector<64x32xf32> to vector<64x4xf32>
    %115 = vector.extract_strided_slice %9 {offsets = [0, 24], sizes = [64, 4], strides = [1, 1]} : vector<64x32xf32> to vector<64x4xf32>
    %cst_38 = arith.constant dense<0.000000e+00> : vector<64x64xf32>
    %116 = tpu.matmul %113, %114, %cst_38 {dimension_numbers = #tpu.dot_dimension_numbers<[1], [1], [0], [0], [0, 0, 1, 0], [], []>} : vector<64x4xf32>, vector<64x4xf32>, vector<64x64xf32> -> vector<64x64xf32>
    %cst_39 = arith.constant dense<0xFF800000> : vector<64xf32>
    %117 = vector.multi_reduction <maximumf>, %116, %cst_39 [1] : vector<64x64xf32> to vector<64xf32>
    %118 = vector.shape_cast %117 : vector<64xf32> to vector<64x1xf32>
    %119 = vector.broadcast %118 : vector<64x1xf32> to vector<64x64xf32>
    %120 = arith.subf %116, %119 : vector<64x64xf32>
    %121 = math.exp %120 : vector<64x64xf32>
    %cst_40 = arith.constant dense<0.000000e+00> : vector<64xf32>
    %122 = vector.multi_reduction <add>, %121, %cst_40 [1] : vector<64x64xf32> to vector<64xf32>
    %123 = vector.shape_cast %122 : vector<64xf32> to vector<64x1xf32>
    %124 = tpu.reciprocal %123 {approx = true} : vector<64x1xf32> -> vector<64x1xf32>
    %125 = vector.broadcast %124 : vector<64x1xf32> to vector<64x64xf32>
    %126 = arith.mulf %121, %125 : vector<64x64xf32>
    %127 = arith.addf %110, %126 : vector<64x64xf32>
    %cst_41 = arith.constant dense<0.000000e+00> : vector<64x4xf32>
    %128 = tpu.matmul %126, %115, %cst_41 {dimension_numbers = #tpu.dot_dimension_numbers<[1], [0], [0], [1], [0, 0, 1, 1], [], []>} : vector<64x64xf32>, vector<64x4xf32>, vector<64x4xf32> -> vector<64x4xf32>
    %c0_42 = arith.constant 0 : index
    %c24 = arith.constant 24 : index
    %129 = vector.load %arg8[%c0_42, %c24] : memref<64x32xf32, #tpu.memory_space<vmem>>, vector<64x4xf32>
    tpu.vector_store %arg8[%c0_42, %c24], %128 {strides = array<i32>} : memref<64x32xf32, #tpu.memory_space<vmem>>, vector<64x4xf32>,
    %130 = vector.extract_strided_slice %7 {offsets = [0, 28], sizes = [64, 4], strides = [1, 1]} : vector<64x32xf32> to vector<64x4xf32>
    %131 = vector.extract_strided_slice %8 {offsets = [0, 28], sizes = [64, 4], strides = [1, 1]} : vector<64x32xf32> to vector<64x4xf32>
    %132 = vector.extract_strided_slice %9 {offsets = [0, 28], sizes = [64, 4], strides = [1, 1]} : vector<64x32xf32> to vector<64x4xf32>
    %cst_43 = arith.constant dense<0.000000e+00> : vector<64x64xf32>
    %133 = tpu.matmul %130, %131, %cst_43 {dimension_numbers = #tpu.dot_dimension_numbers<[1], [1], [0], [0], [0, 0, 1, 0], [], []>} : vector<64x4xf32>, vector<64x4xf32>, vector<64x64xf32> -> vector<64x64xf32>
    %cst_44 = arith.constant dense<0xFF800000> : vector<64xf32>
    %134 = vector.multi_reduction <maximumf>, %133, %cst_44 [1] : vector<64x64xf32> to vector<64xf32>
    %135 = vector.shape_cast %134 : vector<64xf32> to vector<64x1xf32>
    %136 = vector.broadcast %135 : vector<64x1xf32> to vector<64x64xf32>
    %137 = arith.subf %133, %136 : vector<64x64xf32>
    %138 = math.exp %137 : vector<64x64xf32>
    %cst_45 = arith.constant dense<0.000000e+00> : vector<64xf32>
    %139 = vector.multi_reduction <add>, %138, %cst_45 [1] : vector<64x64xf32> to vector<64xf32>
    %140 = vector.shape_cast %139 : vector<64xf32> to vector<64x1xf32>
    %141 = tpu.reciprocal %140 {approx = true} : vector<64x1xf32> -> vector<64x1xf32>
    %142 = vector.broadcast %141 : vector<64x1xf32> to vector<64x64xf32>
    %143 = arith.mulf %138, %142 : vector<64x64xf32>
    %144 = arith.addf %127, %143 : vector<64x64xf32>
    %cst_46 = arith.constant dense<0.000000e+00> : vector<64x4xf32>
    %145 = tpu.matmul %143, %132, %cst_46 {dimension_numbers = #tpu.dot_dimension_numbers<[1], [0], [0], [1], [0, 0, 1, 1], [], []>} : vector<64x64xf32>, vector<64x4xf32>, vector<64x4xf32> -> vector<64x4xf32>
    %c0_47 = arith.constant 0 : index
    %c28 = arith.constant 28 : index
    %146 = vector.load %arg8[%c0_47, %c28] : memref<64x32xf32, #tpu.memory_space<vmem>>, vector<64x4xf32>
    tpu.vector_store %arg8[%c0_47, %c28], %145 {strides = array<i32>} : memref<64x32xf32, #tpu.memory_space<vmem>>, vector<64x4xf32>,
    %c0_48 = arith.constant 0 : index
    %c0_49 = arith.constant 0 : index
    %147 = vector.load %arg8[%c0_48, %c0_49] : memref<64x32xf32, #tpu.memory_space<vmem>>, vector<64x32xf32>
    %c0_50 = arith.constant 0 : index
    %c0_51 = arith.constant 0 : index
    %148 = vector.load %arg4[%c0_50, %c0_51] : memref<32x32xf32, #tpu.memory_space<vmem>>, vector<32x32xf32>
    %cst_52 = arith.constant dense<0.000000e+00> : vector<64x32xf32>
    %149 = tpu.matmul %147, %148, %cst_52 {dimension_numbers = #tpu.dot_dimension_numbers<[1], [0], [0], [1], [0, 0, 1, 1], [], []>} : vector<64x32xf32>, vector<32x32xf32>, vector<64x32xf32> -> vector<64x32xf32>
    %c0_53 = arith.constant 0 : index
    %c0_54 = arith.constant 0 : index
    %150 = vector.load %arg5[%c0_53, %c0_54] : memref<1x32xf32, #tpu.memory_space<vmem>>, vector<1x32xf32>
    %151 = vector.broadcast %150 : vector<1x32xf32> to vector<64x32xf32>
    %152 = arith.addf %149, %151 : vector<64x32xf32>
    %c0_55 = arith.constant 0 : index
    %c0_56 = arith.constant 0 : index
    %c0_57 = arith.constant 0 : index
    %153 = vector.load %arg6[%c0_55, %c0_56, %c0_57] : memref<1x64x32xf32, #tpu.memory_space<vmem>>, vector<1x64x32xf32>
    %154 = vector.shape_cast %153 : vector<1x64x32xf32> to vector<64x32xf32>
    %155 = vector.shape_cast %152 : vector<64x32xf32> to vector<1x64x32xf32>
    tpu.vector_store %arg6[%c0_55, %c0_56, %c0_57], %155 {strides = array<i32>} : memref<1x64x32xf32, #tpu.memory_space<vmem>>, vector<1x64x32xf32>,
    %cst_58 = arith.constant 1.250000e-01 : f32
    %156 = vector.broadcast %cst_58 : f32 to vector<64x64xf32>
    %157 = arith.mulf %144, %156 : vector<64x64xf32>
    %c0_59 = arith.constant 0 : index
    %c0_60 = arith.constant 0 : index
    %c0_61 = arith.constant 0 : index
    %158 = vector.load %arg7[%c0_59, %c0_60, %c0_61] : memref<1x64x64xf32, #tpu.memory_space<vmem>>, vector<1x64x64xf32>
    %159 = vector.shape_cast %158 : vector<1x64x64xf32> to vector<64x64xf32>
    %160 = vector.shape_cast %157 : vector<64x64xf32> to vector<1x64x64xf32>
    tpu.vector_store %arg7[%c0_59, %c0_60, %c0_61], %160 {strides = array<i32>} : memref<1x64x64xf32, #tpu.memory_space<vmem>>, vector<1x64x64xf32>,
    return
  }
  func.func @transform_0(%arg0: i32) -> (i32, i32, i32) {
    %c0_i32 = arith.constant 0 : i32
    %c0_i32_0 = arith.constant 0 : i32
    %c0_i32_1 = arith.constant 0 : i32
    return %arg0, %c0_i32, %c0_i32_0 : i32, i32, i32
  }
  func.func @transform_1(%arg0: i32) -> (i32, i32) {
    %c0_i32 = arith.constant 0 : i32
    %c0_i32_0 = arith.constant 0 : i32
    %c0_i32_1 = arith.constant 0 : i32
    return %c0_i32, %c0_i32_0 : i32, i32
  }
  func.func @transform_2(%arg0: i32) -> (i32, i32) {
    %c0_i32 = arith.constant 0 : i32
    %c0_i32_0 = arith.constant 0 : i32
    %c0_i32_1 = arith.constant 0 : i32
    return %c0_i32, %c0_i32_0 : i32, i32
  }
  func.func @transform_3(%arg0: i32) -> (i32, i32) {
    %c0_i32 = arith.constant 0 : i32
    %c0_i32_0 = arith.constant 0 : i32
    %c0_i32_1 = arith.constant 0 : i32
    return %c0_i32, %c0_i32_0 : i32, i32
  }
  func.func @transform_4(%arg0: i32) -> (i32, i32) {
    %c0_i32 = arith.constant 0 : i32
    %c0_i32_0 = arith.constant 0 : i32
    %c0_i32_1 = arith.constant 0 : i32
    return %c0_i32, %c0_i32_0 : i32, i32
  }
  func.func @transform_5(%arg0: i32) -> (i32, i32, i32) {
    %c0_i32 = arith.constant 0 : i32
    %c0_i32_0 = arith.constant 0 : i32
    %c0_i32_1 = arith.constant 0 : i32
    return %arg0, %c0_i32, %c0_i32_0 : i32, i32, i32
  }
  func.func @transform_6(%arg0: i32) -> (i32, i32, i32) {
    %c0_i32 = arith.constant 0 : i32
    %c0_i32_0 = arith.constant 0 : i32
    %c0_i32_1 = arith.constant 0 : i32
    return %arg0, %c0_i32, %c0_i32_0 : i32, i32, i32
  }
}

</mosaic_0001>

<llo_original>
// kernel: self_attention_forward.1
$region0: #{self_attention_forward.1}
  #allocation0 [shape = 'u32[]', space=smem, size = 0x4, offset = 0x4, fixed_abs, tag = 'smem constant byte address 0x4 - core index']
  #allocation1 [shape = 'u32[144,128]{1,0:T(1,128)}', space=vmem, size = 0x12000, scoped, tag = 'internal scratch']
  #allocation2 [shape = 'f32[64,32]{1,0:T(8,128)}', space=vmem, size = 0x8000, scoped, tag = 'scratch operand']
  %s0 = inlined_call_operand.vmem [shape: f32[2,64,32], index: 0, kind: input, shape index: {}]
  %s1 = inlined_call_operand.vmem [shape: f32[32,96], index: 1, kind: input, shape index: {}]
  %s2 = inlined_call_operand.vmem [shape: f32[1,96], index: 2, kind: input, shape index: {}]
  %s3 = inlined_call_operand.vmem [shape: f32[32,32], index: 3, kind: input, shape index: {}]
  %s4 = inlined_call_operand.vmem [shape: f32[1,32], index: 4, kind: input, shape index: {}]
  %s5 = inlined_call_operand.hbm [shape: f32[2,64,32], index: 5, kind: output, shape index: {0}]
  %s6 = inlined_call_operand.hbm [shape: f32[2,64,64], index: 6, kind: output, shape index: {1}]
  %7 = xla_tuple %s5, %s6
  %s8 = sld [smem:[#allocation0]]
  $region61: #{self_attention_forward.1} parent=0
    _
  %s10 = ssub.s32 1, %s8
  %s11 = scalar_select 0, %s10, %s8
  $region1: #{self_attention_forward.1} parent=0
    #allocation3 [shape = 'u8[65536]{0}', space=vmem, size = 0x10000, scoped, tag = 'output window, operand 0']
    #allocation4 [shape = 's32[2]{0}', space=sflag, size = 0x8, scoped, tag = 'scoped memory for self_attention_forward.1']
    #allocation5 [shape = 'u8[65536]{0}', space=vmem, size = 0x10000, scoped, tag = 'output window, operand 1']
    #allocation6 [shape = 's32[2]{0}', space=sflag, size = 0x8, scoped, tag = 'scoped memory for self_attention_forward.1']
    %12 = vsyncpa [#allocation4], 0
    %s13 = scalar_lea.sflag [#allocation4], 1
    %14 = vsyncpa %s13, 0
    %15 = vsyncpa [#allocation6], 0
    %s16 = scalar_lea.sflag [#allocation6], 1
    %17 = vsyncpa %s16, 0
    loop: start=0, step=1, limit=4
    $region2: #{self_attention_forward.1} parent=1 // loop_pre_header
      _
    $region3: #{self_attention_forward.1} parent=1 // loop_header
      %s19 = sphi 0, %s23
      %p20 = scmp.ge.s32.totalorder %s19, 4
      %s29 = sphi 0, %s31
      %s32 = sphi 0, %s29
      %s33 = sphi 0, %s32
      %s49 = sphi 0, %s33
      %s53 = sphi 0, %s53
      %s55 = sphi 0, %s53
      %s56 = sphi 0, %s55
      %s70 = sphi 0, %s56
      %s74 = sphi 0, %s74
      %s76 = sphi 0, %s74
      %s77 = sphi 0, %s76
      %s91 = sphi 0, %s77
      %s95 = sphi 0, %s95
      %s97 = sphi 0, %s95
      %s98 = sphi 0, %s97
      %s112 = sphi 0, %s98
      %s116 = sphi 0, %s116
      %s118 = sphi 0, %s116
      %s119 = sphi 0, %s118
      %s133 = sphi 0, %s119
      %s139 = sphi 0, %s141
      %s142 = sphi 0, %s139
      %s143 = sphi 0, %s142
      %s159 = sphi 0, %s143
      %s165 = sphi 0, %s167
      %s168 = sphi 0, %s165
      %s169 = sphi 0, %s168
      %s185 = sphi 0, %s169
    $region4: #{self_attention_forward.1} parent=1 // loop_header_branch
      %22 = sbr.rel (%p20) target = $region8
    $region5: #{self_attention_forward.1} parent=1 // loop_body
      %s24 = ssub.s32 %s19, 1
      %s25 = ssub.s32 %s19, 2
      %s26 = sadd.s32 %s19, 1
      %s27 = ssub.s32 %s19, %s26
      %p28 = scmp.eq.s32.totalorder %s27, 0
      %s30 = sadd.s32 %s29, 1
      %s31 = scalar_select %p28, %s29, %s30
      %p34 = pneg %p28
      %p35 = scmp.eq.s32.totalorder %s19, 1
      %p36 = por %p34, %p35
      %p37 = scmp.ne.s32.totalorder %s29, %s32
      %p38 = scmp.eq.s32.totalorder %s19, 0
      %p39 = por %p37, %p38
      %p40 = scmp.ne.s32.totalorder %s29, %s32
      %p41 = scmp.eq.s32.totalorder %s24, 1
      %p42 = por %p40, %p41
      %p43 = scmp.ne.s32.totalorder %s32, %s33
      %p44 = scmp.eq.s32.totalorder %s24, 0
      %p45 = por %p43, %p44
      %p46 = scmp.ne.s32.totalorder %s32, %s33
      %p47 = scmp.eq.s32.totalorder %s25, 1
      %p48 = por %p46, %p47
      %p50 = scmp.ne.s32.totalorder %s33, %s49
      %p51 = scmp.eq.s32.totalorder %s25, 0
      %p52 = por %p50, %p51
      %s54 = sadd.s32 %s53, 1
      %p57 = scmp.eq.s32.totalorder %s19, 1
      %p58 = scmp.ne.s32.totalorder %s53, %s55
      %p59 = scmp.eq.s32.totalorder %s19, 0
      %p60 = por %p58, %p59
      %p61 = scmp.ne.s32.totalorder %s53, %s55
      %p62 = scmp.eq.s32.totalorder %s24, 1
      %p63 = por %p61, %p62
      %p64 = scmp.ne.s32.totalorder %s55, %s56
      %p65 = scmp.eq.s32.totalorder %s24, 0
      %p66 = por %p64, %p65
      %p67 = scmp.ne.s32.totalorder %s55, %s56
      %p68 = scmp.eq.s32.totalorder %s25, 1
      %p69 = por %p67, %p68
      %p71 = scmp.ne.s32.totalorder %s56, %s70
      %p72 = scmp.eq.s32.totalorder %s25, 0
      %p73 = por %p71, %p72
      %s75 = sadd.s32 %s74, 1
      %p78 = scmp.eq.s32.totalorder %s19, 1
      %p79 = scmp.ne.s32.totalorder %s74, %s76
      %p80 = scmp.eq.s32.totalorder %s19, 0
      %p81 = por %p79, %p80
      %p82 = scmp.ne.s32.totalorder %s74, %s76
      %p83 = scmp.eq.s32.totalorder %s24, 1
      %p84 = por %p82, %p83
      %p85 = scmp.ne.s32.totalorder %s76, %s77
      %p86 = scmp.eq.s32.totalorder %s24, 0
      %p87 = por %p85, %p86
      %p88 = scmp.ne.s32.totalorder %s76, %s77
      %p89 = scmp.eq.s32.totalorder %s25, 1
      %p90 = por %p88, %p89
      %p92 = scmp.ne.s32.totalorder %s77, %s91
      %p93 = scmp.eq.s32.totalorder %s25, 0
      %p94 = por %p92, %p93
      %s96 = sadd.s32 %s95, 1
      %p99 = scmp.eq.s32.totalorder %s19, 1
      %p100 = scmp.ne.s32.totalorder %s95, %s97
      %p101 = scmp.eq.s32.totalorder %s19, 0
      %p102 = por %p100, %p101
      %p103 = scmp.ne.s32.totalorder %s95, %s97
      %p104 = scmp.eq.s32.totalorder %s24, 1
      %p105 = por %p103, %p104
      %p106 = scmp.ne.s32.totalorder %s97, %s98
      %p107 = scmp.eq.s32.totalorder %s24, 0
      %p108 = por %p106, %p107
      %p109 = scmp.ne.s32.totalorder %s97, %s98
      %p110 = scmp.eq.s32.totalorder %s25, 1
      %p111 = por %p109, %p110
      %p113 = scmp.ne.s32.totalorder %s98, %s112
      %p114 = scmp.eq.s32.totalorder %s25, 0
      %p115 = por %p113, %p114
      %s117 = sadd.s32 %s116, 1
      %p120 = scmp.eq.s32.totalorder %s19, 1
      %p121 = scmp.ne.s32.totalorder %s116, %s118
      %p122 = scmp.eq.s32.totalorder %s19, 0
      %p123 = por %p121, %p122
      %p124 = scmp.ne.s32.totalorder %s116, %s118
      %p125 = scmp.eq.s32.totalorder %s24, 1
      %p126 = por %p124, %p125
      %p127 = scmp.ne.s32.totalorder %s118, %s119
      %p128 = scmp.eq.s32.totalorder %s24, 0
      %p129 = por %p127, %p128
      %p130 = scmp.ne.s32.totalorder %s118, %s119
      %p131 = scmp.eq.s32.totalorder %s25, 1
      %p132 = por %p130, %p131
      %p134 = scmp.ne.s32.totalorder %s119, %s133
      %p135 = scmp.eq.s32.totalorder %s25, 0
      %p136 = por %p134, %p135
      %s137 = ssub.s32 %s19, %s26
      %p138 = scmp.eq.s32.totalorder %s137, 0
      %s140 = sadd.s32 %s139, 1
      %s141 = scalar_select %p138, %s139, %s140
      %p144 = pneg %p138
      %p145 = scmp.eq.s32.totalorder %s19, 1
      %p146 = por %p144, %p145
      %p147 = scmp.ne.s32.totalorder %s139, %s142
      %p148 = scmp.eq.s32.totalorder %s19, 0
      %p149 = por %p147, %p148
      %p150 = scmp.ne.s32.totalorder %s139, %s142
      %p151 = scmp.eq.s32.totalorder %s24, 1
      %p152 = por %p150, %p151
      %p153 = scmp.ne.s32.totalorder %s142, %s143
      %p154 = scmp.eq.s32.totalorder %s24, 0
      %p155 = por %p153, %p154
      %p156 = scmp.ne.s32.totalorder %s142, %s143
      %p157 = scmp.eq.s32.totalorder %s25, 1
      %p158 = por %p156, %p157
      %p160 = scmp.ne.s32.totalorder %s143, %s159
      %p161 = scmp.eq.s32.totalorder %s25, 0
      %p162 = por %p160, %p161
      %s163 = ssub.s32 %s19, %s26
      %p164 = scmp.eq.s32.totalorder %s163, 0
      %s166 = sadd.s32 %s165, 1
      %s167 = scalar_select %p164, %s165, %s166
      %p170 = pneg %p164
      %p171 = scmp.eq.s32.totalorder %s19, 1
      %p172 = por %p170, %p171
      %p173 = scmp.ne.s32.totalorder %s165, %s168
      %p174 = scmp.eq.s32.totalorder %s19, 0
      %p175 = por %p173, %p174
      %p176 = scmp.ne.s32.totalorder %s165, %s168
      %p177 = scmp.eq.s32.totalorder %s24, 1
      %p178 = por %p176, %p177
      %p179 = scmp.ne.s32.totalorder %s168, %s169
      %p180 = scmp.eq.s32.totalorder %s24, 0
      %p181 = por %p179, %p180
      %p182 = scmp.ne.s32.totalorder %s168, %s169
      %p183 = scmp.eq.s32.totalorder %s25, 1
      %p184 = por %p182, %p183
      %p186 = scmp.ne.s32.totalorder %s169, %s185
      %p187 = scmp.eq.s32.totalorder %s25, 0
      %p188 = por %p186, %p187
      %p189 = scmp.le.s32.totalorder 1, %s19
      %p190 = scmp.lt.s32.totalorder %s19, 3
      %p191 = pnand %p189, %p190
      %p192 = pneg %p191
      // Predicated region
      $region9: #{self_attention_forward.1} parent=5 // pred_check
        _
      $region10: #{self_attention_forward.1} parent=5 // pred_check_branch
        %194 = sbr.rel (%p191) target = $region12
      $region11: #{self_attention_forward.1} parent=5 // pred_region
        %s195 = ssub.s32 %s19, 1
        // Predicated region
        $region13: #{self_attention_forward.1} parent=11 // pred_check
          %p196 = pneg %p66
        $region14: #{self_attention_forward.1} parent=11 // pred_check_branch
          %198 = sbr.rel (%p196) target = $region16
        $region15: #{self_attention_forward.1} parent=11 // pred_region
          _
        $region16: #{self_attention_forward.1} parent=11 // pred_fallthru
          _
        // Predicated region
        $region17: #{self_attention_forward.1} parent=11 // pred_check
          %p199 = pneg %p87
        $region18: #{self_attention_forward.1} parent=11 // pred_check_branch
          %201 = sbr.rel (%p199) target = $region20
        $region19: #{self_attention_forward.1} parent=11 // pred_region
          _
        $region20: #{self_attention_forward.1} parent=11 // pred_fallthru
          _
        // Predicated region
        $region21: #{self_attention_forward.1} parent=11 // pred_check
          %p202 = pneg %p108
        $region22: #{self_attention_forward.1} parent=11 // pred_check_branch
          %204 = sbr.rel (%p202) target = $region24
        $region23: #{self_attention_forward.1} parent=11 // pred_region
          _
        $region24: #{self_attention_forward.1} parent=11 // pred_fallthru
          _
        // Predicated region
        $region25: #{self_attention_forward.1} parent=11 // pred_check
          %p205 = pneg %p129
        $region26: #{self_attention_forward.1} parent=11 // pred_check_branch
          %207 = sbr.rel (%p205) target = $region28
        $region27: #{self_attention_forward.1} parent=11 // pred_region
          _
        $region28: #{self_attention_forward.1} parent=11 // pred_fallthru
          _
      $region12: #{self_attention_forward.1} parent=5 // pred_fallthru
        _
      %p208 = scmp.lt.s32.totalorder %s19, 2
      // Predicated region
      $region29: #{self_attention_forward.1} parent=5 // pred_check
        %p209 = pneg %p208
      $region30: #{self_attention_forward.1} parent=5 // pred_check_branch
        %211 = sbr.rel (%p209) target = $region32
      $region31: #{self_attention_forward.1} parent=5 // pred_region
        // Predicated region
        $region33: #{self_attention_forward.1} parent=31 // pred_check
          %p212 = pneg %p39
        $region34: #{self_attention_forward.1} parent=31 // pred_check_branch
          %214 = sbr.rel (%p212) target = $region36
        $region35: #{self_attention_forward.1} parent=31 // pred_region
          %p215 = scmp.lt.s32.totalorder %s19, 1
          %s216 = scalar_select %p215, %s19, 1
          %s217 = smul.addr %s216, 8
          %s218 = smul.addr %s217, 8
          %s219 = scalar_lea.vmem %s0, %s218
        $region36: #{self_attention_forward.1} parent=31 // pred_fallthru
          _
      $region32: #{self_attention_forward.1} parent=5 // pred_fallthru
        _
      %p220 = scmp.le.s32.totalorder 1, %s19
      %p221 = scmp.lt.s32.totalorder %s19, 3
      %p222 = pnand %p220, %p221
      %p223 = pneg %p222
      // Predicated region
      $region37: #{self_attention_forward.1} parent=5 // pred_check
        _
      $region38: #{self_attention_forward.1} parent=5 // pred_check_branch
        %225 = sbr.rel (%p222) target = $region40
      $region39: #{self_attention_forward.1} parent=5 // pred_region
        %s226 = ssub.s32 %s19, 1
        %p227 = scmp.lt.s32.totalorder %s24, 1
        %s228 = scalar_select %p227, %s24, 1
        %s229 = smul.addr %s228, 8
        %s230 = smul.addr %s229, 8
        %s231 = scalar_lea.vmem %s0, %s230
        %p232 = pneg %p45
        %p233 = pneg %p42
        %p234 = pneg %p66
        %p235 = pneg %p63
        %p236 = pneg %p87
        %p237 = pneg %p84
        %p238 = pneg %p108
        %p239 = pneg %p105
        %p240 = pneg %p129
        %p241 = pneg %p126
        %p242 = pneg %p155
        %p243 = pneg %p152
        %s244 = sand.u32 %s142, 1
        %s245 = scalar_lea.sflag [#allocation4], %s244
        %s246 = sand.u32 %s142, 1
        %s247 = smul.addr %s246, 64
        %s248 = scalar_lea.vmem [#allocation3], %s247
        %p249 = pneg %p181
        %p250 = pneg %p178
        %s251 = sand.u32 %s168, 1
        %s252 = scalar_lea.sflag [#allocation6], %s251
        %s253 = sand.u32 %s168, 1
        %s254 = smul.addr %s253, 64
        %s255 = scalar_lea.vmem [#allocation5], %s254
        %p256 = scmp.lt.s32.totalorder %s24, 1
        %s257 = scalar_select %p256, %s24, 1
        %s258 = smul.addr %s257, 8
        %s259 = smul.addr %s258, 8
        %s260 = scalar_lea.vmem %s0, %s259
        %v261 = vld [vmem:[%s260] sm:$0xff]
        %v262 = vld [vmem:[%s260 + $0x8] sm:$0xff]
        %v263 = vld [vmem:[%s260 + $0x10] sm:$0xff]
        %v264 = vld [vmem:[%s260 + $0x18] sm:$0xff]
        %v265 = vld [vmem:[%s260 + $0x20] sm:$0xff]
        %v266 = vld [vmem:[%s260 + $0x28] sm:$0xff]
        %v267 = vld [vmem:[%s260 + $0x30] sm:$0xff]
        %v268 = vld [vmem:[%s260 + $0x38] sm:$0xff]
        %v269 = vld [vmem:[%s1] sm:$0xff]
        %v270 = vld [vmem:[%s1 + $0x8] sm:$0xff]
        %v271 = vld [vmem:[%s1 + $0x10] sm:$0xff]
        %v272 = vld [vmem:[%s1 + $0x18] sm:$0xff]
        %v273 = vld [vmem:[%s2] sm:$0x1]
        %v275 = vlaneseq
        %v276 = vshrl.u32 %v275, 7
        %v277 = vsub.s32 0, %v276
        %v278 = vrot.slane %v273, %v277
        %vm280 = vcmask 261120
        %v282 = vsel %vm280, %v261, 0
        %v285 = vsel %vm280, %v262, 0
        %v288 = vsel %vm280, %v263, 0
        %v291 = vsel %vm280, %v264, 0
        %v294 = vsel %vm280, %v265, 0
        %v297 = vsel %vm280, %v266, 0
        %v300 = vsel %vm280, %v267, 0
        %v303 = vsel %vm280, %v268, 0
        %305 = vmatprep.subr.mxu0 0.0
        %306 = vmatpush1.msra.mxu0 0.0
        %307 = vmatprep.subr.mxu0 0.0
        %308 = vmatpush1.msra.mxu0 0.0
        %309 = vmatprep.subr.mxu0 0.0
        %310 = vmatpush1.msra.mxu0 0.0
        %311 = vmatprep.subr.mxu0 0.0
        %312 = vmatpush1.msra.mxu0 0.0
        %313 = vmatprep.subr.mxu0 0.0
        %314 = vmatpush1.msra.mxu0 0.0
        %315 = vmatprep.subr.mxu0 0.0
        %316 = vmatpush1.msra.mxu0 0.0
        %317 = vmatprep.subr.mxu0 0.0
        %318 = vmatpush1.msra.mxu0 0.0
        %319 = vmatprep.subr.mxu0 0.0
        %320 = vmatpush1.msra.mxu0 0.0
        %321 = vmatprep.subr.mxu0 0.0
        %322 = vmatpush1.msra.mxu0 0.0
        %323 = vmatprep.subr.mxu0 0.0
        %324 = vmatpush1.msra.mxu0 0.0
        %325 = vmatprep.subr.mxu0 0.0
        %326 = vmatpush1.msra.mxu0 0.0
        %327 = vmatprep.subr.mxu0 0.0
        %328 = vmatpush1.msra.mxu0 0.0
        %329 = vmatprep.subr.mxu0 0.0
        %330 = vmatpush1.msra.mxu0 %v272
        %331 = vmatprep.subr.mxu0 0.0
        %332 = vmatpush1.msra.mxu0 %v271
        %333 = vmatprep.subr.mxu0 0.0
        %334 = vmatpush1.msra.mxu0 %v270
        %335 = vmatprep.subr.mxu0 0.0
        %336 = vmatpush1.msra.mxu0 %v269
        %337 = vmatprep.subr.mxu0 0.0
        %338 = vmatpush2.msra.mxu0 0.0
        %339 = vmatprep.subr.mxu0 0.0
        %340 = vmatpush2.msra.mxu0 0.0
        %341 = vmatprep.subr.mxu0 0.0
        %342 = vmatpush2.msra.mxu0 0.0
        %343 = vmatprep.subr.mxu0 0.0
        %344 = vmatpush2.msra.mxu0 0.0
        %345 = vmatprep.subr.mxu0 0.0
        %346 = vmatpush2.msra.mxu0 0.0
        %347 = vmatprep.subr.mxu0 0.0
        %348 = vmatpush2.msra.mxu0 0.0
        %349 = vmatprep.subr.mxu0 0.0
        %350 = vmatpush2.msra.mxu0 0.0
        %351 = vmatprep.subr.mxu0 0.0
        %352 = vmatpush2.msra.mxu0 0.0
        %353 = vmatprep.subr.mxu0 0.0
        %354 = vmatpush2.msra.mxu0 0.0
        %355 = vmatprep.subr.mxu0 0.0
        %356 = vmatpush2.msra.mxu0 0.0
        %357 = vmatprep.subr.mxu0 0.0
        %358 = vmatpush2.msra.mxu0 0.0
        %359 = vmatprep.subr.mxu0 0.0
        %360 = vmatpush2.msra.mxu0 0.0
        %361 = vmatprep.subr.mxu0 0.0
        %362 = vmatpush2.msra.mxu0 0.0
        %363 = vmatprep.subr.mxu0 0.0
        %364 = vmatpush2.msra.mxu0 0.0
        %365 = vmatprep.subr.mxu0 0.0
        %366 = vmatpush2.msra.mxu0 0.0
        %367 = vmatprep.subr.mxu0 0.0
        %368 = vmatpush2.msra.mxu0 0.0
        %369 = vmatprep.mubr.f32.mxu0 0.0
        %370 = vmatmul.mubr.f32.gmra.mxu0 %v282
        %v371 = vpop.f32.mrf.mxu0
        %v372 = vadd.f32 %v278, %v371
        %v373 = vpop.f32.mrf.mxu0
        %374 = vmatprep.mubr.f32.mxu0 0.0
        %375 = vmatmul.mubr.f32.gmra.mxu0 %v285
        %v376 = vpop.f32.mrf.mxu0
        %v377 = vadd.f32 %v278, %v376
        %v378 = vpop.f32.mrf.mxu0
        %379 = vmatprep.mubr.f32.mxu0 0.0
        %380 = vmatmul.mubr.f32.gmra.mxu0 %v288
        %v381 = vpop.f32.mrf.mxu0
        %v382 = vadd.f32 %v278, %v381
        %v383 = vpop.f32.mrf.mxu0
        %384 = vmatprep.mubr.f32.mxu0 0.0
        %385 = vmatmul.mubr.f32.gmra.mxu0 %v291
        %v386 = vpop.f32.mrf.mxu0
        %v387 = vadd.f32 %v278, %v386
        %v388 = vpop.f32.mrf.mxu0
        %389 = vmatprep.mubr.f32.mxu0 0.0
        %390 = vmatmul.mubr.f32.gmra.mxu0 %v294
        %v391 = vpop.f32.mrf.mxu0
        %v392 = vadd.f32 %v278, %v391
        %v393 = vpop.f32.mrf.mxu0
        %394 = vmatprep.mubr.f32.mxu0 0.0
        %395 = vmatmul.mubr.f32.gmra.mxu0 %v297
        %v396 = vpop.f32.mrf.mxu0
        %v397 = vadd.f32 %v278, %v396
        %v398 = vpop.f32.mrf.mxu0
        %399 = vmatprep.mubr.f32.mxu0 0.0
        %400 = vmatmul.mubr.f32.gmra.mxu0 %v300
        %v401 = vpop.f32.mrf.mxu0
        %v402 = vadd.f32 %v278, %v401
        %v403 = vpop.f32.mrf.mxu0
        %404 = vmatprep.mubr.f32.mxu0 0.0
        %405 = vmatmul.mubr.f32.gmra.mxu0 %v303
        %v406 = vpop.f32.mrf.mxu0
        %v407 = vadd.f32 %v278, %v406
        %v408 = vpop.f32.mrf.mxu0
        %409 = vdwg.mxu0
        %418 = vrot.lane.b32.xlu0 %v372, 96
        %v419 = vpop.permute.xlu0 %418
        %420 = vrot.lane.b32.xlu0 %v377, 96
        %v421 = vpop.permute.xlu0 %420
        %422 = vrot.lane.b32.xlu0 %v382, 96
        %v423 = vpop.permute.xlu0 %422
        %424 = vrot.lane.b32.xlu0 %v387, 96
        %v425 = vpop.permute.xlu0 %424
        %426 = vrot.lane.b32.xlu0 %v392, 96
        %v427 = vpop.permute.xlu0 %426
        %428 = vrot.lane.b32.xlu0 %v397, 96
        %v429 = vpop.permute.xlu0 %428
        %430 = vrot.lane.b32.xlu0 %v402, 96
        %v431 = vpop.permute.xlu0 %430
        %432 = vrot.lane.b32.xlu0 %v407, 96
        %v433 = vpop.permute.xlu0 %432
        %vm434 = vcmask 31744
        %v435 = vsel %vm434, %v372, 0
        %v437 = vsel %vm434, %v377, 0
        %v439 = vsel %vm434, %v382, 0
        %v441 = vsel %vm434, %v387, 0
        %v443 = vsel %vm434, %v392, 0
        %v445 = vsel %vm434, %v397, 0
        %v447 = vsel %vm434, %v402, 0
        %v449 = vsel %vm434, %v407, 0
        %v451 = vsel %vm434, %v419, 0
        %v453 = vsel %vm434, %v421, 0
        %v455 = vsel %vm434, %v423, 0
        %v457 = vsel %vm434, %v425, 0
        %v459 = vsel %vm434, %v427, 0
        %v461 = vsel %vm434, %v429, 0
        %v463 = vsel %vm434, %v431, 0
        %v465 = vsel %vm434, %v433, 0
        %467 = vmatprep.subr.mxu0 0.0
        %468 = vmatpush1.xpose.msra.mxu0 0.0
        %469 = vmatprep.subr.mxu0 0.0
        %470 = vmatpush1.xpose.msra.mxu0 0.0
        %471 = vmatprep.subr.mxu0 0.0
        %472 = vmatpush1.xpose.msra.mxu0 0.0
        %473 = vmatprep.subr.mxu0 0.0
        %474 = vmatpush1.xpose.msra.mxu0 0.0
        %475 = vmatprep.subr.mxu0 0.0
        %476 = vmatpush1.xpose.msra.mxu0 0.0
        %477 = vmatprep.subr.mxu0 0.0
        %478 = vmatpush1.xpose.msra.mxu0 0.0
        %479 = vmatprep.subr.mxu0 0.0
        %480 = vmatpush1.xpose.msra.mxu0 0.0
        %481 = vmatprep.subr.mxu0 0.0
        %482 = vmatpush1.xpose.msra.mxu0 0.0
        %483 = vmatprep.subr.mxu0 0.0
        %484 = vmatpush1.xpose.msra.mxu0 %v465
        %485 = vmatprep.subr.mxu0 0.0
        %486 = vmatpush1.xpose.msra.mxu0 %v463
        %487 = vmatprep.subr.mxu0 0.0
        %488 = vmatpush1.xpose.msra.mxu0 %v461
        %489 = vmatprep.subr.mxu0 0.0
        %490 = vmatpush1.xpose.msra.mxu0 %v459
        %491 = vmatprep.subr.mxu0 0.0
        %492 = vmatpush1.xpose.msra.mxu0 %v457
        %493 = vmatprep.subr.mxu0 0.0
        %494 = vmatpush1.xpose.msra.mxu0 %v455
        %495 = vmatprep.subr.mxu0 0.0
        %496 = vmatpush1.xpose.msra.mxu0 %v453
        %497 = vmatprep.subr.mxu0 0.0
        %498 = vmatpush1.xpose.msra.mxu0 %v451
        %499 = vmatprep.subr.mxu0 0.0
        %500 = vmatpush2.xpose.msra.mxu0 0.0
        %501 = vmatprep.subr.mxu0 0.0
        %502 = vmatpush2.xpose.msra.mxu0 0.0
        %503 = vmatprep.subr.mxu0 0.0
        %504 = vmatpush2.xpose.msra.mxu0 0.0
        %505 = vmatprep.subr.mxu0 0.0
        %506 = vmatpush2.xpose.msra.mxu0 0.0
        %507 = vmatprep.subr.mxu0 0.0
        %508 = vmatpush2.xpose.msra.mxu0 0.0
        %509 = vmatprep.subr.mxu0 0.0
        %510 = vmatpush2.xpose.msra.mxu0 0.0
        %511 = vmatprep.subr.mxu0 0.0
        %512 = vmatpush2.xpose.msra.mxu0 0.0
        %513 = vmatprep.subr.mxu0 0.0
        %514 = vmatpush2.xpose.msra.mxu0 0.0
        %515 = vmatprep.subr.mxu0 0.0
        %516 = vmatpush2.xpose.msra.mxu0 0.0
        %517 = vmatprep.subr.mxu0 0.0
        %518 = vmatpush2.xpose.msra.mxu0 0.0
        %519 = vmatprep.subr.mxu0 0.0
        %520 = vmatpush2.xpose.msra.mxu0 0.0
        %521 = vmatprep.subr.mxu0 0.0
        %522 = vmatpush2.xpose.msra.mxu0 0.0
        %523 = vmatprep.subr.mxu0 0.0
        %524 = vmatpush2.xpose.msra.mxu0 0.0
        %525 = vmatprep.subr.mxu0 0.0
        %526 = vmatpush2.xpose.msra.mxu0 0.0
        %527 = vmatprep.subr.mxu0 0.0
        %528 = vmatpush2.xpose.msra.mxu0 0.0
        %529 = vmatprep.subr.mxu0 0.0
        %530 = vmatpush2.xpose.msra.mxu0 0.0
        %531 = vmatprep.mubr.f32.mxu0 0.0
        %532 = vmatmul.mubr.f32.gmra.mxu0 %v435
        %v533 = vpop.f32.mrf.mxu0
        %v534 = vadd.f32 0.0, %v533
        %v535 = vpop.f32.mrf.mxu0
        %536 = vmatprep.mubr.f32.mxu0 0.0
        %537 = vmatmul.mubr.f32.gmra.mxu0 %v437
        %v538 = vpop.f32.mrf.mxu0
        %v539 = vadd.f32 0.0, %v538
        %v540 = vpop.f32.mrf.mxu0
        %541 = vmatprep.mubr.f32.mxu0 0.0
        %542 = vmatmul.mubr.f32.gmra.mxu0 %v439
        %v543 = vpop.f32.mrf.mxu0
        %v544 = vadd.f32 0.0, %v543
        %v545 = vpop.f32.mrf.mxu0
        %546 = vmatprep.mubr.f32.mxu0 0.0
        %547 = vmatmul.mubr.f32.gmra.mxu0 %v441
        %v548 = vpop.f32.mrf.mxu0
        %v549 = vadd.f32 0.0, %v548
        %v550 = vpop.f32.mrf.mxu0
        %551 = vmatprep.mubr.f32.mxu0 0.0
        %552 = vmatmul.mubr.f32.gmra.mxu0 %v443
        %v553 = vpop.f32.mrf.mxu0
        %v554 = vadd.f32 0.0, %v553
        %v555 = vpop.f32.mrf.mxu0
        %556 = vmatprep.mubr.f32.mxu0 0.0
        %557 = vmatmul.mubr.f32.gmra.mxu0 %v445
        %v558 = vpop.f32.mrf.mxu0
        %v559 = vadd.f32 0.0, %v558
        %v560 = vpop.f32.mrf.mxu0
        %561 = vmatprep.mubr.f32.mxu0 0.0
        %562 = vmatmul.mubr.f32.gmra.mxu0 %v447
        %v563 = vpop.f32.mrf.mxu0
        %v564 = vadd.f32 0.0, %v563
        %v565 = vpop.f32.mrf.mxu0
        %566 = vmatprep.mubr.f32.mxu0 0.0
        %567 = vmatmul.mubr.f32.gmra.mxu0 %v449
        %v568 = vpop.f32.mrf.mxu0
        %v569 = vadd.f32 0.0, %v568
        %v570 = vpop.f32.mrf.mxu0
        %571 = vdwg.mxu0
        %vm572 = vcmask 523264
        %v573 = vsel %vm572, %v534, -inf
        %574 = vmax.xlane.f32.xlu0 %v573
        %v575 = vpop.xlane.xlu0 %574
        %v576 = vsel %vm572, %v539, -inf
        %577 = vmax.xlane.f32.xlu0 %v576
        %v578 = vpop.xlane.xlu0 %577
        %v579 = vsel %vm572, %v544, -inf
        %580 = vmax.xlane.f32.xlu0 %v579
        %v581 = vpop.xlane.xlu0 %580
        %v582 = vsel %vm572, %v549, -inf
        %583 = vmax.xlane.f32.xlu0 %v582
        %v584 = vpop.xlane.xlu0 %583
        %v585 = vsel %vm572, %v554, -inf
        %586 = vmax.xlane.f32.xlu0 %v585
        %v587 = vpop.xlane.xlu0 %586
        %v588 = vsel %vm572, %v559, -inf
        %589 = vmax.xlane.f32.xlu0 %v588
        %v590 = vpop.xlane.xlu0 %589
        %v591 = vsel %vm572, %v564, -inf
        %592 = vmax.xlane.f32.xlu0 %v591
        %v593 = vpop.xlane.xlu0 %592
        %v594 = vsel %vm572, %v569, -inf
        %595 = vmax.xlane.f32.xlu0 %v594
        %v596 = vpop.xlane.xlu0 %595
        %v597 = vsub.f32 %v534, %v575
        %v598 = vsub.f32 %v539, %v578
        %v599 = vsub.f32 %v544, %v581
        %v600 = vsub.f32 %v549, %v584
        %v601 = vsub.f32 %v554, %v587
        %v602 = vsub.f32 %v559, %v590
        %v603 = vsub.f32 %v564, %v593
        %v604 = vsub.f32 %v569, %v596
        %v605 = vmul.f32 %v597, 1.442695
        %v606 = vpow.pop %v605
        %v607 = vmul.f32 %v598, 1.442695
        %v608 = vpow.pop %v607
        %v609 = vmul.f32 %v599, 1.442695
        %v610 = vpow.pop %v609
        %v611 = vmul.f32 %v600, 1.442695
        %v612 = vpow.pop %v611
        %v613 = vmul.f32 %v601, 1.442695
        %v614 = vpow.pop %v613
        %v615 = vmul.f32 %v602, 1.442695
        %v616 = vpow.pop %v615
        %v617 = vmul.f32 %v603, 1.442695
        %v618 = vpow.pop %v617
        %v619 = vmul.f32 %v604, 1.442695
        %v620 = vpow.pop %v619
        %v621 = vsel %vm572, %v606, 0.0
        %622 = vadd.xlane.f32.xlu0 %v621
        %v623 = vpop.xlane.xlu0 %622
        %v624 = vsel %vm572, %v608, 0.0
        %625 = vadd.xlane.f32.xlu0 %v624
        %v626 = vpop.xlane.xlu0 %625
        %v627 = vsel %vm572, %v610, 0.0
        %628 = vadd.xlane.f32.xlu0 %v627
        %v629 = vpop.xlane.xlu0 %628
        %v630 = vsel %vm572, %v612, 0.0
        %631 = vadd.xlane.f32.xlu0 %v630
        %v632 = vpop.xlane.xlu0 %631
        %v633 = vsel %vm572, %v614, 0.0
        %634 = vadd.xlane.f32.xlu0 %v633
        %v635 = vpop.xlane.xlu0 %634
        %v636 = vsel %vm572, %v616, 0.0
        %637 = vadd.xlane.f32.xlu0 %v636
        %v638 = vpop.xlane.xlu0 %637
        %v639 = vsel %vm572, %v618, 0.0
        %640 = vadd.xlane.f32.xlu0 %v639
        %v641 = vpop.xlane.xlu0 %640
        %v642 = vsel %vm572, %v620, 0.0
        %643 = vadd.xlane.f32.xlu0 %v642
        %v644 = vpop.xlane.xlu0 %643
        %v645 = vrcp.pop %v623
        %v646 = vrcp.pop %v626
        %v647 = vrcp.pop %v629
        %v648 = vrcp.pop %v632
        %v649 = vrcp.pop %v635
        %v650 = vrcp.pop %v638
        %v651 = vrcp.pop %v641
        %v652 = vrcp.pop %v644
        %v653 = vmul.f32 %v606, %v645
        %v654 = vmul.f32 %v608, %v646
        %v655 = vmul.f32 %v610, %v647
        %v656 = vmul.f32 %v612, %v648
        %v657 = vmul.f32 %v614, %v649
        %v658 = vmul.f32 %v616, %v650
        %v659 = vmul.f32 %v618, %v651
        %v660 = vmul.f32 %v620, %v652
        %v661 = vadd.f32 %v653, 0.0
        %v662 = vadd.f32 %v654, 0.0
        %v663 = vadd.f32 %v655, 0.0
        %v664 = vadd.f32 %v656, 0.0
        %v665 = vadd.f32 %v657, 0.0
        %v666 = vadd.f32 %v658, 0.0
        %v667 = vadd.f32 %v659, 0.0
        %v668 = vadd.f32 %v660, 0.0
        %669 = vrot.lane.b32.xlu0 %v372, 64
        %v670 = vpop.permute.xlu0 %669
        %671 = vrot.lane.b32.xlu0 %v377, 64
        %v672 = vpop.permute.xlu0 %671
        %673 = vrot.lane.b32.xlu0 %v382, 64
        %v674 = vpop.permute.xlu0 %673
        %675 = vrot.lane.b32.xlu0 %v387, 64
        %v676 = vpop.permute.xlu0 %675
        %677 = vrot.lane.b32.xlu0 %v392, 64
        %v678 = vpop.permute.xlu0 %677
        %679 = vrot.lane.b32.xlu0 %v397, 64
        %v680 = vpop.permute.xlu0 %679
        %681 = vrot.lane.b32.xlu0 %v402, 64
        %v682 = vpop.permute.xlu0 %681
        %683 = vrot.lane.b32.xlu0 %v407, 64
        %v684 = vpop.permute.xlu0 %683
        %v694 = vsel %vm572, %v653, 0
        %v697 = vsel %vm572, %v654, 0
        %v700 = vsel %vm572, %v655, 0
        %v703 = vsel %vm572, %v656, 0
        %v706 = vsel %vm572, %v657, 0
        %v709 = vsel %vm572, %v658, 0
        %v712 = vsel %vm572, %v659, 0
        %v715 = vsel %vm572, %v660, 0
        %717 = vmatprep.subr.mxu0 0.0
        %718 = vmatpush1.msra.mxu0 0.0
        %719 = vmatprep.subr.mxu0 0.0
        %720 = vmatpush1.msra.mxu0 0.0
        %721 = vmatprep.subr.mxu0 0.0
        %722 = vmatpush1.msra.mxu0 0.0
        %723 = vmatprep.subr.mxu0 0.0
        %724 = vmatpush1.msra.mxu0 0.0
        %725 = vmatprep.subr.mxu0 0.0
        %726 = vmatpush1.msra.mxu0 0.0
        %727 = vmatprep.subr.mxu0 0.0
        %728 = vmatpush1.msra.mxu0 0.0
        %729 = vmatprep.subr.mxu0 0.0
        %730 = vmatpush1.msra.mxu0 0.0
        %731 = vmatprep.subr.mxu0 0.0
        %732 = vmatpush1.msra.mxu0 0.0
        %733 = vmatprep.subr.mxu0 0.0
        %734 = vmatpush1.msra.mxu0 %v684
        %735 = vmatprep.subr.mxu0 0.0
        %736 = vmatpush1.msra.mxu0 %v682
        %737 = vmatprep.subr.mxu0 0.0
        %738 = vmatpush1.msra.mxu0 %v680
        %739 = vmatprep.subr.mxu0 0.0
        %740 = vmatpush1.msra.mxu0 %v678
        %741 = vmatprep.subr.mxu0 0.0
        %742 = vmatpush1.msra.mxu0 %v676
        %743 = vmatprep.subr.mxu0 0.0
        %744 = vmatpush1.msra.mxu0 %v674
        %745 = vmatprep.subr.mxu0 0.0
        %746 = vmatpush1.msra.mxu0 %v672
        %747 = vmatprep.subr.mxu0 0.0
        %748 = vmatpush1.msra.mxu0 %v670
        %749 = vmatprep.subr.mxu0 0.0
        %750 = vmatpush2.msra.mxu0 0.0
        %751 = vmatprep.subr.mxu0 0.0
        %752 = vmatpush2.msra.mxu0 0.0
        %753 = vmatprep.subr.mxu0 0.0
        %754 = vmatpush2.msra.mxu0 0.0
        %755 = vmatprep.subr.mxu0 0.0
        %756 = vmatpush2.msra.mxu0 0.0
        %757 = vmatprep.subr.mxu0 0.0
        %758 = vmatpush2.msra.mxu0 0.0
        %759 = vmatprep.subr.mxu0 0.0
        %760 = vmatpush2.msra.mxu0 0.0
        %761 = vmatprep.subr.mxu0 0.0
        %762 = vmatpush2.msra.mxu0 0.0
        %763 = vmatprep.subr.mxu0 0.0
        %764 = vmatpush2.msra.mxu0 0.0
        %765 = vmatprep.subr.mxu0 0.0
        %766 = vmatpush2.msra.mxu0 0.0
        %767 = vmatprep.subr.mxu0 0.0
        %768 = vmatpush2.msra.mxu0 0.0
        %769 = vmatprep.subr.mxu0 0.0
        %770 = vmatpush2.msra.mxu0 0.0
        %771 = vmatprep.subr.mxu0 0.0
        %772 = vmatpush2.msra.mxu0 0.0
        %773 = vmatprep.subr.mxu0 0.0
        %774 = vmatpush2.msra.mxu0 0.0
        %775 = vmatprep.subr.mxu0 0.0
        %776 = vmatpush2.msra.mxu0 0.0
        %777 = vmatprep.subr.mxu0 0.0
        %778 = vmatpush2.msra.mxu0 0.0
        %779 = vmatprep.subr.mxu0 0.0
        %780 = vmatpush2.msra.mxu0 0.0
        %781 = vmatprep.mubr.f32.mxu0 0.0
        %782 = vmatmul.mubr.f32.gmra.mxu0 %v694
        %v783 = vpop.f32.mrf.mxu0
        %v784 = vadd.f32 0.0, %v783
        %v785 = vpop.f32.mrf.mxu0
        %786 = vmatprep.mubr.f32.mxu0 0.0
        %787 = vmatmul.mubr.f32.gmra.mxu0 %v697
        %v788 = vpop.f32.mrf.mxu0
        %v789 = vadd.f32 0.0, %v788
        %v790 = vpop.f32.mrf.mxu0
        %791 = vmatprep.mubr.f32.mxu0 0.0
        %792 = vmatmul.mubr.f32.gmra.mxu0 %v700
        %v793 = vpop.f32.mrf.mxu0
        %v794 = vadd.f32 0.0, %v793
        %v795 = vpop.f32.mrf.mxu0
        %796 = vmatprep.mubr.f32.mxu0 0.0
        %797 = vmatmul.mubr.f32.gmra.mxu0 %v703
        %v798 = vpop.f32.mrf.mxu0
        %v799 = vadd.f32 0.0, %v798
        %v800 = vpop.f32.mrf.mxu0
        %801 = vmatprep.mubr.f32.mxu0 0.0
        %802 = vmatmul.mubr.f32.gmra.mxu0 %v706
        %v803 = vpop.f32.mrf.mxu0
        %v804 = vadd.f32 0.0, %v803
        %v805 = vpop.f32.mrf.mxu0
        %806 = vmatprep.mubr.f32.mxu0 0.0
        %807 = vmatmul.mubr.f32.gmra.mxu0 %v709
        %v808 = vpop.f32.mrf.mxu0
        %v809 = vadd.f32 0.0, %v808
        %v810 = vpop.f32.mrf.mxu0
        %811 = vmatprep.mubr.f32.mxu0 0.0
        %812 = vmatmul.mubr.f32.gmra.mxu0 %v712
        %v813 = vpop.f32.mrf.mxu0
        %v814 = vadd.f32 0.0, %v813
        %v815 = vpop.f32.mrf.mxu0
        %816 = vmatprep.mubr.f32.mxu0 0.0
        %817 = vmatmul.mubr.f32.gmra.mxu0 %v715
        %v818 = vpop.f32.mrf.mxu0
        %v819 = vadd.f32 0.0, %v818
        %v820 = vpop.f32.mrf.mxu0
        %821 = vdwg.mxu0
        %822 = vst.msk [vmem:[#allocation2] sm:$0xff] %vm434, %v784
        %823 = vst.msk [vmem:[#allocation2 + $0x8] sm:$0xff] %vm434, %v789
        %824 = vst.msk [vmem:[#allocation2 + $0x10] sm:$0xff] %vm434, %v794
        %825 = vst.msk [vmem:[#allocation2 + $0x18] sm:$0xff] %vm434, %v799
        %826 = vst.msk [vmem:[#allocation2 + $0x20] sm:$0xff] %vm434, %v804
        %827 = vst.msk [vmem:[#allocation2 + $0x28] sm:$0xff] %vm434, %v809
        %828 = vst.msk [vmem:[#allocation2 + $0x30] sm:$0xff] %vm434, %v814
        %829 = vst.msk [vmem:[#allocation2 + $0x38] sm:$0xff] %vm434, %v819
        %830 = vrot.lane.b32.xlu0 %v372, 124
        %v831 = vpop.permute.xlu0 %830
        %832 = vrot.lane.b32.xlu0 %v377, 124
        %v833 = vpop.permute.xlu0 %832
        %834 = vrot.lane.b32.xlu0 %v382, 124
        %v835 = vpop.permute.xlu0 %834
        %836 = vrot.lane.b32.xlu0 %v387, 124
        %v837 = vpop.permute.xlu0 %836
        %838 = vrot.lane.b32.xlu0 %v392, 124
        %v839 = vpop.permute.xlu0 %838
        %840 = vrot.lane.b32.xlu0 %v397, 124
        %v841 = vpop.permute.xlu0 %840
        %842 = vrot.lane.b32.xlu0 %v402, 124
        %v843 = vpop.permute.xlu0 %842
        %844 = vrot.lane.b32.xlu0 %v407, 124
        %v845 = vpop.permute.xlu0 %844
        %846 = vrot.lane.b32.xlu0 %v372, 92
        %v847 = vpop.permute.xlu0 %846
        %848 = vrot.lane.b32.xlu0 %v377, 92
        %v849 = vpop.permute.xlu0 %848
        %850 = vrot.lane.b32.xlu0 %v382, 92
        %v851 = vpop.permute.xlu0 %850
        %852 = vrot.lane.b32.xlu0 %v387, 92
        %v853 = vpop.permute.xlu0 %852
        %854 = vrot.lane.b32.xlu0 %v392, 92
        %v855 = vpop.permute.xlu0 %854
        %856 = vrot.lane.b32.xlu0 %v397, 92
        %v857 = vpop.permute.xlu0 %856
        %858 = vrot.lane.b32.xlu0 %v402, 92
        %v859 = vpop.permute.xlu0 %858
        %860 = vrot.lane.b32.xlu0 %v407, 92
        %v861 = vpop.permute.xlu0 %860
        %v862 = vsel %vm434, %v831, 0
        %v864 = vsel %vm434, %v833, 0
        %v866 = vsel %vm434, %v835, 0
        %v868 = vsel %vm434, %v837, 0
        %v870 = vsel %vm434, %v839, 0
        %v872 = vsel %vm434, %v841, 0
        %v874 = vsel %vm434, %v843, 0
        %v876 = vsel %vm434, %v845, 0
        %v878 = vsel %vm434, %v847, 0
        %v880 = vsel %vm434, %v849, 0
        %v882 = vsel %vm434, %v851, 0
        %v884 = vsel %vm434, %v853, 0
        %v886 = vsel %vm434, %v855, 0
        %v888 = vsel %vm434, %v857, 0
        %v890 = vsel %vm434, %v859, 0
        %v892 = vsel %vm434, %v861, 0
        %894 = vmatprep.subr.mxu0 0.0
        %895 = vmatpush1.xpose.msra.mxu0 0.0
        %896 = vmatprep.subr.mxu0 0.0
        %897 = vmatpush1.xpose.msra.mxu0 0.0
        %898 = vmatprep.subr.mxu0 0.0
        %899 = vmatpush1.xpose.msra.mxu0 0.0
        %900 = vmatprep.subr.mxu0 0.0
        %901 = vmatpush1.xpose.msra.mxu0 0.0
        %902 = vmatprep.subr.mxu0 0.0
        %903 = vmatpush1.xpose.msra.mxu0 0.0
        %904 = vmatprep.subr.mxu0 0.0
        %905 = vmatpush1.xpose.msra.mxu0 0.0
        %906 = vmatprep.subr.mxu0 0.0
        %907 = vmatpush1.xpose.msra.mxu0 0.0
        %908 = vmatprep.subr.mxu0 0.0
        %909 = vmatpush1.xpose.msra.mxu0 0.0
        %910 = vmatprep.subr.mxu0 0.0
        %911 = vmatpush1.xpose.msra.mxu0 %v892
        %912 = vmatprep.subr.mxu0 0.0
        %913 = vmatpush1.xpose.msra.mxu0 %v890
        %914 = vmatprep.subr.mxu0 0.0
        %915 = vmatpush1.xpose.msra.mxu0 %v888
        %916 = vmatprep.subr.mxu0 0.0
        %917 = vmatpush1.xpose.msra.mxu0 %v886
        %918 = vmatprep.subr.mxu0 0.0
        %919 = vmatpush1.xpose.msra.mxu0 %v884
        %920 = vmatprep.subr.mxu0 0.0
        %921 = vmatpush1.xpose.msra.mxu0 %v882
        %922 = vmatprep.subr.mxu0 0.0
        %923 = vmatpush1.xpose.msra.mxu0 %v880
        %924 = vmatprep.subr.mxu0 0.0
        %925 = vmatpush1.xpose.msra.mxu0 %v878
        %926 = vmatprep.subr.mxu0 0.0
        %927 = vmatpush2.xpose.msra.mxu0 0.0
        %928 = vmatprep.subr.mxu0 0.0
        %929 = vmatpush2.xpose.msra.mxu0 0.0
        %930 = vmatprep.subr.mxu0 0.0
        %931 = vmatpush2.xpose.msra.mxu0 0.0
        %932 = vmatprep.subr.mxu0 0.0
        %933 = vmatpush2.xpose.msra.mxu0 0.0
        %934 = vmatprep.subr.mxu0 0.0
        %935 = vmatpush2.xpose.msra.mxu0 0.0
        %936 = vmatprep.subr.mxu0 0.0
        %937 = vmatpush2.xpose.msra.mxu0 0.0
        %938 = vmatprep.subr.mxu0 0.0
        %939 = vmatpush2.xpose.msra.mxu0 0.0
        %940 = vmatprep.subr.mxu0 0.0
        %941 = vmatpush2.xpose.msra.mxu0 0.0
        %942 = vmatprep.subr.mxu0 0.0
        %943 = vmatpush2.xpose.msra.mxu0 0.0
        %944 = vmatprep.subr.mxu0 0.0
        %945 = vmatpush2.xpose.msra.mxu0 0.0
        %946 = vmatprep.subr.mxu0 0.0
        %947 = vmatpush2.xpose.msra.mxu0 0.0
        %948 = vmatprep.subr.mxu0 0.0
        %949 = vmatpush2.xpose.msra.mxu0 0.0
        %950 = vmatprep.subr.mxu0 0.0
        %951 = vmatpush2.xpose.msra.mxu0 0.0
        %952 = vmatprep.subr.mxu0 0.0
        %953 = vmatpush2.xpose.msra.mxu0 0.0
        %954 = vmatprep.subr.mxu0 0.0
        %955 = vmatpush2.xpose.msra.mxu0 0.0
        %956 = vmatprep.subr.mxu0 0.0
        %957 = vmatpush2.xpose.msra.mxu0 0.0
        %958 = vmatprep.mubr.f32.mxu0 0.0
        %959 = vmatmul.mubr.f32.gmra.mxu0 %v862
        %v960 = vpop.f32.mrf.mxu0
        %v961 = vadd.f32 0.0, %v960
        %v962 = vpop.f32.mrf.mxu0
        %963 = vmatprep.mubr.f32.mxu0 0.0
        %964 = vmatmul.mubr.f32.gmra.mxu0 %v864
        %v965 = vpop.f32.mrf.mxu0
        %v966 = vadd.f32 0.0, %v965
        %v967 = vpop.f32.mrf.mxu0
        %968 = vmatprep.mubr.f32.mxu0 0.0
        %969 = vmatmul.mubr.f32.gmra.mxu0 %v866
        %v970 = vpop.f32.mrf.mxu0
        %v971 = vadd.f32 0.0, %v970
        %v972 = vpop.f32.mrf.mxu0
        %973 = vmatprep.mubr.f32.mxu0 0.0
        %974 = vmatmul.mubr.f32.gmra.mxu0 %v868
        %v975 = vpop.f32.mrf.mxu0
        %v976 = vadd.f32 0.0, %v975
        %v977 = vpop.f32.mrf.mxu0
        %978 = vmatprep.mubr.f32.mxu0 0.0
        %979 = vmatmul.mubr.f32.gmra.mxu0 %v870
        %v980 = vpop.f32.mrf.mxu0
        %v981 = vadd.f32 0.0, %v980
        %v982 = vpop.f32.mrf.mxu0
        %983 = vmatprep.mubr.f32.mxu0 0.0
        %984 = vmatmul.mubr.f32.gmra.mxu0 %v872
        %v985 = vpop.f32.mrf.mxu0
        %v986 = vadd.f32 0.0, %v985
        %v987 = vpop.f32.mrf.mxu0
        %988 = vmatprep.mubr.f32.mxu0 0.0
        %989 = vmatmul.mubr.f32.gmra.mxu0 %v874
        %v990 = vpop.f32.mrf.mxu0
        %v991 = vadd.f32 0.0, %v990
        %v992 = vpop.f32.mrf.mxu0
        %993 = vmatprep.mubr.f32.mxu0 0.0
        %994 = vmatmul.mubr.f32.gmra.mxu0 %v876
        %v995 = vpop.f32.mrf.mxu0
        %v996 = vadd.f32 0.0, %v995
        %v997 = vpop.f32.mrf.mxu0
        %998 = vdwg.mxu0
        %v999 = vsel %vm572, %v961, -inf
        %1000 = vmax.xlane.f32.xlu0 %v999
        %v1001 = vpop.xlane.xlu0 %1000
        %v1002 = vsel %vm572, %v966, -inf
        %1003 = vmax.xlane.f32.xlu0 %v1002
        %v1004 = vpop.xlane.xlu0 %1003
        %v1005 = vsel %vm572, %v971, -inf
        %1006 = vmax.xlane.f32.xlu0 %v1005
        %v1007 = vpop.xlane.xlu0 %1006
        %v1008 = vsel %vm572, %v976, -inf
        %1009 = vmax.xlane.f32.xlu0 %v1008
        %v1010 = vpop.xlane.xlu0 %1009
        %v1011 = vsel %vm572, %v981, -inf
        %1012 = vmax.xlane.f32.xlu0 %v1011
        %v1013 = vpop.xlane.xlu0 %1012
        %v1014 = vsel %vm572, %v986, -inf
        %1015 = vmax.xlane.f32.xlu0 %v1014
        %v1016 = vpop.xlane.xlu0 %1015
        %v1017 = vsel %vm572, %v991, -inf
        %1018 = vmax.xlane.f32.xlu0 %v1017
        %v1019 = vpop.xlane.xlu0 %1018
        %v1020 = vsel %vm572, %v996, -inf
        %1021 = vmax.xlane.f32.xlu0 %v1020
        %v1022 = vpop.xlane.xlu0 %1021
        %v1023 = vsub.f32 %v961, %v1001
        %v1024 = vsub.f32 %v966, %v1004
        %v1025 = vsub.f32 %v971, %v1007
        %v1026 = vsub.f32 %v976, %v1010
        %v1027 = vsub.f32 %v981, %v1013
        %v1028 = vsub.f32 %v986, %v1016
        %v1029 = vsub.f32 %v991, %v1019
        %v1030 = vsub.f32 %v996, %v1022
        %v1031 = vmul.f32 %v1023, 1.442695
        %v1032 = vpow.pop %v1031
        %v1033 = vmul.f32 %v1024, 1.442695
        %v1034 = vpow.pop %v1033
        %v1035 = vmul.f32 %v1025, 1.442695
        %v1036 = vpow.pop %v1035
        %v1037 = vmul.f32 %v1026, 1.442695
        %v1038 = vpow.pop %v1037
        %v1039 = vmul.f32 %v1027, 1.442695
        %v1040 = vpow.pop %v1039
        %v1041 = vmul.f32 %v1028, 1.442695
        %v1042 = vpow.pop %v1041
        %v1043 = vmul.f32 %v1029, 1.442695
        %v1044 = vpow.pop %v1043
        %v1045 = vmul.f32 %v1030, 1.442695
        %v1046 = vpow.pop %v1045
        %v1047 = vsel %vm572, %v1032, 0.0
        %1048 = vadd.xlane.f32.xlu0 %v1047
        %v1049 = vpop.xlane.xlu0 %1048
        %v1050 = vsel %vm572, %v1034, 0.0
        %1051 = vadd.xlane.f32.xlu0 %v1050
        %v1052 = vpop.xlane.xlu0 %1051
        %v1053 = vsel %vm572, %v1036, 0.0
        %1054 = vadd.xlane.f32.xlu0 %v1053
        %v1055 = vpop.xlane.xlu0 %1054
        %v1056 = vsel %vm572, %v1038, 0.0
        %1057 = vadd.xlane.f32.xlu0 %v1056
        %v1058 = vpop.xlane.xlu0 %1057
        %v1059 = vsel %vm572, %v1040, 0.0
        %1060 = vadd.xlane.f32.xlu0 %v1059
        %v1061 = vpop.xlane.xlu0 %1060
        %v1062 = vsel %vm572, %v1042, 0.0
        %1063 = vadd.xlane.f32.xlu0 %v1062
        %v1064 = vpop.xlane.xlu0 %1063
        %v1065 = vsel %vm572, %v1044, 0.0
        %1066 = vadd.xlane.f32.xlu0 %v1065
        %v1067 = vpop.xlane.xlu0 %1066
        %v1068 = vsel %vm572, %v1046, 0.0
        %1069 = vadd.xlane.f32.xlu0 %v1068
        %v1070 = vpop.xlane.xlu0 %1069
        %v1071 = vrcp.pop %v1049
        %v1072 = vrcp.pop %v1052
        %v1073 = vrcp.pop %v1055
        %v1074 = vrcp.pop %v1058
        %v1075 = vrcp.pop %v1061
        %v1076 = vrcp.pop %v1064
        %v1077 = vrcp.pop %v1067
        %v1078 = vrcp.pop %v1070
        %v1079 = vmul.f32 %v1032, %v1071
        %v1080 = vmul.f32 %v1034, %v1072
        %v1081 = vmul.f32 %v1036, %v1073
        %v1082 = vmul.f32 %v1038, %v1074
        %v1083 = vmul.f32 %v1040, %v1075
        %v1084 = vmul.f32 %v1042, %v1076
        %v1085 = vmul.f32 %v1044, %v1077
        %v1086 = vmul.f32 %v1046, %v1078
        %v1087 = vadd.f32 %v661, %v1079
        %v1088 = vadd.f32 %v662, %v1080
        %v1089 = vadd.f32 %v663, %v1081
        %v1090 = vadd.f32 %v664, %v1082
        %v1091 = vadd.f32 %v665, %v1083
        %v1092 = vadd.f32 %v666, %v1084
        %v1093 = vadd.f32 %v667, %v1085
        %v1094 = vadd.f32 %v668, %v1086
        %1095 = vrot.lane.b32.xlu0 %v372, 60
        %v1096 = vpop.permute.xlu0 %1095
        %1097 = vrot.lane.b32.xlu0 %v377, 60
        %v1098 = vpop.permute.xlu0 %1097
        %1099 = vrot.lane.b32.xlu0 %v382, 60
        %v1100 = vpop.permute.xlu0 %1099
        %1101 = vrot.lane.b32.xlu0 %v387, 60
        %v1102 = vpop.permute.xlu0 %1101
        %1103 = vrot.lane.b32.xlu0 %v392, 60
        %v1104 = vpop.permute.xlu0 %1103
        %1105 = vrot.lane.b32.xlu0 %v397, 60
        %v1106 = vpop.permute.xlu0 %1105
        %1107 = vrot.lane.b32.xlu0 %v402, 60
        %v1108 = vpop.permute.xlu0 %1107
        %1109 = vrot.lane.b32.xlu0 %v407, 60
        %v1110 = vpop.permute.xlu0 %1109
        %v1120 = vsel %vm572, %v1079, 0
        %v1123 = vsel %vm572, %v1080, 0
        %v1126 = vsel %vm572, %v1081, 0
        %v1129 = vsel %vm572, %v1082, 0
        %v1132 = vsel %vm572, %v1083, 0
        %v1135 = vsel %vm572, %v1084, 0
        %v1138 = vsel %vm572, %v1085, 0
        %v1141 = vsel %vm572, %v1086, 0
        %1143 = vmatprep.subr.mxu0 0.0
        %1144 = vmatpush1.msra.mxu0 0.0
        %1145 = vmatprep.subr.mxu0 0.0
        %1146 = vmatpush1.msra.mxu0 0.0
        %1147 = vmatprep.subr.mxu0 0.0
        %1148 = vmatpush1.msra.mxu0 0.0
        %1149 = vmatprep.subr.mxu0 0.0
        %1150 = vmatpush1.msra.mxu0 0.0
        %1151 = vmatprep.subr.mxu0 0.0
        %1152 = vmatpush1.msra.mxu0 0.0
        %1153 = vmatprep.subr.mxu0 0.0
        %1154 = vmatpush1.msra.mxu0 0.0
        %1155 = vmatprep.subr.mxu0 0.0
        %1156 = vmatpush1.msra.mxu0 0.0
        %1157 = vmatprep.subr.mxu0 0.0
        %1158 = vmatpush1.msra.mxu0 0.0
        %1159 = vmatprep.subr.mxu0 0.0
        %1160 = vmatpush1.msra.mxu0 %v1110
        %1161 = vmatprep.subr.mxu0 0.0
        %1162 = vmatpush1.msra.mxu0 %v1108
        %1163 = vmatprep.subr.mxu0 0.0
        %1164 = vmatpush1.msra.mxu0 %v1106
        %1165 = vmatprep.subr.mxu0 0.0
        %1166 = vmatpush1.msra.mxu0 %v1104
        %1167 = vmatprep.subr.mxu0 0.0
        %1168 = vmatpush1.msra.mxu0 %v1102
        %1169 = vmatprep.subr.mxu0 0.0
        %1170 = vmatpush1.msra.mxu0 %v1100
        %1171 = vmatprep.subr.mxu0 0.0
        %1172 = vmatpush1.msra.mxu0 %v1098
        %1173 = vmatprep.subr.mxu0 0.0
        %1174 = vmatpush1.msra.mxu0 %v1096
        %1175 = vmatprep.subr.mxu0 0.0
        %1176 = vmatpush2.msra.mxu0 0.0
        %1177 = vmatprep.subr.mxu0 0.0
        %1178 = vmatpush2.msra.mxu0 0.0
        %1179 = vmatprep.subr.mxu0 0.0
        %1180 = vmatpush2.msra.mxu0 0.0
        %1181 = vmatprep.subr.mxu0 0.0
        %1182 = vmatpush2.msra.mxu0 0.0
        %1183 = vmatprep.subr.mxu0 0.0
        %1184 = vmatpush2.msra.mxu0 0.0
        %1185 = vmatprep.subr.mxu0 0.0
        %1186 = vmatpush2.msra.mxu0 0.0
        %1187 = vmatprep.subr.mxu0 0.0
        %1188 = vmatpush2.msra.mxu0 0.0
        %1189 = vmatprep.subr.mxu0 0.0
        %1190 = vmatpush2.msra.mxu0 0.0
        %1191 = vmatprep.subr.mxu0 0.0
        %1192 = vmatpush2.msra.mxu0 0.0
        %1193 = vmatprep.subr.mxu0 0.0
        %1194 = vmatpush2.msra.mxu0 0.0
        %1195 = vmatprep.subr.mxu0 0.0
        %1196 = vmatpush2.msra.mxu0 0.0
        %1197 = vmatprep.subr.mxu0 0.0
        %1198 = vmatpush2.msra.mxu0 0.0
        %1199 = vmatprep.subr.mxu0 0.0
        %1200 = vmatpush2.msra.mxu0 0.0
        %1201 = vmatprep.subr.mxu0 0.0
        %1202 = vmatpush2.msra.mxu0 0.0
        %1203 = vmatprep.subr.mxu0 0.0
        %1204 = vmatpush2.msra.mxu0 0.0
        %1205 = vmatprep.subr.mxu0 0.0
        %1206 = vmatpush2.msra.mxu0 0.0
        %1207 = vmatprep.mubr.f32.mxu0 0.0
        %1208 = vmatmul.mubr.f32.gmra.mxu0 %v1120
        %v1209 = vpop.f32.mrf.mxu0
        %v1210 = vadd.f32 0.0, %v1209
        %v1211 = vpop.f32.mrf.mxu0
        %1212 = vmatprep.mubr.f32.mxu0 0.0
        %1213 = vmatmul.mubr.f32.gmra.mxu0 %v1123
        %v1214 = vpop.f32.mrf.mxu0
        %v1215 = vadd.f32 0.0, %v1214
        %v1216 = vpop.f32.mrf.mxu0
        %1217 = vmatprep.mubr.f32.mxu0 0.0
        %1218 = vmatmul.mubr.f32.gmra.mxu0 %v1126
        %v1219 = vpop.f32.mrf.mxu0
        %v1220 = vadd.f32 0.0, %v1219
        %v1221 = vpop.f32.mrf.mxu0
        %1222 = vmatprep.mubr.f32.mxu0 0.0
        %1223 = vmatmul.mubr.f32.gmra.mxu0 %v1129
        %v1224 = vpop.f32.mrf.mxu0
        %v1225 = vadd.f32 0.0, %v1224
        %v1226 = vpop.f32.mrf.mxu0
        %1227 = vmatprep.mubr.f32.mxu0 0.0
        %1228 = vmatmul.mubr.f32.gmra.mxu0 %v1132
        %v1229 = vpop.f32.mrf.mxu0
        %v1230 = vadd.f32 0.0, %v1229
        %v1231 = vpop.f32.mrf.mxu0
        %1232 = vmatprep.mubr.f32.mxu0 0.0
        %1233 = vmatmul.mubr.f32.gmra.mxu0 %v1135
        %v1234 = vpop.f32.mrf.mxu0
        %v1235 = vadd.f32 0.0, %v1234
        %v1236 = vpop.f32.mrf.mxu0
        %1237 = vmatprep.mubr.f32.mxu0 0.0
        %1238 = vmatmul.mubr.f32.gmra.mxu0 %v1138
        %v1239 = vpop.f32.mrf.mxu0
        %v1240 = vadd.f32 0.0, %v1239
        %v1241 = vpop.f32.mrf.mxu0
        %1242 = vmatprep.mubr.f32.mxu0 0.0
        %1243 = vmatmul.mubr.f32.gmra.mxu0 %v1141
        %v1244 = vpop.f32.mrf.mxu0
        %v1245 = vadd.f32 0.0, %v1244
        %v1246 = vpop.f32.mrf.mxu0
        %1247 = vdwg.mxu0
        %1256 = vrot.lane.b32.xlu0 %v1210, 4
        %v1257 = vpop.permute.xlu0 %1256
        %1258 = vrot.lane.b32.xlu0 %v1215, 4
        %v1259 = vpop.permute.xlu0 %1258
        %1260 = vrot.lane.b32.xlu0 %v1220, 4
        %v1261 = vpop.permute.xlu0 %1260
        %1262 = vrot.lane.b32.xlu0 %v1225, 4
        %v1263 = vpop.permute.xlu0 %1262
        %1264 = vrot.lane.b32.xlu0 %v1230, 4
        %v1265 = vpop.permute.xlu0 %1264
        %1266 = vrot.lane.b32.xlu0 %v1235, 4
        %v1267 = vpop.permute.xlu0 %1266
        %1268 = vrot.lane.b32.xlu0 %v1240, 4
        %v1269 = vpop.permute.xlu0 %1268
        %1270 = vrot.lane.b32.xlu0 %v1245, 4
        %v1271 = vpop.permute.xlu0 %1270
        %vm1280 = vcmask 64544
        %1281 = vst.msk [vmem:[#allocation2] sm:$0xff] %vm1280, %v1257
        %1282 = vst.msk [vmem:[#allocation2 + $0x8] sm:$0xff] %vm1280, %v1259
        %1283 = vst.msk [vmem:[#allocation2 + $0x10] sm:$0xff] %vm1280, %v1261
        %1284 = vst.msk [vmem:[#allocation2 + $0x18] sm:$0xff] %vm1280, %v1263
        %1285 = vst.msk [vmem:[#allocation2 + $0x20] sm:$0xff] %vm1280, %v1265
        %1286 = vst.msk [vmem:[#allocation2 + $0x28] sm:$0xff] %vm1280, %v1267
        %1287 = vst.msk [vmem:[#allocation2 + $0x30] sm:$0xff] %vm1280, %v1269
        %1288 = vst.msk [vmem:[#allocation2 + $0x38] sm:$0xff] %vm1280, %v1271
        %1289 = vrot.lane.b32.xlu0 %v372, 120
        %v1290 = vpop.permute.xlu0 %1289
        %1291 = vrot.lane.b32.xlu0 %v377, 120
        %v1292 = vpop.permute.xlu0 %1291
        %1293 = vrot.lane.b32.xlu0 %v382, 120
        %v1294 = vpop.permute.xlu0 %1293
        %1295 = vrot.lane.b32.xlu0 %v387, 120
        %v1296 = vpop.permute.xlu0 %1295
        %1297 = vrot.lane.b32.xlu0 %v392, 120
        %v1298 = vpop.permute.xlu0 %1297
        %1299 = vrot.lane.b32.xlu0 %v397, 120
        %v1300 = vpop.permute.xlu0 %1299
        %1301 = vrot.lane.b32.xlu0 %v402, 120
        %v1302 = vpop.permute.xlu0 %1301
        %1303 = vrot.lane.b32.xlu0 %v407, 120
        %v1304 = vpop.permute.xlu0 %1303
        %1305 = vrot.lane.b32.xlu0 %v372, 88
        %v1306 = vpop.permute.xlu0 %1305
        %1307 = vrot.lane.b32.xlu0 %v377, 88
        %v1308 = vpop.permute.xlu0 %1307
        %1309 = vrot.lane.b32.xlu0 %v382, 88
        %v1310 = vpop.permute.xlu0 %1309
        %1311 = vrot.lane.b32.xlu0 %v387, 88
        %v1312 = vpop.permute.xlu0 %1311
        %1313 = vrot.lane.b32.xlu0 %v392, 88
        %v1314 = vpop.permute.xlu0 %1313
        %1315 = vrot.lane.b32.xlu0 %v397, 88
        %v1316 = vpop.permute.xlu0 %1315
        %1317 = vrot.lane.b32.xlu0 %v402, 88
        %v1318 = vpop.permute.xlu0 %1317
        %1319 = vrot.lane.b32.xlu0 %v407, 88
        %v1320 = vpop.permute.xlu0 %1319
        %v1321 = vsel %vm434, %v1290, 0
        %v1323 = vsel %vm434, %v1292, 0
        %v1325 = vsel %vm434, %v1294, 0
        %v1327 = vsel %vm434, %v1296, 0
        %v1329 = vsel %vm434, %v1298, 0
        %v1331 = vsel %vm434, %v1300, 0
        %v1333 = vsel %vm434, %v1302, 0
        %v1335 = vsel %vm434, %v1304, 0
        %v1337 = vsel %vm434, %v1306, 0
        %v1339 = vsel %vm434, %v1308, 0
        %v1341 = vsel %vm434, %v1310, 0
        %v1343 = vsel %vm434, %v1312, 0
        %v1345 = vsel %vm434, %v1314, 0
        %v1347 = vsel %vm434, %v1316, 0
        %v1349 = vsel %vm434, %v1318, 0
        %v1351 = vsel %vm434, %v1320, 0
        %1353 = vmatprep.subr.mxu0 0.0
        %1354 = vmatpush1.xpose.msra.mxu0 0.0
        %1355 = vmatprep.subr.mxu0 0.0
        %1356 = vmatpush1.xpose.msra.mxu0 0.0
        %1357 = vmatprep.subr.mxu0 0.0
        %1358 = vmatpush1.xpose.msra.mxu0 0.0
        %1359 = vmatprep.subr.mxu0 0.0
        %1360 = vmatpush1.xpose.msra.mxu0 0.0
        %1361 = vmatprep.subr.mxu0 0.0
        %1362 = vmatpush1.xpose.msra.mxu0 0.0
        %1363 = vmatprep.subr.mxu0 0.0
        %1364 = vmatpush1.xpose.msra.mxu0 0.0
        %1365 = vmatprep.subr.mxu0 0.0
        %1366 = vmatpush1.xpose.msra.mxu0 0.0
        %1367 = vmatprep.subr.mxu0 0.0
        %1368 = vmatpush1.xpose.msra.mxu0 0.0
        %1369 = vmatprep.subr.mxu0 0.0
        %1370 = vmatpush1.xpose.msra.mxu0 %v1351
        %1371 = vmatprep.subr.mxu0 0.0
        %1372 = vmatpush1.xpose.msra.mxu0 %v1349
        %1373 = vmatprep.subr.mxu0 0.0
        %1374 = vmatpush1.xpose.msra.mxu0 %v1347
        %1375 = vmatprep.subr.mxu0 0.0
        %1376 = vmatpush1.xpose.msra.mxu0 %v1345
        %1377 = vmatprep.subr.mxu0 0.0
        %1378 = vmatpush1.xpose.msra.mxu0 %v1343
        %1379 = vmatprep.subr.mxu0 0.0
        %1380 = vmatpush1.xpose.msra.mxu0 %v1341
        %1381 = vmatprep.subr.mxu0 0.0
        %1382 = vmatpush1.xpose.msra.mxu0 %v1339
        %1383 = vmatprep.subr.mxu0 0.0
        %1384 = vmatpush1.xpose.msra.mxu0 %v1337
        %1385 = vmatprep.subr.mxu0 0.0
        %1386 = vmatpush2.xpose.msra.mxu0 0.0
        %1387 = vmatprep.subr.mxu0 0.0
        %1388 = vmatpush2.xpose.msra.mxu0 0.0
        %1389 = vmatprep.subr.mxu0 0.0
        %1390 = vmatpush2.xpose.msra.mxu0 0.0
        %1391 = vmatprep.subr.mxu0 0.0
        %1392 = vmatpush2.xpose.msra.mxu0 0.0
        %1393 = vmatprep.subr.mxu0 0.0
        %1394 = vmatpush2.xpose.msra.mxu0 0.0
        %1395 = vmatprep.subr.mxu0 0.0
        %1396 = vmatpush2.xpose.msra.mxu0 0.0
        %1397 = vmatprep.subr.mxu0 0.0
        %1398 = vmatpush2.xpose.msra.mxu0 0.0
        %1399 = vmatprep.subr.mxu0 0.0
        %1400 = vmatpush2.xpose.msra.mxu0 0.0
        %1401 = vmatprep.subr.mxu0 0.0
        %1402 = vmatpush2.xpose.msra.mxu0 0.0
        %1403 = vmatprep.subr.mxu0 0.0
        %1404 = vmatpush2.xpose.msra.mxu0 0.0
        %1405 = vmatprep.subr.mxu0 0.0
        %1406 = vmatpush2.xpose.msra.mxu0 0.0
        %1407 = vmatprep.subr.mxu0 0.0
        %1408 = vmatpush2.xpose.msra.mxu0 0.0
        %1409 = vmatprep.subr.mxu0 0.0
        %1410 = vmatpush2.xpose.msra.mxu0 0.0
        %1411 = vmatprep.subr.mxu0 0.0
        %1412 = vmatpush2.xpose.msra.mxu0 0.0
        %1413 = vmatprep.subr.mxu0 0.0
        %1414 = vmatpush2.xpose.msra.mxu0 0.0
        %1415 = vmatprep.subr.mxu0 0.0
        %1416 = vmatpush2.xpose.msra.mxu0 0.0
        %1417 = vmatprep.mubr.f32.mxu0 0.0
        %1418 = vmatmul.mubr.f32.gmra.mxu0 %v1321
        %v1419 = vpop.f32.mrf.mxu0
        %v1420 = vadd.f32 0.0, %v1419
        %v1421 = vpop.f32.mrf.mxu0
        %1422 = vmatprep.mubr.f32.mxu0 0.0
        %1423 = vmatmul.mubr.f32.gmra.mxu0 %v1323
        %v1424 = vpop.f32.mrf.mxu0
        %v1425 = vadd.f32 0.0, %v1424
        %v1426 = vpop.f32.mrf.mxu0
        %1427 = vmatprep.mubr.f32.mxu0 0.0
        %1428 = vmatmul.mubr.f32.gmra.mxu0 %v1325
        %v1429 = vpop.f32.mrf.mxu0
        %v1430 = vadd.f32 0.0, %v1429
        %v1431 = vpop.f32.mrf.mxu0
        %1432 = vmatprep.mubr.f32.mxu0 0.0
        %1433 = vmatmul.mubr.f32.gmra.mxu0 %v1327
        %v1434 = vpop.f32.mrf.mxu0
        %v1435 = vadd.f32 0.0, %v1434
        %v1436 = vpop.f32.mrf.mxu0
        %1437 = vmatprep.mubr.f32.mxu0 0.0
        %1438 = vmatmul.mubr.f32.gmra.mxu0 %v1329
        %v1439 = vpop.f32.mrf.mxu0
        %v1440 = vadd.f32 0.0, %v1439
        %v1441 = vpop.f32.mrf.mxu0
        %1442 = vmatprep.mubr.f32.mxu0 0.0
        %1443 = vmatmul.mubr.f32.gmra.mxu0 %v1331
        %v1444 = vpop.f32.mrf.mxu0
        %v1445 = vadd.f32 0.0, %v1444
        %v1446 = vpop.f32.mrf.mxu0
        %1447 = vmatprep.mubr.f32.mxu0 0.0
        %1448 = vmatmul.mubr.f32.gmra.mxu0 %v1333
        %v1449 = vpop.f32.mrf.mxu0
        %v1450 = vadd.f32 0.0, %v1449
        %v1451 = vpop.f32.mrf.mxu0
        %1452 = vmatprep.mubr.f32.mxu0 0.0
        %1453 = vmatmul.mubr.f32.gmra.mxu0 %v1335
        %v1454 = vpop.f32.mrf.mxu0
        %v1455 = vadd.f32 0.0, %v1454
        %v1456 = vpop.f32.mrf.mxu0
        %1457 = vdwg.mxu0
        %v1458 = vsel %vm572, %v1420, -inf
        %1459 = vmax.xlane.f32.xlu0 %v1458
        %v1460 = vpop.xlane.xlu0 %1459
        %v1461 = vsel %vm572, %v1425, -inf
        %1462 = vmax.xlane.f32.xlu0 %v1461
        %v1463 = vpop.xlane.xlu0 %1462
        %v1464 = vsel %vm572, %v1430, -inf
        %1465 = vmax.xlane.f32.xlu0 %v1464
        %v1466 = vpop.xlane.xlu0 %1465
        %v1467 = vsel %vm572, %v1435, -inf
        %1468 = vmax.xlane.f32.xlu0 %v1467
        %v1469 = vpop.xlane.xlu0 %1468
        %v1470 = vsel %vm572, %v1440, -inf
        %1471 = vmax.xlane.f32.xlu0 %v1470
        %v1472 = vpop.xlane.xlu0 %1471
        %v1473 = vsel %vm572, %v1445, -inf
        %1474 = vmax.xlane.f32.xlu0 %v1473
        %v1475 = vpop.xlane.xlu0 %1474
        %v1476 = vsel %vm572, %v1450, -inf
        %1477 = vmax.xlane.f32.xlu0 %v1476
        %v1478 = vpop.xlane.xlu0 %1477
        %v1479 = vsel %vm572, %v1455, -inf
        %1480 = vmax.xlane.f32.xlu0 %v1479
        %v1481 = vpop.xlane.xlu0 %1480
        %v1482 = vsub.f32 %v1420, %v1460
        %v1483 = vsub.f32 %v1425, %v1463
        %v1484 = vsub.f32 %v1430, %v1466
        %v1485 = vsub.f32 %v1435, %v1469
        %v1486 = vsub.f32 %v1440, %v1472
        %v1487 = vsub.f32 %v1445, %v1475
        %v1488 = vsub.f32 %v1450, %v1478
        %v1489 = vsub.f32 %v1455, %v1481
        %v1490 = vmul.f32 %v1482, 1.442695
        %v1491 = vpow.pop %v1490
        %v1492 = vmul.f32 %v1483, 1.442695
        %v1493 = vpow.pop %v1492
        %v1494 = vmul.f32 %v1484, 1.442695
        %v1495 = vpow.pop %v1494
        %v1496 = vmul.f32 %v1485, 1.442695
        %v1497 = vpow.pop %v1496
        %v1498 = vmul.f32 %v1486, 1.442695
        %v1499 = vpow.pop %v1498
        %v1500 = vmul.f32 %v1487, 1.442695
        %v1501 = vpow.pop %v1500
        %v1502 = vmul.f32 %v1488, 1.442695
        %v1503 = vpow.pop %v1502
        %v1504 = vmul.f32 %v1489, 1.442695
        %v1505 = vpow.pop %v1504
        %v1506 = vsel %vm572, %v1491, 0.0
        %1507 = vadd.xlane.f32.xlu0 %v1506
        %v1508 = vpop.xlane.xlu0 %1507
        %v1509 = vsel %vm572, %v1493, 0.0
        %1510 = vadd.xlane.f32.xlu0 %v1509
        %v1511 = vpop.xlane.xlu0 %1510
        %v1512 = vsel %vm572, %v1495, 0.0
        %1513 = vadd.xlane.f32.xlu0 %v1512
        %v1514 = vpop.xlane.xlu0 %1513
        %v1515 = vsel %vm572, %v1497, 0.0
        %1516 = vadd.xlane.f32.xlu0 %v1515
        %v1517 = vpop.xlane.xlu0 %1516
        %v1518 = vsel %vm572, %v1499, 0.0
        %1519 = vadd.xlane.f32.xlu0 %v1518
        %v1520 = vpop.xlane.xlu0 %1519
        %v1521 = vsel %vm572, %v1501, 0.0
        %1522 = vadd.xlane.f32.xlu0 %v1521
        %v1523 = vpop.xlane.xlu0 %1522
        %v1524 = vsel %vm572, %v1503, 0.0
        %1525 = vadd.xlane.f32.xlu0 %v1524
        %v1526 = vpop.xlane.xlu0 %1525
        %v1527 = vsel %vm572, %v1505, 0.0
        %1528 = vadd.xlane.f32.xlu0 %v1527
        %v1529 = vpop.xlane.xlu0 %1528
        %v1530 = vrcp.pop %v1508
        %v1531 = vrcp.pop %v1511
        %v1532 = vrcp.pop %v1514
        %v1533 = vrcp.pop %v1517
        %v1534 = vrcp.pop %v1520
        %v1535 = vrcp.pop %v1523
        %v1536 = vrcp.pop %v1526
        %v1537 = vrcp.pop %v1529
        %v1538 = vmul.f32 %v1491, %v1530
        %v1539 = vmul.f32 %v1493, %v1531
        %v1540 = vmul.f32 %v1495, %v1532
        %v1541 = vmul.f32 %v1497, %v1533
        %v1542 = vmul.f32 %v1499, %v1534
        %v1543 = vmul.f32 %v1501, %v1535
        %v1544 = vmul.f32 %v1503, %v1536
        %v1545 = vmul.f32 %v1505, %v1537
        %v1546 = vadd.f32 %v1087, %v1538
        %v1547 = vadd.f32 %v1088, %v1539
        %v1548 = vadd.f32 %v1089, %v1540
        %v1549 = vadd.f32 %v1090, %v1541
        %v1550 = vadd.f32 %v1091, %v1542
        %v1551 = vadd.f32 %v1092, %v1543
        %v1552 = vadd.f32 %v1093, %v1544
        %v1553 = vadd.f32 %v1094, %v1545
        %1554 = vrot.lane.b32.xlu0 %v372, 56
        %v1555 = vpop.permute.xlu0 %1554
        %1556 = vrot.lane.b32.xlu0 %v377, 56
        %v1557 = vpop.permute.xlu0 %1556
        %1558 = vrot.lane.b32.xlu0 %v382, 56
        %v1559 = vpop.permute.xlu0 %1558
        %1560 = vrot.lane.b32.xlu0 %v387, 56
        %v1561 = vpop.permute.xlu0 %1560
        %1562 = vrot.lane.b32.xlu0 %v392, 56
        %v1563 = vpop.permute.xlu0 %1562
        %1564 = vrot.lane.b32.xlu0 %v397, 56
        %v1565 = vpop.permute.xlu0 %1564
        %1566 = vrot.lane.b32.xlu0 %v402, 56
        %v1567 = vpop.permute.xlu0 %1566
        %1568 = vrot.lane.b32.xlu0 %v407, 56
        %v1569 = vpop.permute.xlu0 %1568
        %v1579 = vsel %vm572, %v1538, 0
        %v1582 = vsel %vm572, %v1539, 0
        %v1585 = vsel %vm572, %v1540, 0
        %v1588 = vsel %vm572, %v1541, 0
        %v1591 = vsel %vm572, %v1542, 0
        %v1594 = vsel %vm572, %v1543, 0
        %v1597 = vsel %vm572, %v1544, 0
        %v1600 = vsel %vm572, %v1545, 0
        %1602 = vmatprep.subr.mxu0 0.0
        %1603 = vmatpush1.msra.mxu0 0.0
        %1604 = vmatprep.subr.mxu0 0.0
        %1605 = vmatpush1.msra.mxu0 0.0
        %1606 = vmatprep.subr.mxu0 0.0
        %1607 = vmatpush1.msra.mxu0 0.0
        %1608 = vmatprep.subr.mxu0 0.0
        %1609 = vmatpush1.msra.mxu0 0.0
        %1610 = vmatprep.subr.mxu0 0.0
        %1611 = vmatpush1.msra.mxu0 0.0
        %1612 = vmatprep.subr.mxu0 0.0
        %1613 = vmatpush1.msra.mxu0 0.0
        %1614 = vmatprep.subr.mxu0 0.0
        %1615 = vmatpush1.msra.mxu0 0.0
        %1616 = vmatprep.subr.mxu0 0.0
        %1617 = vmatpush1.msra.mxu0 0.0
        %1618 = vmatprep.subr.mxu0 0.0
        %1619 = vmatpush1.msra.mxu0 %v1569
        %1620 = vmatprep.subr.mxu0 0.0
        %1621 = vmatpush1.msra.mxu0 %v1567
        %1622 = vmatprep.subr.mxu0 0.0
        %1623 = vmatpush1.msra.mxu0 %v1565
        %1624 = vmatprep.subr.mxu0 0.0
        %1625 = vmatpush1.msra.mxu0 %v1563
        %1626 = vmatprep.subr.mxu0 0.0
        %1627 = vmatpush1.msra.mxu0 %v1561
        %1628 = vmatprep.subr.mxu0 0.0
        %1629 = vmatpush1.msra.mxu0 %v1559
        %1630 = vmatprep.subr.mxu0 0.0
        %1631 = vmatpush1.msra.mxu0 %v1557
        %1632 = vmatprep.subr.mxu0 0.0
        %1633 = vmatpush1.msra.mxu0 %v1555
        %1634 = vmatprep.subr.mxu0 0.0
        %1635 = vmatpush2.msra.mxu0 0.0
        %1636 = vmatprep.subr.mxu0 0.0
        %1637 = vmatpush2.msra.mxu0 0.0
        %1638 = vmatprep.subr.mxu0 0.0
        %1639 = vmatpush2.msra.mxu0 0.0
        %1640 = vmatprep.subr.mxu0 0.0
        %1641 = vmatpush2.msra.mxu0 0.0
        %1642 = vmatprep.subr.mxu0 0.0
        %1643 = vmatpush2.msra.mxu0 0.0
        %1644 = vmatprep.subr.mxu0 0.0
        %1645 = vmatpush2.msra.mxu0 0.0
        %1646 = vmatprep.subr.mxu0 0.0
        %1647 = vmatpush2.msra.mxu0 0.0
        %1648 = vmatprep.subr.mxu0 0.0
        %1649 = vmatpush2.msra.mxu0 0.0
        %1650 = vmatprep.subr.mxu0 0.0
        %1651 = vmatpush2.msra.mxu0 0.0
        %1652 = vmatprep.subr.mxu0 0.0
        %1653 = vmatpush2.msra.mxu0 0.0
        %1654 = vmatprep.subr.mxu0 0.0
        %1655 = vmatpush2.msra.mxu0 0.0
        %1656 = vmatprep.subr.mxu0 0.0
        %1657 = vmatpush2.msra.mxu0 0.0
        %1658 = vmatprep.subr.mxu0 0.0
        %1659 = vmatpush2.msra.mxu0 0.0
        %1660 = vmatprep.subr.mxu0 0.0
        %1661 = vmatpush2.msra.mxu0 0.0
        %1662 = vmatprep.subr.mxu0 0.0
        %1663 = vmatpush2.msra.mxu0 0.0
        %1664 = vmatprep.subr.mxu0 0.0
        %1665 = vmatpush2.msra.mxu0 0.0
        %1666 = vmatprep.mubr.f32.mxu0 0.0
        %1667 = vmatmul.mubr.f32.gmra.mxu0 %v1579
        %v1668 = vpop.f32.mrf.mxu0
        %v1669 = vadd.f32 0.0, %v1668
        %v1670 = vpop.f32.mrf.mxu0
        %1671 = vmatprep.mubr.f32.mxu0 0.0
        %1672 = vmatmul.mubr.f32.gmra.mxu0 %v1582
        %v1673 = vpop.f32.mrf.mxu0
        %v1674 = vadd.f32 0.0, %v1673
        %v1675 = vpop.f32.mrf.mxu0
        %1676 = vmatprep.mubr.f32.mxu0 0.0
        %1677 = vmatmul.mubr.f32.gmra.mxu0 %v1585
        %v1678 = vpop.f32.mrf.mxu0
        %v1679 = vadd.f32 0.0, %v1678
        %v1680 = vpop.f32.mrf.mxu0
        %1681 = vmatprep.mubr.f32.mxu0 0.0
        %1682 = vmatmul.mubr.f32.gmra.mxu0 %v1588
        %v1683 = vpop.f32.mrf.mxu0
        %v1684 = vadd.f32 0.0, %v1683
        %v1685 = vpop.f32.mrf.mxu0
        %1686 = vmatprep.mubr.f32.mxu0 0.0
        %1687 = vmatmul.mubr.f32.gmra.mxu0 %v1591
        %v1688 = vpop.f32.mrf.mxu0
        %v1689 = vadd.f32 0.0, %v1688
        %v1690 = vpop.f32.mrf.mxu0
        %1691 = vmatprep.mubr.f32.mxu0 0.0
        %1692 = vmatmul.mubr.f32.gmra.mxu0 %v1594
        %v1693 = vpop.f32.mrf.mxu0
        %v1694 = vadd.f32 0.0, %v1693
        %v1695 = vpop.f32.mrf.mxu0
        %1696 = vmatprep.mubr.f32.mxu0 0.0
        %1697 = vmatmul.mubr.f32.gmra.mxu0 %v1597
        %v1698 = vpop.f32.mrf.mxu0
        %v1699 = vadd.f32 0.0, %v1698
        %v1700 = vpop.f32.mrf.mxu0
        %1701 = vmatprep.mubr.f32.mxu0 0.0
        %1702 = vmatmul.mubr.f32.gmra.mxu0 %v1600
        %v1703 = vpop.f32.mrf.mxu0
        %v1704 = vadd.f32 0.0, %v1703
        %v1705 = vpop.f32.mrf.mxu0
        %1706 = vdwg.mxu0
        %1715 = vrot.lane.b32.xlu0 %v1669, 8
        %v1716 = vpop.permute.xlu0 %1715
        %1717 = vrot.lane.b32.xlu0 %v1674, 8
        %v1718 = vpop.permute.xlu0 %1717
        %1719 = vrot.lane.b32.xlu0 %v1679, 8
        %v1720 = vpop.permute.xlu0 %1719
        %1721 = vrot.lane.b32.xlu0 %v1684, 8
        %v1722 = vpop.permute.xlu0 %1721
        %1723 = vrot.lane.b32.xlu0 %v1689, 8
        %v1724 = vpop.permute.xlu0 %1723
        %1725 = vrot.lane.b32.xlu0 %v1694, 8
        %v1726 = vpop.permute.xlu0 %1725
        %1727 = vrot.lane.b32.xlu0 %v1699, 8
        %v1728 = vpop.permute.xlu0 %1727
        %1729 = vrot.lane.b32.xlu0 %v1704, 8
        %v1730 = vpop.permute.xlu0 %1729
        %vm1739 = vcmask 97344
        %1740 = vst.msk [vmem:[#allocation2] sm:$0xff] %vm1739, %v1716
        %1741 = vst.msk [vmem:[#allocation2 + $0x8] sm:$0xff] %vm1739, %v1718
        %1742 = vst.msk [vmem:[#allocation2 + $0x10] sm:$0xff] %vm1739, %v1720
        %1743 = vst.msk [vmem:[#allocation2 + $0x18] sm:$0xff] %vm1739, %v1722
        %1744 = vst.msk [vmem:[#allocation2 + $0x20] sm:$0xff] %vm1739, %v1724
        %1745 = vst.msk [vmem:[#allocation2 + $0x28] sm:$0xff] %vm1739, %v1726
        %1746 = vst.msk [vmem:[#allocation2 + $0x30] sm:$0xff] %vm1739, %v1728
        %1747 = vst.msk [vmem:[#allocation2 + $0x38] sm:$0xff] %vm1739, %v1730
        %1748 = vrot.lane.b32.xlu0 %v372, 116
        %v1749 = vpop.permute.xlu0 %1748
        %1750 = vrot.lane.b32.xlu0 %v377, 116
        %v1751 = vpop.permute.xlu0 %1750
        %1752 = vrot.lane.b32.xlu0 %v382, 116
        %v1753 = vpop.permute.xlu0 %1752
        %1754 = vrot.lane.b32.xlu0 %v387, 116
        %v1755 = vpop.permute.xlu0 %1754
        %1756 = vrot.lane.b32.xlu0 %v392, 116
        %v1757 = vpop.permute.xlu0 %1756
        %1758 = vrot.lane.b32.xlu0 %v397, 116
        %v1759 = vpop.permute.xlu0 %1758
        %1760 = vrot.lane.b32.xlu0 %v402, 116
        %v1761 = vpop.permute.xlu0 %1760
        %1762 = vrot.lane.b32.xlu0 %v407, 116
        %v1763 = vpop.permute.xlu0 %1762
        %1764 = vrot.lane.b32.xlu0 %v372, 84
        %v1765 = vpop.permute.xlu0 %1764
        %1766 = vrot.lane.b32.xlu0 %v377, 84
        %v1767 = vpop.permute.xlu0 %1766
        %1768 = vrot.lane.b32.xlu0 %v382, 84
        %v1769 = vpop.permute.xlu0 %1768
        %1770 = vrot.lane.b32.xlu0 %v387, 84
        %v1771 = vpop.permute.xlu0 %1770
        %1772 = vrot.lane.b32.xlu0 %v392, 84
        %v1773 = vpop.permute.xlu0 %1772
        %1774 = vrot.lane.b32.xlu0 %v397, 84
        %v1775 = vpop.permute.xlu0 %1774
        %1776 = vrot.lane.b32.xlu0 %v402, 84
        %v1777 = vpop.permute.xlu0 %1776
        %1778 = vrot.lane.b32.xlu0 %v407, 84
        %v1779 = vpop.permute.xlu0 %1778
        %v1780 = vsel %vm434, %v1749, 0
        %v1782 = vsel %vm434, %v1751, 0
        %v1784 = vsel %vm434, %v1753, 0
        %v1786 = vsel %vm434, %v1755, 0
        %v1788 = vsel %vm434, %v1757, 0
        %v1790 = vsel %vm434, %v1759, 0
        %v1792 = vsel %vm434, %v1761, 0
        %v1794 = vsel %vm434, %v1763, 0
        %v1796 = vsel %vm434, %v1765, 0
        %v1798 = vsel %vm434, %v1767, 0
        %v1800 = vsel %vm434, %v1769, 0
        %v1802 = vsel %vm434, %v1771, 0
        %v1804 = vsel %vm434, %v1773, 0
        %v1806 = vsel %vm434, %v1775, 0
        %v1808 = vsel %vm434, %v1777, 0
        %v1810 = vsel %vm434, %v1779, 0
        %1812 = vmatprep.subr.mxu0 0.0
        %1813 = vmatpush1.xpose.msra.mxu0 0.0
        %1814 = vmatprep.subr.mxu0 0.0
        %1815 = vmatpush1.xpose.msra.mxu0 0.0
        %1816 = vmatprep.subr.mxu0 0.0
        %1817 = vmatpush1.xpose.msra.mxu0 0.0
        %1818 = vmatprep.subr.mxu0 0.0
        %1819 = vmatpush1.xpose.msra.mxu0 0.0
        %1820 = vmatprep.subr.mxu0 0.0
        %1821 = vmatpush1.xpose.msra.mxu0 0.0
        %1822 = vmatprep.subr.mxu0 0.0
        %1823 = vmatpush1.xpose.msra.mxu0 0.0
        %1824 = vmatprep.subr.mxu0 0.0
        %1825 = vmatpush1.xpose.msra.mxu0 0.0
        %1826 = vmatprep.subr.mxu0 0.0
        %1827 = vmatpush1.xpose.msra.mxu0 0.0
        %1828 = vmatprep.subr.mxu0 0.0
        %1829 = vmatpush1.xpose.msra.mxu0 %v1810
        %1830 = vmatprep.subr.mxu0 0.0
        %1831 = vmatpush1.xpose.msra.mxu0 %v1808
        %1832 = vmatprep.subr.mxu0 0.0
        %1833 = vmatpush1.xpose.msra.mxu0 %v1806
        %1834 = vmatprep.subr.mxu0 0.0
        %1835 = vmatpush1.xpose.msra.mxu0 %v1804
        %1836 = vmatprep.subr.mxu0 0.0
        %1837 = vmatpush1.xpose.msra.mxu0 %v1802
        %1838 = vmatprep.subr.mxu0 0.0
        %1839 = vmatpush1.xpose.msra.mxu0 %v1800
        %1840 = vmatprep.subr.mxu0 0.0
        %1841 = vmatpush1.xpose.msra.mxu0 %v1798
        %1842 = vmatprep.subr.mxu0 0.0
        %1843 = vmatpush1.xpose.msra.mxu0 %v1796
        %1844 = vmatprep.subr.mxu0 0.0
        %1845 = vmatpush2.xpose.msra.mxu0 0.0
        %1846 = vmatprep.subr.mxu0 0.0
        %1847 = vmatpush2.xpose.msra.mxu0 0.0
        %1848 = vmatprep.subr.mxu0 0.0
        %1849 = vmatpush2.xpose.msra.mxu0 0.0
        %1850 = vmatprep.subr.mxu0 0.0
        %1851 = vmatpush2.xpose.msra.mxu0 0.0
        %1852 = vmatprep.subr.mxu0 0.0
        %1853 = vmatpush2.xpose.msra.mxu0 0.0
        %1854 = vmatprep.subr.mxu0 0.0
        %1855 = vmatpush2.xpose.msra.mxu0 0.0
        %1856 = vmatprep.subr.mxu0 0.0
        %1857 = vmatpush2.xpose.msra.mxu0 0.0
        %1858 = vmatprep.subr.mxu0 0.0
        %1859 = vmatpush2.xpose.msra.mxu0 0.0
        %1860 = vmatprep.subr.mxu0 0.0
        %1861 = vmatpush2.xpose.msra.mxu0 0.0
        %1862 = vmatprep.subr.mxu0 0.0
        %1863 = vmatpush2.xpose.msra.mxu0 0.0
        %1864 = vmatprep.subr.mxu0 0.0
        %1865 = vmatpush2.xpose.msra.mxu0 0.0
        %1866 = vmatprep.subr.mxu0 0.0
        %1867 = vmatpush2.xpose.msra.mxu0 0.0
        %1868 = vmatprep.subr.mxu0 0.0
        %1869 = vmatpush2.xpose.msra.mxu0 0.0
        %1870 = vmatprep.subr.mxu0 0.0
        %1871 = vmatpush2.xpose.msra.mxu0 0.0
        %1872 = vmatprep.subr.mxu0 0.0
        %1873 = vmatpush2.xpose.msra.mxu0 0.0
        %1874 = vmatprep.subr.mxu0 0.0
        %1875 = vmatpush2.xpose.msra.mxu0 0.0
        %1876 = vmatprep.mubr.f32.mxu0 0.0
        %1877 = vmatmul.mubr.f32.gmra.mxu0 %v1780
        %v1878 = vpop.f32.mrf.mxu0
        %v1879 = vadd.f32 0.0, %v1878
        %v1880 = vpop.f32.mrf.mxu0
        %1881 = vmatprep.mubr.f32.mxu0 0.0
        %1882 = vmatmul.mubr.f32.gmra.mxu0 %v1782
        %v1883 = vpop.f32.mrf.mxu0
        %v1884 = vadd.f32 0.0, %v1883
        %v1885 = vpop.f32.mrf.mxu0
        %1886 = vmatprep.mubr.f32.mxu0 0.0
        %1887 = vmatmul.mubr.f32.gmra.mxu0 %v1784
        %v1888 = vpop.f32.mrf.mxu0
        %v1889 = vadd.f32 0.0, %v1888
        %v1890 = vpop.f32.mrf.mxu0
        %1891 = vmatprep.mubr.f32.mxu0 0.0
        %1892 = vmatmul.mubr.f32.gmra.mxu0 %v1786
        %v1893 = vpop.f32.mrf.mxu0
        %v1894 = vadd.f32 0.0, %v1893
        %v1895 = vpop.f32.mrf.mxu0
        %1896 = vmatprep.mubr.f32.mxu0 0.0
        %1897 = vmatmul.mubr.f32.gmra.mxu0 %v1788
        %v1898 = vpop.f32.mrf.mxu0
        %v1899 = vadd.f32 0.0, %v1898
        %v1900 = vpop.f32.mrf.mxu0
        %1901 = vmatprep.mubr.f32.mxu0 0.0
        %1902 = vmatmul.mubr.f32.gmra.mxu0 %v1790
        %v1903 = vpop.f32.mrf.mxu0
        %v1904 = vadd.f32 0.0, %v1903
        %v1905 = vpop.f32.mrf.mxu0
        %1906 = vmatprep.mubr.f32.mxu0 0.0
        %1907 = vmatmul.mubr.f32.gmra.mxu0 %v1792
        %v1908 = vpop.f32.mrf.mxu0
        %v1909 = vadd.f32 0.0, %v1908
        %v1910 = vpop.f32.mrf.mxu0
        %1911 = vmatprep.mubr.f32.mxu0 0.0
        %1912 = vmatmul.mubr.f32.gmra.mxu0 %v1794
        %v1913 = vpop.f32.mrf.mxu0
        %v1914 = vadd.f32 0.0, %v1913
        %v1915 = vpop.f32.mrf.mxu0
        %1916 = vdwg.mxu0
        %v1917 = vsel %vm572, %v1879, -inf
        %1918 = vmax.xlane.f32.xlu0 %v1917
        %v1919 = vpop.xlane.xlu0 %1918
        %v1920 = vsel %vm572, %v1884, -inf
        %1921 = vmax.xlane.f32.xlu0 %v1920
        %v1922 = vpop.xlane.xlu0 %1921
        %v1923 = vsel %vm572, %v1889, -inf
        %1924 = vmax.xlane.f32.xlu0 %v1923
        %v1925 = vpop.xlane.xlu0 %1924
        %v1926 = vsel %vm572, %v1894, -inf
        %1927 = vmax.xlane.f32.xlu0 %v1926
        %v1928 = vpop.xlane.xlu0 %1927
        %v1929 = vsel %vm572, %v1899, -inf
        %1930 = vmax.xlane.f32.xlu0 %v1929
        %v1931 = vpop.xlane.xlu0 %1930
        %v1932 = vsel %vm572, %v1904, -inf
        %1933 = vmax.xlane.f32.xlu0 %v1932
        %v1934 = vpop.xlane.xlu0 %1933
        %v1935 = vsel %vm572, %v1909, -inf
        %1936 = vmax.xlane.f32.xlu0 %v1935
        %v1937 = vpop.xlane.xlu0 %1936
        %v1938 = vsel %vm572, %v1914, -inf
        %1939 = vmax.xlane.f32.xlu0 %v1938
        %v1940 = vpop.xlane.xlu0 %1939
        %v1941 = vsub.f32 %v1879, %v1919
        %v1942 = vsub.f32 %v1884, %v1922
        %v1943 = vsub.f32 %v1889, %v1925
        %v1944 = vsub.f32 %v1894, %v1928
        %v1945 = vsub.f32 %v1899, %v1931
        %v1946 = vsub.f32 %v1904, %v1934
        %v1947 = vsub.f32 %v1909, %v1937
        %v1948 = vsub.f32 %v1914, %v1940
        %v1949 = vmul.f32 %v1941, 1.442695
        %v1950 = vpow.pop %v1949
        %v1951 = vmul.f32 %v1942, 1.442695
        %v1952 = vpow.pop %v1951
        %v1953 = vmul.f32 %v1943, 1.442695
        %v1954 = vpow.pop %v1953
        %v1955 = vmul.f32 %v1944, 1.442695
        %v1956 = vpow.pop %v1955
        %v1957 = vmul.f32 %v1945, 1.442695
        %v1958 = vpow.pop %v1957
        %v1959 = vmul.f32 %v1946, 1.442695
        %v1960 = vpow.pop %v1959
        %v1961 = vmul.f32 %v1947, 1.442695
        %v1962 = vpow.pop %v1961
        %v1963 = vmul.f32 %v1948, 1.442695
        %v1964 = vpow.pop %v1963
        %v1965 = vsel %vm572, %v1950, 0.0
        %1966 = vadd.xlane.f32.xlu0 %v1965
        %v1967 = vpop.xlane.xlu0 %1966
        %v1968 = vsel %vm572, %v1952, 0.0
        %1969 = vadd.xlane.f32.xlu0 %v1968
        %v1970 = vpop.xlane.xlu0 %1969
        %v1971 = vsel %vm572, %v1954, 0.0
        %1972 = vadd.xlane.f32.xlu0 %v1971
        %v1973 = vpop.xlane.xlu0 %1972
        %v1974 = vsel %vm572, %v1956, 0.0
        %1975 = vadd.xlane.f32.xlu0 %v1974
        %v1976 = vpop.xlane.xlu0 %1975
        %v1977 = vsel %vm572, %v1958, 0.0
        %1978 = vadd.xlane.f32.xlu0 %v1977
        %v1979 = vpop.xlane.xlu0 %1978
        %v1980 = vsel %vm572, %v1960, 0.0
        %1981 = vadd.xlane.f32.xlu0 %v1980
        %v1982 = vpop.xlane.xlu0 %1981
        %v1983 = vsel %vm572, %v1962, 0.0
        %1984 = vadd.xlane.f32.xlu0 %v1983
        %v1985 = vpop.xlane.xlu0 %1984
        %v1986 = vsel %vm572, %v1964, 0.0
        %1987 = vadd.xlane.f32.xlu0 %v1986
        %v1988 = vpop.xlane.xlu0 %1987
        %v1989 = vrcp.pop %v1967
        %v1990 = vrcp.pop %v1970
        %v1991 = vrcp.pop %v1973
        %v1992 = vrcp.pop %v1976
        %v1993 = vrcp.pop %v1979
        %v1994 = vrcp.pop %v1982
        %v1995 = vrcp.pop %v1985
        %v1996 = vrcp.pop %v1988
        %v1997 = vmul.f32 %v1950, %v1989
        %v1998 = vmul.f32 %v1952, %v1990
        %v1999 = vmul.f32 %v1954, %v1991
        %v2000 = vmul.f32 %v1956, %v1992
        %v2001 = vmul.f32 %v1958, %v1993
        %v2002 = vmul.f32 %v1960, %v1994
        %v2003 = vmul.f32 %v1962, %v1995
        %v2004 = vmul.f32 %v1964, %v1996
        %v2005 = vadd.f32 %v1546, %v1997
        %v2006 = vadd.f32 %v1547, %v1998
        %v2007 = vadd.f32 %v1548, %v1999
        %v2008 = vadd.f32 %v1549, %v2000
        %v2009 = vadd.f32 %v1550, %v2001
        %v2010 = vadd.f32 %v1551, %v2002
        %v2011 = vadd.f32 %v1552, %v2003
        %v2012 = vadd.f32 %v1553, %v2004
        %2013 = vrot.lane.b32.xlu0 %v372, 52
        %v2014 = vpop.permute.xlu0 %2013
        %2015 = vrot.lane.b32.xlu0 %v377, 52
        %v2016 = vpop.permute.xlu0 %2015
        %2017 = vrot.lane.b32.xlu0 %v382, 52
        %v2018 = vpop.permute.xlu0 %2017
        %2019 = vrot.lane.b32.xlu0 %v387, 52
        %v2020 = vpop.permute.xlu0 %2019
        %2021 = vrot.lane.b32.xlu0 %v392, 52
        %v2022 = vpop.permute.xlu0 %2021
        %2023 = vrot.lane.b32.xlu0 %v397, 52
        %v2024 = vpop.permute.xlu0 %2023
        %2025 = vrot.lane.b32.xlu0 %v402, 52
        %v2026 = vpop.permute.xlu0 %2025
        %2027 = vrot.lane.b32.xlu0 %v407, 52
        %v2028 = vpop.permute.xlu0 %2027
        %v2038 = vsel %vm572, %v1997, 0
        %v2041 = vsel %vm572, %v1998, 0
        %v2044 = vsel %vm572, %v1999, 0
        %v2047 = vsel %vm572, %v2000, 0
        %v2050 = vsel %vm572, %v2001, 0
        %v2053 = vsel %vm572, %v2002, 0
        %v2056 = vsel %vm572, %v2003, 0
        %v2059 = vsel %vm572, %v2004, 0
        %2061 = vmatprep.subr.mxu0 0.0
        %2062 = vmatpush1.msra.mxu0 0.0
        %2063 = vmatprep.subr.mxu0 0.0
        %2064 = vmatpush1.msra.mxu0 0.0
        %2065 = vmatprep.subr.mxu0 0.0
        %2066 = vmatpush1.msra.mxu0 0.0
        %2067 = vmatprep.subr.mxu0 0.0
        %2068 = vmatpush1.msra.mxu0 0.0
        %2069 = vmatprep.subr.mxu0 0.0
        %2070 = vmatpush1.msra.mxu0 0.0
        %2071 = vmatprep.subr.mxu0 0.0
        %2072 = vmatpush1.msra.mxu0 0.0
        %2073 = vmatprep.subr.mxu0 0.0
        %2074 = vmatpush1.msra.mxu0 0.0
        %2075 = vmatprep.subr.mxu0 0.0
        %2076 = vmatpush1.msra.mxu0 0.0
        %2077 = vmatprep.subr.mxu0 0.0
        %2078 = vmatpush1.msra.mxu0 %v2028
        %2079 = vmatprep.subr.mxu0 0.0
        %2080 = vmatpush1.msra.mxu0 %v2026
        %2081 = vmatprep.subr.mxu0 0.0
        %2082 = vmatpush1.msra.mxu0 %v2024
        %2083 = vmatprep.subr.mxu0 0.0
        %2084 = vmatpush1.msra.mxu0 %v2022
        %2085 = vmatprep.subr.mxu0 0.0
        %2086 = vmatpush1.msra.mxu0 %v2020
        %2087 = vmatprep.subr.mxu0 0.0
        %2088 = vmatpush1.msra.mxu0 %v2018
        %2089 = vmatprep.subr.mxu0 0.0
        %2090 = vmatpush1.msra.mxu0 %v2016
        %2091 = vmatprep.subr.mxu0 0.0
        %2092 = vmatpush1.msra.mxu0 %v2014
        %2093 = vmatprep.subr.mxu0 0.0
        %2094 = vmatpush2.msra.mxu0 0.0
        %2095 = vmatprep.subr.mxu0 0.0
        %2096 = vmatpush2.msra.mxu0 0.0
        %2097 = vmatprep.subr.mxu0 0.0
        %2098 = vmatpush2.msra.mxu0 0.0
        %2099 = vmatprep.subr.mxu0 0.0
        %2100 = vmatpush2.msra.mxu0 0.0
        %2101 = vmatprep.subr.mxu0 0.0
        %2102 = vmatpush2.msra.mxu0 0.0
        %2103 = vmatprep.subr.mxu0 0.0
        %2104 = vmatpush2.msra.mxu0 0.0
        %2105 = vmatprep.subr.mxu0 0.0
        %2106 = vmatpush2.msra.mxu0 0.0
        %2107 = vmatprep.subr.mxu0 0.0
        %2108 = vmatpush2.msra.mxu0 0.0
        %2109 = vmatprep.subr.mxu0 0.0
        %2110 = vmatpush2.msra.mxu0 0.0
        %2111 = vmatprep.subr.mxu0 0.0
        %2112 = vmatpush2.msra.mxu0 0.0
        %2113 = vmatprep.subr.mxu0 0.0
        %2114 = vmatpush2.msra.mxu0 0.0
        %2115 = vmatprep.subr.mxu0 0.0
        %2116 = vmatpush2.msra.mxu0 0.0
        %2117 = vmatprep.subr.mxu0 0.0
        %2118 = vmatpush2.msra.mxu0 0.0
        %2119 = vmatprep.subr.mxu0 0.0
        %2120 = vmatpush2.msra.mxu0 0.0
        %2121 = vmatprep.subr.mxu0 0.0
        %2122 = vmatpush2.msra.mxu0 0.0
        %2123 = vmatprep.subr.mxu0 0.0
        %2124 = vmatpush2.msra.mxu0 0.0
        %2125 = vmatprep.mubr.f32.mxu0 0.0
        %2126 = vmatmul.mubr.f32.gmra.mxu0 %v2038
        %v2127 = vpop.f32.mrf.mxu0
        %v2128 = vadd.f32 0.0, %v2127
        %v2129 = vpop.f32.mrf.mxu0
        %2130 = vmatprep.mubr.f32.mxu0 0.0
        %2131 = vmatmul.mubr.f32.gmra.mxu0 %v2041
        %v2132 = vpop.f32.mrf.mxu0
        %v2133 = vadd.f32 0.0, %v2132
        %v2134 = vpop.f32.mrf.mxu0
        %2135 = vmatprep.mubr.f32.mxu0 0.0
        %2136 = vmatmul.mubr.f32.gmra.mxu0 %v2044
        %v2137 = vpop.f32.mrf.mxu0
        %v2138 = vadd.f32 0.0, %v2137
        %v2139 = vpop.f32.mrf.mxu0
        %2140 = vmatprep.mubr.f32.mxu0 0.0
        %2141 = vmatmul.mubr.f32.gmra.mxu0 %v2047
        %v2142 = vpop.f32.mrf.mxu0
        %v2143 = vadd.f32 0.0, %v2142
        %v2144 = vpop.f32.mrf.mxu0
        %2145 = vmatprep.mubr.f32.mxu0 0.0
        %2146 = vmatmul.mubr.f32.gmra.mxu0 %v2050
        %v2147 = vpop.f32.mrf.mxu0
        %v2148 = vadd.f32 0.0, %v2147
        %v2149 = vpop.f32.mrf.mxu0
        %2150 = vmatprep.mubr.f32.mxu0 0.0
        %2151 = vmatmul.mubr.f32.gmra.mxu0 %v2053
        %v2152 = vpop.f32.mrf.mxu0
        %v2153 = vadd.f32 0.0, %v2152
        %v2154 = vpop.f32.mrf.mxu0
        %2155 = vmatprep.mubr.f32.mxu0 0.0
        %2156 = vmatmul.mubr.f32.gmra.mxu0 %v2056
        %v2157 = vpop.f32.mrf.mxu0
        %v2158 = vadd.f32 0.0, %v2157
        %v2159 = vpop.f32.mrf.mxu0
        %2160 = vmatprep.mubr.f32.mxu0 0.0
        %2161 = vmatmul.mubr.f32.gmra.mxu0 %v2059
        %v2162 = vpop.f32.mrf.mxu0
        %v2163 = vadd.f32 0.0, %v2162
        %v2164 = vpop.f32.mrf.mxu0
        %2165 = vdwg.mxu0
        %2174 = vrot.lane.b32.xlu0 %v2128, 12
        %v2175 = vpop.permute.xlu0 %2174
        %2176 = vrot.lane.b32.xlu0 %v2133, 12
        %v2177 = vpop.permute.xlu0 %2176
        %2178 = vrot.lane.b32.xlu0 %v2138, 12
        %v2179 = vpop.permute.xlu0 %2178
        %2180 = vrot.lane.b32.xlu0 %v2143, 12
        %v2181 = vpop.permute.xlu0 %2180
        %2182 = vrot.lane.b32.xlu0 %v2148, 12
        %v2183 = vpop.permute.xlu0 %2182
        %2184 = vrot.lane.b32.xlu0 %v2153, 12
        %v2185 = vpop.permute.xlu0 %2184
        %2186 = vrot.lane.b32.xlu0 %v2158, 12
        %v2187 = vpop.permute.xlu0 %2186
        %2188 = vrot.lane.b32.xlu0 %v2163, 12
        %v2189 = vpop.permute.xlu0 %2188
        %vm2198 = vcmask 130144
        %2199 = vst.msk [vmem:[#allocation2] sm:$0xff] %vm2198, %v2175
        %2200 = vst.msk [vmem:[#allocation2 + $0x8] sm:$0xff] %vm2198, %v2177
        %2201 = vst.msk [vmem:[#allocation2 + $0x10] sm:$0xff] %vm2198, %v2179
        %2202 = vst.msk [vmem:[#allocation2 + $0x18] sm:$0xff] %vm2198, %v2181
        %2203 = vst.msk [vmem:[#allocation2 + $0x20] sm:$0xff] %vm2198, %v2183
        %2204 = vst.msk [vmem:[#allocation2 + $0x28] sm:$0xff] %vm2198, %v2185
        %2205 = vst.msk [vmem:[#allocation2 + $0x30] sm:$0xff] %vm2198, %v2187
        %2206 = vst.msk [vmem:[#allocation2 + $0x38] sm:$0xff] %vm2198, %v2189
        %2207 = vrot.lane.b32.xlu0 %v372, 112
        %v2208 = vpop.permute.xlu0 %2207
        %2209 = vrot.lane.b32.xlu0 %v377, 112
        %v2210 = vpop.permute.xlu0 %2209
        %2211 = vrot.lane.b32.xlu0 %v382, 112
        %v2212 = vpop.permute.xlu0 %2211
        %2213 = vrot.lane.b32.xlu0 %v387, 112
        %v2214 = vpop.permute.xlu0 %2213
        %2215 = vrot.lane.b32.xlu0 %v392, 112
        %v2216 = vpop.permute.xlu0 %2215
        %2217 = vrot.lane.b32.xlu0 %v397, 112
        %v2218 = vpop.permute.xlu0 %2217
        %2219 = vrot.lane.b32.xlu0 %v402, 112
        %v2220 = vpop.permute.xlu0 %2219
        %2221 = vrot.lane.b32.xlu0 %v407, 112
        %v2222 = vpop.permute.xlu0 %2221
        %2223 = vrot.lane.b32.xlu0 %v372, 80
        %v2224 = vpop.permute.xlu0 %2223
        %2225 = vrot.lane.b32.xlu0 %v377, 80
        %v2226 = vpop.permute.xlu0 %2225
        %2227 = vrot.lane.b32.xlu0 %v382, 80
        %v2228 = vpop.permute.xlu0 %2227
        %2229 = vrot.lane.b32.xlu0 %v387, 80
        %v2230 = vpop.permute.xlu0 %2229
        %2231 = vrot.lane.b32.xlu0 %v392, 80
        %v2232 = vpop.permute.xlu0 %2231
        %2233 = vrot.lane.b32.xlu0 %v397, 80
        %v2234 = vpop.permute.xlu0 %2233
        %2235 = vrot.lane.b32.xlu0 %v402, 80
        %v2236 = vpop.permute.xlu0 %2235
        %2237 = vrot.lane.b32.xlu0 %v407, 80
        %v2238 = vpop.permute.xlu0 %2237
        %v2239 = vsel %vm434, %v2208, 0
        %v2241 = vsel %vm434, %v2210, 0
        %v2243 = vsel %vm434, %v2212, 0
        %v2245 = vsel %vm434, %v2214, 0
        %v2247 = vsel %vm434, %v2216, 0
        %v2249 = vsel %vm434, %v2218, 0
        %v2251 = vsel %vm434, %v2220, 0
        %v2253 = vsel %vm434, %v2222, 0
        %v2255 = vsel %vm434, %v2224, 0
        %v2257 = vsel %vm434, %v2226, 0
        %v2259 = vsel %vm434, %v2228, 0
        %v2261 = vsel %vm434, %v2230, 0
        %v2263 = vsel %vm434, %v2232, 0
        %v2265 = vsel %vm434, %v2234, 0
        %v2267 = vsel %vm434, %v2236, 0
        %v2269 = vsel %vm434, %v2238, 0
        %2271 = vmatprep.subr.mxu0 0.0
        %2272 = vmatpush1.xpose.msra.mxu0 0.0
        %2273 = vmatprep.subr.mxu0 0.0
        %2274 = vmatpush1.xpose.msra.mxu0 0.0
        %2275 = vmatprep.subr.mxu0 0.0
        %2276 = vmatpush1.xpose.msra.mxu0 0.0
        %2277 = vmatprep.subr.mxu0 0.0
        %2278 = vmatpush1.xpose.msra.mxu0 0.0
        %2279 = vmatprep.subr.mxu0 0.0
        %2280 = vmatpush1.xpose.msra.mxu0 0.0
        %2281 = vmatprep.subr.mxu0 0.0
        %2282 = vmatpush1.xpose.msra.mxu0 0.0
        %2283 = vmatprep.subr.mxu0 0.0
        %2284 = vmatpush1.xpose.msra.mxu0 0.0
        %2285 = vmatprep.subr.mxu0 0.0
        %2286 = vmatpush1.xpose.msra.mxu0 0.0
        %2287 = vmatprep.subr.mxu0 0.0
        %2288 = vmatpush1.xpose.msra.mxu0 %v2269
        %2289 = vmatprep.subr.mxu0 0.0
        %2290 = vmatpush1.xpose.msra.mxu0 %v2267
        %2291 = vmatprep.subr.mxu0 0.0
        %2292 = vmatpush1.xpose.msra.mxu0 %v2265
        %2293 = vmatprep.subr.mxu0 0.0
        %2294 = vmatpush1.xpose.msra.mxu0 %v2263
        %2295 = vmatprep.subr.mxu0 0.0
        %2296 = vmatpush1.xpose.msra.mxu0 %v2261
        %2297 = vmatprep.subr.mxu0 0.0
        %2298 = vmatpush1.xpose.msra.mxu0 %v2259
        %2299 = vmatprep.subr.mxu0 0.0
        %2300 = vmatpush1.xpose.msra.mxu0 %v2257
        %2301 = vmatprep.subr.mxu0 0.0
        %2302 = vmatpush1.xpose.msra.mxu0 %v2255
        %2303 = vmatprep.subr.mxu0 0.0
        %2304 = vmatpush2.xpose.msra.mxu0 0.0
        %2305 = vmatprep.subr.mxu0 0.0
        %2306 = vmatpush2.xpose.msra.mxu0 0.0
        %2307 = vmatprep.subr.mxu0 0.0
        %2308 = vmatpush2.xpose.msra.mxu0 0.0
        %2309 = vmatprep.subr.mxu0 0.0
        %2310 = vmatpush2.xpose.msra.mxu0 0.0
        %2311 = vmatprep.subr.mxu0 0.0
        %2312 = vmatpush2.xpose.msra.mxu0 0.0
        %2313 = vmatprep.subr.mxu0 0.0
        %2314 = vmatpush2.xpose.msra.mxu0 0.0
        %2315 = vmatprep.subr.mxu0 0.0
        %2316 = vmatpush2.xpose.msra.mxu0 0.0
        %2317 = vmatprep.subr.mxu0 0.0
        %2318 = vmatpush2.xpose.msra.mxu0 0.0
        %2319 = vmatprep.subr.mxu0 0.0
        %2320 = vmatpush2.xpose.msra.mxu0 0.0
        %2321 = vmatprep.subr.mxu0 0.0
        %2322 = vmatpush2.xpose.msra.mxu0 0.0
        %2323 = vmatprep.subr.mxu0 0.0
        %2324 = vmatpush2.xpose.msra.mxu0 0.0
        %2325 = vmatprep.subr.mxu0 0.0
        %2326 = vmatpush2.xpose.msra.mxu0 0.0
        %2327 = vmatprep.subr.mxu0 0.0
        %2328 = vmatpush2.xpose.msra.mxu0 0.0
        %2329 = vmatprep.subr.mxu0 0.0
        %2330 = vmatpush2.xpose.msra.mxu0 0.0
        %2331 = vmatprep.subr.mxu0 0.0
        %2332 = vmatpush2.xpose.msra.mxu0 0.0
        %2333 = vmatprep.subr.mxu0 0.0
        %2334 = vmatpush2.xpose.msra.mxu0 0.0
        %2335 = vmatprep.mubr.f32.mxu0 0.0
        %2336 = vmatmul.mubr.f32.gmra.mxu0 %v2239
        %v2337 = vpop.f32.mrf.mxu0
        %v2338 = vadd.f32 0.0, %v2337
        %v2339 = vpop.f32.mrf.mxu0
        %2340 = vmatprep.mubr.f32.mxu0 0.0
        %2341 = vmatmul.mubr.f32.gmra.mxu0 %v2241
        %v2342 = vpop.f32.mrf.mxu0
        %v2343 = vadd.f32 0.0, %v2342
        %v2344 = vpop.f32.mrf.mxu0
        %2345 = vmatprep.mubr.f32.mxu0 0.0
        %2346 = vmatmul.mubr.f32.gmra.mxu0 %v2243
        %v2347 = vpop.f32.mrf.mxu0
        %v2348 = vadd.f32 0.0, %v2347
        %v2349 = vpop.f32.mrf.mxu0
        %2350 = vmatprep.mubr.f32.mxu0 0.0
        %2351 = vmatmul.mubr.f32.gmra.mxu0 %v2245
        %v2352 = vpop.f32.mrf.mxu0
        %v2353 = vadd.f32 0.0, %v2352
        %v2354 = vpop.f32.mrf.mxu0
        %2355 = vmatprep.mubr.f32.mxu0 0.0
        %2356 = vmatmul.mubr.f32.gmra.mxu0 %v2247
        %v2357 = vpop.f32.mrf.mxu0
        %v2358 = vadd.f32 0.0, %v2357
        %v2359 = vpop.f32.mrf.mxu0
        %2360 = vmatprep.mubr.f32.mxu0 0.0
        %2361 = vmatmul.mubr.f32.gmra.mxu0 %v2249
        %v2362 = vpop.f32.mrf.mxu0
        %v2363 = vadd.f32 0.0, %v2362
        %v2364 = vpop.f32.mrf.mxu0
        %2365 = vmatprep.mubr.f32.mxu0 0.0
        %2366 = vmatmul.mubr.f32.gmra.mxu0 %v2251
        %v2367 = vpop.f32.mrf.mxu0
        %v2368 = vadd.f32 0.0, %v2367
        %v2369 = vpop.f32.mrf.mxu0
        %2370 = vmatprep.mubr.f32.mxu0 0.0
        %2371 = vmatmul.mubr.f32.gmra.mxu0 %v2253
        %v2372 = vpop.f32.mrf.mxu0
        %v2373 = vadd.f32 0.0, %v2372
        %v2374 = vpop.f32.mrf.mxu0
        %2375 = vdwg.mxu0
        %v2376 = vsel %vm572, %v2338, -inf
        %2377 = vmax.xlane.f32.xlu0 %v2376
        %v2378 = vpop.xlane.xlu0 %2377
        %v2379 = vsel %vm572, %v2343, -inf
        %2380 = vmax.xlane.f32.xlu0 %v2379
        %v2381 = vpop.xlane.xlu0 %2380
        %v2382 = vsel %vm572, %v2348, -inf
        %2383 = vmax.xlane.f32.xlu0 %v2382
        %v2384 = vpop.xlane.xlu0 %2383
        %v2385 = vsel %vm572, %v2353, -inf
        %2386 = vmax.xlane.f32.xlu0 %v2385
        %v2387 = vpop.xlane.xlu0 %2386
        %v2388 = vsel %vm572, %v2358, -inf
        %2389 = vmax.xlane.f32.xlu0 %v2388
        %v2390 = vpop.xlane.xlu0 %2389
        %v2391 = vsel %vm572, %v2363, -inf
        %2392 = vmax.xlane.f32.xlu0 %v2391
        %v2393 = vpop.xlane.xlu0 %2392
        %v2394 = vsel %vm572, %v2368, -inf
        %2395 = vmax.xlane.f32.xlu0 %v2394
        %v2396 = vpop.xlane.xlu0 %2395
        %v2397 = vsel %vm572, %v2373, -inf
        %2398 = vmax.xlane.f32.xlu0 %v2397
        %v2399 = vpop.xlane.xlu0 %2398
        %v2400 = vsub.f32 %v2338, %v2378
        %v2401 = vsub.f32 %v2343, %v2381
        %v2402 = vsub.f32 %v2348, %v2384
        %v2403 = vsub.f32 %v2353, %v2387
        %v2404 = vsub.f32 %v2358, %v2390
        %v2405 = vsub.f32 %v2363, %v2393
        %v2406 = vsub.f32 %v2368, %v2396
        %v2407 = vsub.f32 %v2373, %v2399
        %v2408 = vmul.f32 %v2400, 1.442695
        %v2409 = vpow.pop %v2408
        %v2410 = vmul.f32 %v2401, 1.442695
        %v2411 = vpow.pop %v2410
        %v2412 = vmul.f32 %v2402, 1.442695
        %v2413 = vpow.pop %v2412
        %v2414 = vmul.f32 %v2403, 1.442695
        %v2415 = vpow.pop %v2414
        %v2416 = vmul.f32 %v2404, 1.442695
        %v2417 = vpow.pop %v2416
        %v2418 = vmul.f32 %v2405, 1.442695
        %v2419 = vpow.pop %v2418
        %v2420 = vmul.f32 %v2406, 1.442695
        %v2421 = vpow.pop %v2420
        %v2422 = vmul.f32 %v2407, 1.442695
        %v2423 = vpow.pop %v2422
        %v2424 = vsel %vm572, %v2409, 0.0
        %2425 = vadd.xlane.f32.xlu0 %v2424
        %v2426 = vpop.xlane.xlu0 %2425
        %v2427 = vsel %vm572, %v2411, 0.0
        %2428 = vadd.xlane.f32.xlu0 %v2427
        %v2429 = vpop.xlane.xlu0 %2428
        %v2430 = vsel %vm572, %v2413, 0.0
        %2431 = vadd.xlane.f32.xlu0 %v2430
        %v2432 = vpop.xlane.xlu0 %2431
        %v2433 = vsel %vm572, %v2415, 0.0
        %2434 = vadd.xlane.f32.xlu0 %v2433
        %v2435 = vpop.xlane.xlu0 %2434
        %v2436 = vsel %vm572, %v2417, 0.0
        %2437 = vadd.xlane.f32.xlu0 %v2436
        %v2438 = vpop.xlane.xlu0 %2437
        %v2439 = vsel %vm572, %v2419, 0.0
        %2440 = vadd.xlane.f32.xlu0 %v2439
        %v2441 = vpop.xlane.xlu0 %2440
        %v2442 = vsel %vm572, %v2421, 0.0
        %2443 = vadd.xlane.f32.xlu0 %v2442
        %v2444 = vpop.xlane.xlu0 %2443
        %v2445 = vsel %vm572, %v2423, 0.0
        %2446 = vadd.xlane.f32.xlu0 %v2445
        %v2447 = vpop.xlane.xlu0 %2446
        %v2448 = vrcp.pop %v2426
        %v2449 = vrcp.pop %v2429
        %v2450 = vrcp.pop %v2432
        %v2451 = vrcp.pop %v2435
        %v2452 = vrcp.pop %v2438
        %v2453 = vrcp.pop %v2441
        %v2454 = vrcp.pop %v2444
        %v2455 = vrcp.pop %v2447
        %v2456 = vmul.f32 %v2409, %v2448
        %v2457 = vmul.f32 %v2411, %v2449
        %v2458 = vmul.f32 %v2413, %v2450
        %v2459 = vmul.f32 %v2415, %v2451
        %v2460 = vmul.f32 %v2417, %v2452
        %v2461 = vmul.f32 %v2419, %v2453
        %v2462 = vmul.f32 %v2421, %v2454
        %v2463 = vmul.f32 %v2423, %v2455
        %v2464 = vadd.f32 %v2005, %v2456
        %v2465 = vadd.f32 %v2006, %v2457
        %v2466 = vadd.f32 %v2007, %v2458
        %v2467 = vadd.f32 %v2008, %v2459
        %v2468 = vadd.f32 %v2009, %v2460
        %v2469 = vadd.f32 %v2010, %v2461
        %v2470 = vadd.f32 %v2011, %v2462
        %v2471 = vadd.f32 %v2012, %v2463
        %2472 = vrot.lane.b32.xlu0 %v372, 48
        %v2473 = vpop.permute.xlu0 %2472
        %2474 = vrot.lane.b32.xlu0 %v377, 48
        %v2475 = vpop.permute.xlu0 %2474
        %2476 = vrot.lane.b32.xlu0 %v382, 48
        %v2477 = vpop.permute.xlu0 %2476
        %2478 = vrot.lane.b32.xlu0 %v387, 48
        %v2479 = vpop.permute.xlu0 %2478
        %2480 = vrot.lane.b32.xlu0 %v392, 48
        %v2481 = vpop.permute.xlu0 %2480
        %2482 = vrot.lane.b32.xlu0 %v397, 48
        %v2483 = vpop.permute.xlu0 %2482
        %2484 = vrot.lane.b32.xlu0 %v402, 48
        %v2485 = vpop.permute.xlu0 %2484
        %2486 = vrot.lane.b32.xlu0 %v407, 48
        %v2487 = vpop.permute.xlu0 %2486
        %v2497 = vsel %vm572, %v2456, 0
        %v2500 = vsel %vm572, %v2457, 0
        %v2503 = vsel %vm572, %v2458, 0
        %v2506 = vsel %vm572, %v2459, 0
        %v2509 = vsel %vm572, %v2460, 0
        %v2512 = vsel %vm572, %v2461, 0
        %v2515 = vsel %vm572, %v2462, 0
        %v2518 = vsel %vm572, %v2463, 0
        %2520 = vmatprep.subr.mxu0 0.0
        %2521 = vmatpush1.msra.mxu0 0.0
        %2522 = vmatprep.subr.mxu0 0.0
        %2523 = vmatpush1.msra.mxu0 0.0
        %2524 = vmatprep.subr.mxu0 0.0
        %2525 = vmatpush1.msra.mxu0 0.0
        %2526 = vmatprep.subr.mxu0 0.0
        %2527 = vmatpush1.msra.mxu0 0.0
        %2528 = vmatprep.subr.mxu0 0.0
        %2529 = vmatpush1.msra.mxu0 0.0
        %2530 = vmatprep.subr.mxu0 0.0
        %2531 = vmatpush1.msra.mxu0 0.0
        %2532 = vmatprep.subr.mxu0 0.0
        %2533 = vmatpush1.msra.mxu0 0.0
        %2534 = vmatprep.subr.mxu0 0.0
        %2535 = vmatpush1.msra.mxu0 0.0
        %2536 = vmatprep.subr.mxu0 0.0
        %2537 = vmatpush1.msra.mxu0 %v2487
        %2538 = vmatprep.subr.mxu0 0.0
        %2539 = vmatpush1.msra.mxu0 %v2485
        %2540 = vmatprep.subr.mxu0 0.0
        %2541 = vmatpush1.msra.mxu0 %v2483
        %2542 = vmatprep.subr.mxu0 0.0
        %2543 = vmatpush1.msra.mxu0 %v2481
        %2544 = vmatprep.subr.mxu0 0.0
        %2545 = vmatpush1.msra.mxu0 %v2479
        %2546 = vmatprep.subr.mxu0 0.0
        %2547 = vmatpush1.msra.mxu0 %v2477
        %2548 = vmatprep.subr.mxu0 0.0
        %2549 = vmatpush1.msra.mxu0 %v2475
        %2550 = vmatprep.subr.mxu0 0.0
        %2551 = vmatpush1.msra.mxu0 %v2473
        %2552 = vmatprep.subr.mxu0 0.0
        %2553 = vmatpush2.msra.mxu0 0.0
        %2554 = vmatprep.subr.mxu0 0.0
        %2555 = vmatpush2.msra.mxu0 0.0
        %2556 = vmatprep.subr.mxu0 0.0
        %2557 = vmatpush2.msra.mxu0 0.0
        %2558 = vmatprep.subr.mxu0 0.0
        %2559 = vmatpush2.msra.mxu0 0.0
        %2560 = vmatprep.subr.mxu0 0.0
        %2561 = vmatpush2.msra.mxu0 0.0
        %2562 = vmatprep.subr.mxu0 0.0
        %2563 = vmatpush2.msra.mxu0 0.0
        %2564 = vmatprep.subr.mxu0 0.0
        %2565 = vmatpush2.msra.mxu0 0.0
        %2566 = vmatprep.subr.mxu0 0.0
        %2567 = vmatpush2.msra.mxu0 0.0
        %2568 = vmatprep.subr.mxu0 0.0
        %2569 = vmatpush2.msra.mxu0 0.0
        %2570 = vmatprep.subr.mxu0 0.0
        %2571 = vmatpush2.msra.mxu0 0.0
        %2572 = vmatprep.subr.mxu0 0.0
        %2573 = vmatpush2.msra.mxu0 0.0
        %2574 = vmatprep.subr.mxu0 0.0
        %2575 = vmatpush2.msra.mxu0 0.0
        %2576 = vmatprep.subr.mxu0 0.0
        %2577 = vmatpush2.msra.mxu0 0.0
        %2578 = vmatprep.subr.mxu0 0.0
        %2579 = vmatpush2.msra.mxu0 0.0
        %2580 = vmatprep.subr.mxu0 0.0
        %2581 = vmatpush2.msra.mxu0 0.0
        %2582 = vmatprep.subr.mxu0 0.0
        %2583 = vmatpush2.msra.mxu0 0.0
        %2584 = vmatprep.mubr.f32.mxu0 0.0
        %2585 = vmatmul.mubr.f32.gmra.mxu0 %v2497
        %v2586 = vpop.f32.mrf.mxu0
        %v2587 = vadd.f32 0.0, %v2586
        %v2588 = vpop.f32.mrf.mxu0
        %2589 = vmatprep.mubr.f32.mxu0 0.0
        %2590 = vmatmul.mubr.f32.gmra.mxu0 %v2500
        %v2591 = vpop.f32.mrf.mxu0
        %v2592 = vadd.f32 0.0, %v2591
        %v2593 = vpop.f32.mrf.mxu0
        %2594 = vmatprep.mubr.f32.mxu0 0.0
        %2595 = vmatmul.mubr.f32.gmra.mxu0 %v2503
        %v2596 = vpop.f32.mrf.mxu0
        %v2597 = vadd.f32 0.0, %v2596
        %v2598 = vpop.f32.mrf.mxu0
        %2599 = vmatprep.mubr.f32.mxu0 0.0
        %2600 = vmatmul.mubr.f32.gmra.mxu0 %v2506
        %v2601 = vpop.f32.mrf.mxu0
        %v2602 = vadd.f32 0.0, %v2601
        %v2603 = vpop.f32.mrf.mxu0
        %2604 = vmatprep.mubr.f32.mxu0 0.0
        %2605 = vmatmul.mubr.f32.gmra.mxu0 %v2509
        %v2606 = vpop.f32.mrf.mxu0
        %v2607 = vadd.f32 0.0, %v2606
        %v2608 = vpop.f32.mrf.mxu0
        %2609 = vmatprep.mubr.f32.mxu0 0.0
        %2610 = vmatmul.mubr.f32.gmra.mxu0 %v2512
        %v2611 = vpop.f32.mrf.mxu0
        %v2612 = vadd.f32 0.0, %v2611
        %v2613 = vpop.f32.mrf.mxu0
        %2614 = vmatprep.mubr.f32.mxu0 0.0
        %2615 = vmatmul.mubr.f32.gmra.mxu0 %v2515
        %v2616 = vpop.f32.mrf.mxu0
        %v2617 = vadd.f32 0.0, %v2616
        %v2618 = vpop.f32.mrf.mxu0
        %2619 = vmatprep.mubr.f32.mxu0 0.0
        %2620 = vmatmul.mubr.f32.gmra.mxu0 %v2518
        %v2621 = vpop.f32.mrf.mxu0
        %v2622 = vadd.f32 0.0, %v2621
        %v2623 = vpop.f32.mrf.mxu0
        %2624 = vdwg.mxu0
        %2633 = vrot.lane.b32.xlu0 %v2587, 16
        %v2634 = vpop.permute.xlu0 %2633
        %2635 = vrot.lane.b32.xlu0 %v2592, 16
        %v2636 = vpop.permute.xlu0 %2635
        %2637 = vrot.lane.b32.xlu0 %v2597, 16
        %v2638 = vpop.permute.xlu0 %2637
        %2639 = vrot.lane.b32.xlu0 %v2602, 16
        %v2640 = vpop.permute.xlu0 %2639
        %2641 = vrot.lane.b32.xlu0 %v2607, 16
        %v2642 = vpop.permute.xlu0 %2641
        %2643 = vrot.lane.b32.xlu0 %v2612, 16
        %v2644 = vpop.permute.xlu0 %2643
        %2645 = vrot.lane.b32.xlu0 %v2617, 16
        %v2646 = vpop.permute.xlu0 %2645
        %2647 = vrot.lane.b32.xlu0 %v2622, 16
        %v2648 = vpop.permute.xlu0 %2647
        %vm2657 = vcmask 162944
        %2658 = vst.msk [vmem:[#allocation2] sm:$0xff] %vm2657, %v2634
        %2659 = vst.msk [vmem:[#allocation2 + $0x8] sm:$0xff] %vm2657, %v2636
        %2660 = vst.msk [vmem:[#allocation2 + $0x10] sm:$0xff] %vm2657, %v2638
        %2661 = vst.msk [vmem:[#allocation2 + $0x18] sm:$0xff] %vm2657, %v2640
        %2662 = vst.msk [vmem:[#allocation2 + $0x20] sm:$0xff] %vm2657, %v2642
        %2663 = vst.msk [vmem:[#allocation2 + $0x28] sm:$0xff] %vm2657, %v2644
        %2664 = vst.msk [vmem:[#allocation2 + $0x30] sm:$0xff] %vm2657, %v2646
        %2665 = vst.msk [vmem:[#allocation2 + $0x38] sm:$0xff] %vm2657, %v2648
        %2666 = vrot.lane.b32.xlu0 %v372, 108
        %v2667 = vpop.permute.xlu0 %2666
        %2668 = vrot.lane.b32.xlu0 %v377, 108
        %v2669 = vpop.permute.xlu0 %2668
        %2670 = vrot.lane.b32.xlu0 %v382, 108
        %v2671 = vpop.permute.xlu0 %2670
        %2672 = vrot.lane.b32.xlu0 %v387, 108
        %v2673 = vpop.permute.xlu0 %2672
        %2674 = vrot.lane.b32.xlu0 %v392, 108
        %v2675 = vpop.permute.xlu0 %2674
        %2676 = vrot.lane.b32.xlu0 %v397, 108
        %v2677 = vpop.permute.xlu0 %2676
        %2678 = vrot.lane.b32.xlu0 %v402, 108
        %v2679 = vpop.permute.xlu0 %2678
        %2680 = vrot.lane.b32.xlu0 %v407, 108
        %v2681 = vpop.permute.xlu0 %2680
        %2682 = vrot.lane.b32.xlu0 %v372, 76
        %v2683 = vpop.permute.xlu0 %2682
        %2684 = vrot.lane.b32.xlu0 %v377, 76
        %v2685 = vpop.permute.xlu0 %2684
        %2686 = vrot.lane.b32.xlu0 %v382, 76
        %v2687 = vpop.permute.xlu0 %2686
        %2688 = vrot.lane.b32.xlu0 %v387, 76
        %v2689 = vpop.permute.xlu0 %2688
        %2690 = vrot.lane.b32.xlu0 %v392, 76
        %v2691 = vpop.permute.xlu0 %2690
        %2692 = vrot.lane.b32.xlu0 %v397, 76
        %v2693 = vpop.permute.xlu0 %2692
        %2694 = vrot.lane.b32.xlu0 %v402, 76
        %v2695 = vpop.permute.xlu0 %2694
        %2696 = vrot.lane.b32.xlu0 %v407, 76
        %v2697 = vpop.permute.xlu0 %2696
        %v2698 = vsel %vm434, %v2667, 0
        %v2700 = vsel %vm434, %v2669, 0
        %v2702 = vsel %vm434, %v2671, 0
        %v2704 = vsel %vm434, %v2673, 0
        %v2706 = vsel %vm434, %v2675, 0
        %v2708 = vsel %vm434, %v2677, 0
        %v2710 = vsel %vm434, %v2679, 0
        %v2712 = vsel %vm434, %v2681, 0
        %v2714 = vsel %vm434, %v2683, 0
        %v2716 = vsel %vm434, %v2685, 0
        %v2718 = vsel %vm434, %v2687, 0
        %v2720 = vsel %vm434, %v2689, 0
        %v2722 = vsel %vm434, %v2691, 0
        %v2724 = vsel %vm434, %v2693, 0
        %v2726 = vsel %vm434, %v2695, 0
        %v2728 = vsel %vm434, %v2697, 0
        %2730 = vmatprep.subr.mxu0 0.0
        %2731 = vmatpush1.xpose.msra.mxu0 0.0
        %2732 = vmatprep.subr.mxu0 0.0
        %2733 = vmatpush1.xpose.msra.mxu0 0.0
        %2734 = vmatprep.subr.mxu0 0.0
        %2735 = vmatpush1.xpose.msra.mxu0 0.0
        %2736 = vmatprep.subr.mxu0 0.0
        %2737 = vmatpush1.xpose.msra.mxu0 0.0
        %2738 = vmatprep.subr.mxu0 0.0
        %2739 = vmatpush1.xpose.msra.mxu0 0.0
        %2740 = vmatprep.subr.mxu0 0.0
        %2741 = vmatpush1.xpose.msra.mxu0 0.0
        %2742 = vmatprep.subr.mxu0 0.0
        %2743 = vmatpush1.xpose.msra.mxu0 0.0
        %2744 = vmatprep.subr.mxu0 0.0
        %2745 = vmatpush1.xpose.msra.mxu0 0.0
        %2746 = vmatprep.subr.mxu0 0.0
        %2747 = vmatpush1.xpose.msra.mxu0 %v2728
        %2748 = vmatprep.subr.mxu0 0.0
        %2749 = vmatpush1.xpose.msra.mxu0 %v2726
        %2750 = vmatprep.subr.mxu0 0.0
        %2751 = vmatpush1.xpose.msra.mxu0 %v2724
        %2752 = vmatprep.subr.mxu0 0.0
        %2753 = vmatpush1.xpose.msra.mxu0 %v2722
        %2754 = vmatprep.subr.mxu0 0.0
        %2755 = vmatpush1.xpose.msra.mxu0 %v2720
        %2756 = vmatprep.subr.mxu0 0.0
        %2757 = vmatpush1.xpose.msra.mxu0 %v2718
        %2758 = vmatprep.subr.mxu0 0.0
        %2759 = vmatpush1.xpose.msra.mxu0 %v2716
        %2760 = vmatprep.subr.mxu0 0.0
        %2761 = vmatpush1.xpose.msra.mxu0 %v2714
        %2762 = vmatprep.subr.mxu0 0.0
        %2763 = vmatpush2.xpose.msra.mxu0 0.0
        %2764 = vmatprep.subr.mxu0 0.0
        %2765 = vmatpush2.xpose.msra.mxu0 0.0
        %2766 = vmatprep.subr.mxu0 0.0
        %2767 = vmatpush2.xpose.msra.mxu0 0.0
        %2768 = vmatprep.subr.mxu0 0.0
        %2769 = vmatpush2.xpose.msra.mxu0 0.0
        %2770 = vmatprep.subr.mxu0 0.0
        %2771 = vmatpush2.xpose.msra.mxu0 0.0
        %2772 = vmatprep.subr.mxu0 0.0
        %2773 = vmatpush2.xpose.msra.mxu0 0.0
        %2774 = vmatprep.subr.mxu0 0.0
        %2775 = vmatpush2.xpose.msra.mxu0 0.0
        %2776 = vmatprep.subr.mxu0 0.0
        %2777 = vmatpush2.xpose.msra.mxu0 0.0
        %2778 = vmatprep.subr.mxu0 0.0
        %2779 = vmatpush2.xpose.msra.mxu0 0.0
        %2780 = vmatprep.subr.mxu0 0.0
        %2781 = vmatpush2.xpose.msra.mxu0 0.0
        %2782 = vmatprep.subr.mxu0 0.0
        %2783 = vmatpush2.xpose.msra.mxu0 0.0
        %2784 = vmatprep.subr.mxu0 0.0
        %2785 = vmatpush2.xpose.msra.mxu0 0.0
        %2786 = vmatprep.subr.mxu0 0.0
        %2787 = vmatpush2.xpose.msra.mxu0 0.0
        %2788 = vmatprep.subr.mxu0 0.0
        %2789 = vmatpush2.xpose.msra.mxu0 0.0
        %2790 = vmatprep.subr.mxu0 0.0
        %2791 = vmatpush2.xpose.msra.mxu0 0.0
        %2792 = vmatprep.subr.mxu0 0.0
        %2793 = vmatpush2.xpose.msra.mxu0 0.0
        %2794 = vmatprep.mubr.f32.mxu0 0.0
        %2795 = vmatmul.mubr.f32.gmra.mxu0 %v2698
        %v2796 = vpop.f32.mrf.mxu0
        %v2797 = vadd.f32 0.0, %v2796
        %v2798 = vpop.f32.mrf.mxu0
        %2799 = vmatprep.mubr.f32.mxu0 0.0
        %2800 = vmatmul.mubr.f32.gmra.mxu0 %v2700
        %v2801 = vpop.f32.mrf.mxu0
        %v2802 = vadd.f32 0.0, %v2801
        %v2803 = vpop.f32.mrf.mxu0
        %2804 = vmatprep.mubr.f32.mxu0 0.0
        %2805 = vmatmul.mubr.f32.gmra.mxu0 %v2702
        %v2806 = vpop.f32.mrf.mxu0
        %v2807 = vadd.f32 0.0, %v2806
        %v2808 = vpop.f32.mrf.mxu0
        %2809 = vmatprep.mubr.f32.mxu0 0.0
        %2810 = vmatmul.mubr.f32.gmra.mxu0 %v2704
        %v2811 = vpop.f32.mrf.mxu0
        %v2812 = vadd.f32 0.0, %v2811
        %v2813 = vpop.f32.mrf.mxu0
        %2814 = vmatprep.mubr.f32.mxu0 0.0
        %2815 = vmatmul.mubr.f32.gmra.mxu0 %v2706
        %v2816 = vpop.f32.mrf.mxu0
        %v2817 = vadd.f32 0.0, %v2816
        %v2818 = vpop.f32.mrf.mxu0
        %2819 = vmatprep.mubr.f32.mxu0 0.0
        %2820 = vmatmul.mubr.f32.gmra.mxu0 %v2708
        %v2821 = vpop.f32.mrf.mxu0
        %v2822 = vadd.f32 0.0, %v2821
        %v2823 = vpop.f32.mrf.mxu0
        %2824 = vmatprep.mubr.f32.mxu0 0.0
        %2825 = vmatmul.mubr.f32.gmra.mxu0 %v2710
        %v2826 = vpop.f32.mrf.mxu0
        %v2827 = vadd.f32 0.0, %v2826
        %v2828 = vpop.f32.mrf.mxu0
        %2829 = vmatprep.mubr.f32.mxu0 0.0
        %2830 = vmatmul.mubr.f32.gmra.mxu0 %v2712
        %v2831 = vpop.f32.mrf.mxu0
        %v2832 = vadd.f32 0.0, %v2831
        %v2833 = vpop.f32.mrf.mxu0
        %2834 = vdwg.mxu0
        %v2835 = vsel %vm572, %v2797, -inf
        %2836 = vmax.xlane.f32.xlu0 %v2835
        %v2837 = vpop.xlane.xlu0 %2836
        %v2838 = vsel %vm572, %v2802, -inf
        %2839 = vmax.xlane.f32.xlu0 %v2838
        %v2840 = vpop.xlane.xlu0 %2839
        %v2841 = vsel %vm572, %v2807, -inf
        %2842 = vmax.xlane.f32.xlu0 %v2841
        %v2843 = vpop.xlane.xlu0 %2842
        %v2844 = vsel %vm572, %v2812, -inf
        %2845 = vmax.xlane.f32.xlu0 %v2844
        %v2846 = vpop.xlane.xlu0 %2845
        %v2847 = vsel %vm572, %v2817, -inf
        %2848 = vmax.xlane.f32.xlu0 %v2847
        %v2849 = vpop.xlane.xlu0 %2848
        %v2850 = vsel %vm572, %v2822, -inf
        %2851 = vmax.xlane.f32.xlu0 %v2850
        %v2852 = vpop.xlane.xlu0 %2851
        %v2853 = vsel %vm572, %v2827, -inf
        %2854 = vmax.xlane.f32.xlu0 %v2853
        %v2855 = vpop.xlane.xlu0 %2854
        %v2856 = vsel %vm572, %v2832, -inf
        %2857 = vmax.xlane.f32.xlu0 %v2856
        %v2858 = vpop.xlane.xlu0 %2857
        %v2859 = vsub.f32 %v2797, %v2837
        %v2860 = vsub.f32 %v2802, %v2840
        %v2861 = vsub.f32 %v2807, %v2843
        %v2862 = vsub.f32 %v2812, %v2846
        %v2863 = vsub.f32 %v2817, %v2849
        %v2864 = vsub.f32 %v2822, %v2852
        %v2865 = vsub.f32 %v2827, %v2855
        %v2866 = vsub.f32 %v2832, %v2858
        %v2867 = vmul.f32 %v2859, 1.442695
        %v2868 = vpow.pop %v2867
        %v2869 = vmul.f32 %v2860, 1.442695
        %v2870 = vpow.pop %v2869
        %v2871 = vmul.f32 %v2861, 1.442695
        %v2872 = vpow.pop %v2871
        %v2873 = vmul.f32 %v2862, 1.442695
        %v2874 = vpow.pop %v2873
        %v2875 = vmul.f32 %v2863, 1.442695
        %v2876 = vpow.pop %v2875
        %v2877 = vmul.f32 %v2864, 1.442695
        %v2878 = vpow.pop %v2877
        %v2879 = vmul.f32 %v2865, 1.442695
        %v2880 = vpow.pop %v2879
        %v2881 = vmul.f32 %v2866, 1.442695
        %v2882 = vpow.pop %v2881
        %v2883 = vsel %vm572, %v2868, 0.0
        %2884 = vadd.xlane.f32.xlu0 %v2883
        %v2885 = vpop.xlane.xlu0 %2884
        %v2886 = vsel %vm572, %v2870, 0.0
        %2887 = vadd.xlane.f32.xlu0 %v2886
        %v2888 = vpop.xlane.xlu0 %2887
        %v2889 = vsel %vm572, %v2872, 0.0
        %2890 = vadd.xlane.f32.xlu0 %v2889
        %v2891 = vpop.xlane.xlu0 %2890
        %v2892 = vsel %vm572, %v2874, 0.0
        %2893 = vadd.xlane.f32.xlu0 %v2892
        %v2894 = vpop.xlane.xlu0 %2893
        %v2895 = vsel %vm572, %v2876, 0.0
        %2896 = vadd.xlane.f32.xlu0 %v2895
        %v2897 = vpop.xlane.xlu0 %2896
        %v2898 = vsel %vm572, %v2878, 0.0
        %2899 = vadd.xlane.f32.xlu0 %v2898
        %v2900 = vpop.xlane.xlu0 %2899
        %v2901 = vsel %vm572, %v2880, 0.0
        %2902 = vadd.xlane.f32.xlu0 %v2901
        %v2903 = vpop.xlane.xlu0 %2902
        %v2904 = vsel %vm572, %v2882, 0.0
        %2905 = vadd.xlane.f32.xlu0 %v2904
        %v2906 = vpop.xlane.xlu0 %2905
        %v2907 = vrcp.pop %v2885
        %v2908 = vrcp.pop %v2888
        %v2909 = vrcp.pop %v2891
        %v2910 = vrcp.pop %v2894
        %v2911 = vrcp.pop %v2897
        %v2912 = vrcp.pop %v2900
        %v2913 = vrcp.pop %v2903
        %v2914 = vrcp.pop %v2906
        %v2915 = vmul.f32 %v2868, %v2907
        %v2916 = vmul.f32 %v2870, %v2908
        %v2917 = vmul.f32 %v2872, %v2909
        %v2918 = vmul.f32 %v2874, %v2910
        %v2919 = vmul.f32 %v2876, %v2911
        %v2920 = vmul.f32 %v2878, %v2912
        %v2921 = vmul.f32 %v2880, %v2913
        %v2922 = vmul.f32 %v2882, %v2914
        %v2923 = vadd.f32 %v2464, %v2915
        %v2924 = vadd.f32 %v2465, %v2916
        %v2925 = vadd.f32 %v2466, %v2917
        %v2926 = vadd.f32 %v2467, %v2918
        %v2927 = vadd.f32 %v2468, %v2919
        %v2928 = vadd.f32 %v2469, %v2920
        %v2929 = vadd.f32 %v2470, %v2921
        %v2930 = vadd.f32 %v2471, %v2922
        %2931 = vrot.lane.b32.xlu0 %v372, 44
        %v2932 = vpop.permute.xlu0 %2931
        %2933 = vrot.lane.b32.xlu0 %v377, 44
        %v2934 = vpop.permute.xlu0 %2933
        %2935 = vrot.lane.b32.xlu0 %v382, 44
        %v2936 = vpop.permute.xlu0 %2935
        %2937 = vrot.lane.b32.xlu0 %v387, 44
        %v2938 = vpop.permute.xlu0 %2937
        %2939 = vrot.lane.b32.xlu0 %v392, 44
        %v2940 = vpop.permute.xlu0 %2939
        %2941 = vrot.lane.b32.xlu0 %v397, 44
        %v2942 = vpop.permute.xlu0 %2941
        %2943 = vrot.lane.b32.xlu0 %v402, 44
        %v2944 = vpop.permute.xlu0 %2943
        %2945 = vrot.lane.b32.xlu0 %v407, 44
        %v2946 = vpop.permute.xlu0 %2945
        %v2956 = vsel %vm572, %v2915, 0
        %v2959 = vsel %vm572, %v2916, 0
        %v2962 = vsel %vm572, %v2917, 0
        %v2965 = vsel %vm572, %v2918, 0
        %v2968 = vsel %vm572, %v2919, 0
        %v2971 = vsel %vm572, %v2920, 0
        %v2974 = vsel %vm572, %v2921, 0
        %v2977 = vsel %vm572, %v2922, 0
        %2979 = vmatprep.subr.mxu0 0.0
        %2980 = vmatpush1.msra.mxu0 0.0
        %2981 = vmatprep.subr.mxu0 0.0
        %2982 = vmatpush1.msra.mxu0 0.0
        %2983 = vmatprep.subr.mxu0 0.0
        %2984 = vmatpush1.msra.mxu0 0.0
        %2985 = vmatprep.subr.mxu0 0.0
        %2986 = vmatpush1.msra.mxu0 0.0
        %2987 = vmatprep.subr.mxu0 0.0
        %2988 = vmatpush1.msra.mxu0 0.0
        %2989 = vmatprep.subr.mxu0 0.0
        %2990 = vmatpush1.msra.mxu0 0.0
        %2991 = vmatprep.subr.mxu0 0.0
        %2992 = vmatpush1.msra.mxu0 0.0
        %2993 = vmatprep.subr.mxu0 0.0
        %2994 = vmatpush1.msra.mxu0 0.0
        %2995 = vmatprep.subr.mxu0 0.0
        %2996 = vmatpush1.msra.mxu0 %v2946
        %2997 = vmatprep.subr.mxu0 0.0
        %2998 = vmatpush1.msra.mxu0 %v2944
        %2999 = vmatprep.subr.mxu0 0.0
        %3000 = vmatpush1.msra.mxu0 %v2942
        %3001 = vmatprep.subr.mxu0 0.0
        %3002 = vmatpush1.msra.mxu0 %v2940
        %3003 = vmatprep.subr.mxu0 0.0
        %3004 = vmatpush1.msra.mxu0 %v2938
        %3005 = vmatprep.subr.mxu0 0.0
        %3006 = vmatpush1.msra.mxu0 %v2936
        %3007 = vmatprep.subr.mxu0 0.0
        %3008 = vmatpush1.msra.mxu0 %v2934
        %3009 = vmatprep.subr.mxu0 0.0
        %3010 = vmatpush1.msra.mxu0 %v2932
        %3011 = vmatprep.subr.mxu0 0.0
        %3012 = vmatpush2.msra.mxu0 0.0
        %3013 = vmatprep.subr.mxu0 0.0
        %3014 = vmatpush2.msra.mxu0 0.0
        %3015 = vmatprep.subr.mxu0 0.0
        %3016 = vmatpush2.msra.mxu0 0.0
        %3017 = vmatprep.subr.mxu0 0.0
        %3018 = vmatpush2.msra.mxu0 0.0
        %3019 = vmatprep.subr.mxu0 0.0
        %3020 = vmatpush2.msra.mxu0 0.0
        %3021 = vmatprep.subr.mxu0 0.0
        %3022 = vmatpush2.msra.mxu0 0.0
        %3023 = vmatprep.subr.mxu0 0.0
        %3024 = vmatpush2.msra.mxu0 0.0
        %3025 = vmatprep.subr.mxu0 0.0
        %3026 = vmatpush2.msra.mxu0 0.0
        %3027 = vmatprep.subr.mxu0 0.0
        %3028 = vmatpush2.msra.mxu0 0.0
        %3029 = vmatprep.subr.mxu0 0.0
        %3030 = vmatpush2.msra.mxu0 0.0
        %3031 = vmatprep.subr.mxu0 0.0
        %3032 = vmatpush2.msra.mxu0 0.0
        %3033 = vmatprep.subr.mxu0 0.0
        %3034 = vmatpush2.msra.mxu0 0.0
        %3035 = vmatprep.subr.mxu0 0.0
        %3036 = vmatpush2.msra.mxu0 0.0
        %3037 = vmatprep.subr.mxu0 0.0
        %3038 = vmatpush2.msra.mxu0 0.0
        %3039 = vmatprep.subr.mxu0 0.0
        %3040 = vmatpush2.msra.mxu0 0.0
        %3041 = vmatprep.subr.mxu0 0.0
        %3042 = vmatpush2.msra.mxu0 0.0
        %3043 = vmatprep.mubr.f32.mxu0 0.0
        %3044 = vmatmul.mubr.f32.gmra.mxu0 %v2956
        %v3045 = vpop.f32.mrf.mxu0
        %v3046 = vadd.f32 0.0, %v3045
        %v3047 = vpop.f32.mrf.mxu0
        %3048 = vmatprep.mubr.f32.mxu0 0.0
        %3049 = vmatmul.mubr.f32.gmra.mxu0 %v2959
        %v3050 = vpop.f32.mrf.mxu0
        %v3051 = vadd.f32 0.0, %v3050
        %v3052 = vpop.f32.mrf.mxu0
        %3053 = vmatprep.mubr.f32.mxu0 0.0
        %3054 = vmatmul.mubr.f32.gmra.mxu0 %v2962
        %v3055 = vpop.f32.mrf.mxu0
        %v3056 = vadd.f32 0.0, %v3055
        %v3057 = vpop.f32.mrf.mxu0
        %3058 = vmatprep.mubr.f32.mxu0 0.0
        %3059 = vmatmul.mubr.f32.gmra.mxu0 %v2965
        %v3060 = vpop.f32.mrf.mxu0
        %v3061 = vadd.f32 0.0, %v3060
        %v3062 = vpop.f32.mrf.mxu0
        %3063 = vmatprep.mubr.f32.mxu0 0.0
        %3064 = vmatmul.mubr.f32.gmra.mxu0 %v2968
        %v3065 = vpop.f32.mrf.mxu0
        %v3066 = vadd.f32 0.0, %v3065
        %v3067 = vpop.f32.mrf.mxu0
        %3068 = vmatprep.mubr.f32.mxu0 0.0
        %3069 = vmatmul.mubr.f32.gmra.mxu0 %v2971
        %v3070 = vpop.f32.mrf.mxu0
        %v3071 = vadd.f32 0.0, %v3070
        %v3072 = vpop.f32.mrf.mxu0
        %3073 = vmatprep.mubr.f32.mxu0 0.0
        %3074 = vmatmul.mubr.f32.gmra.mxu0 %v2974
        %v3075 = vpop.f32.mrf.mxu0
        %v3076 = vadd.f32 0.0, %v3075
        %v3077 = vpop.f32.mrf.mxu0
        %3078 = vmatprep.mubr.f32.mxu0 0.0
        %3079 = vmatmul.mubr.f32.gmra.mxu0 %v2977
        %v3080 = vpop.f32.mrf.mxu0
        %v3081 = vadd.f32 0.0, %v3080
        %v3082 = vpop.f32.mrf.mxu0
        %3083 = vdwg.mxu0
        %3092 = vrot.lane.b32.xlu0 %v3046, 20
        %v3093 = vpop.permute.xlu0 %3092
        %3094 = vrot.lane.b32.xlu0 %v3051, 20
        %v3095 = vpop.permute.xlu0 %3094
        %3096 = vrot.lane.b32.xlu0 %v3056, 20
        %v3097 = vpop.permute.xlu0 %3096
        %3098 = vrot.lane.b32.xlu0 %v3061, 20
        %v3099 = vpop.permute.xlu0 %3098
        %3100 = vrot.lane.b32.xlu0 %v3066, 20
        %v3101 = vpop.permute.xlu0 %3100
        %3102 = vrot.lane.b32.xlu0 %v3071, 20
        %v3103 = vpop.permute.xlu0 %3102
        %3104 = vrot.lane.b32.xlu0 %v3076, 20
        %v3105 = vpop.permute.xlu0 %3104
        %3106 = vrot.lane.b32.xlu0 %v3081, 20
        %v3107 = vpop.permute.xlu0 %3106
        %vm3116 = vcmask 195744
        %3117 = vst.msk [vmem:[#allocation2] sm:$0xff] %vm3116, %v3093
        %3118 = vst.msk [vmem:[#allocation2 + $0x8] sm:$0xff] %vm3116, %v3095
        %3119 = vst.msk [vmem:[#allocation2 + $0x10] sm:$0xff] %vm3116, %v3097
        %3120 = vst.msk [vmem:[#allocation2 + $0x18] sm:$0xff] %vm3116, %v3099
        %3121 = vst.msk [vmem:[#allocation2 + $0x20] sm:$0xff] %vm3116, %v3101
        %3122 = vst.msk [vmem:[#allocation2 + $0x28] sm:$0xff] %vm3116, %v3103
        %3123 = vst.msk [vmem:[#allocation2 + $0x30] sm:$0xff] %vm3116, %v3105
        %3124 = vst.msk [vmem:[#allocation2 + $0x38] sm:$0xff] %vm3116, %v3107
        %3125 = vrot.lane.b32.xlu0 %v372, 104
        %v3126 = vpop.permute.xlu0 %3125
        %3127 = vrot.lane.b32.xlu0 %v377, 104
        %v3128 = vpop.permute.xlu0 %3127
        %3129 = vrot.lane.b32.xlu0 %v382, 104
        %v3130 = vpop.permute.xlu0 %3129
        %3131 = vrot.lane.b32.xlu0 %v387, 104
        %v3132 = vpop.permute.xlu0 %3131
        %3133 = vrot.lane.b32.xlu0 %v392, 104
        %v3134 = vpop.permute.xlu0 %3133
        %3135 = vrot.lane.b32.xlu0 %v397, 104
        %v3136 = vpop.permute.xlu0 %3135
        %3137 = vrot.lane.b32.xlu0 %v402, 104
        %v3138 = vpop.permute.xlu0 %3137
        %3139 = vrot.lane.b32.xlu0 %v407, 104
        %v3140 = vpop.permute.xlu0 %3139
        %3141 = vrot.lane.b32.xlu0 %v372, 72
        %v3142 = vpop.permute.xlu0 %3141
        %3143 = vrot.lane.b32.xlu0 %v377, 72
        %v3144 = vpop.permute.xlu0 %3143
        %3145 = vrot.lane.b32.xlu0 %v382, 72
        %v3146 = vpop.permute.xlu0 %3145
        %3147 = vrot.lane.b32.xlu0 %v387, 72
        %v3148 = vpop.permute.xlu0 %3147
        %3149 = vrot.lane.b32.xlu0 %v392, 72
        %v3150 = vpop.permute.xlu0 %3149
        %3151 = vrot.lane.b32.xlu0 %v397, 72
        %v3152 = vpop.permute.xlu0 %3151
        %3153 = vrot.lane.b32.xlu0 %v402, 72
        %v3154 = vpop.permute.xlu0 %3153
        %3155 = vrot.lane.b32.xlu0 %v407, 72
        %v3156 = vpop.permute.xlu0 %3155
        %v3157 = vsel %vm434, %v3126, 0
        %v3159 = vsel %vm434, %v3128, 0
        %v3161 = vsel %vm434, %v3130, 0
        %v3163 = vsel %vm434, %v3132, 0
        %v3165 = vsel %vm434, %v3134, 0
        %v3167 = vsel %vm434, %v3136, 0
        %v3169 = vsel %vm434, %v3138, 0
        %v3171 = vsel %vm434, %v3140, 0
        %v3173 = vsel %vm434, %v3142, 0
        %v3175 = vsel %vm434, %v3144, 0
        %v3177 = vsel %vm434, %v3146, 0
        %v3179 = vsel %vm434, %v3148, 0
        %v3181 = vsel %vm434, %v3150, 0
        %v3183 = vsel %vm434, %v3152, 0
        %v3185 = vsel %vm434, %v3154, 0
        %v3187 = vsel %vm434, %v3156, 0
        %3189 = vmatprep.subr.mxu0 0.0
        %3190 = vmatpush1.xpose.msra.mxu0 0.0
        %3191 = vmatprep.subr.mxu0 0.0
        %3192 = vmatpush1.xpose.msra.mxu0 0.0
        %3193 = vmatprep.subr.mxu0 0.0
        %3194 = vmatpush1.xpose.msra.mxu0 0.0
        %3195 = vmatprep.subr.mxu0 0.0
        %3196 = vmatpush1.xpose.msra.mxu0 0.0
        %3197 = vmatprep.subr.mxu0 0.0
        %3198 = vmatpush1.xpose.msra.mxu0 0.0
        %3199 = vmatprep.subr.mxu0 0.0
        %3200 = vmatpush1.xpose.msra.mxu0 0.0
        %3201 = vmatprep.subr.mxu0 0.0
        %3202 = vmatpush1.xpose.msra.mxu0 0.0
        %3203 = vmatprep.subr.mxu0 0.0
        %3204 = vmatpush1.xpose.msra.mxu0 0.0
        %3205 = vmatprep.subr.mxu0 0.0
        %3206 = vmatpush1.xpose.msra.mxu0 %v3187
        %3207 = vmatprep.subr.mxu0 0.0
        %3208 = vmatpush1.xpose.msra.mxu0 %v3185
        %3209 = vmatprep.subr.mxu0 0.0
        %3210 = vmatpush1.xpose.msra.mxu0 %v3183
        %3211 = vmatprep.subr.mxu0 0.0
        %3212 = vmatpush1.xpose.msra.mxu0 %v3181
        %3213 = vmatprep.subr.mxu0 0.0
        %3214 = vmatpush1.xpose.msra.mxu0 %v3179
        %3215 = vmatprep.subr.mxu0 0.0
        %3216 = vmatpush1.xpose.msra.mxu0 %v3177
        %3217 = vmatprep.subr.mxu0 0.0
        %3218 = vmatpush1.xpose.msra.mxu0 %v3175
        %3219 = vmatprep.subr.mxu0 0.0
        %3220 = vmatpush1.xpose.msra.mxu0 %v3173
        %3221 = vmatprep.subr.mxu0 0.0
        %3222 = vmatpush2.xpose.msra.mxu0 0.0
        %3223 = vmatprep.subr.mxu0 0.0
        %3224 = vmatpush2.xpose.msra.mxu0 0.0
        %3225 = vmatprep.subr.mxu0 0.0
        %3226 = vmatpush2.xpose.msra.mxu0 0.0
        %3227 = vmatprep.subr.mxu0 0.0
        %3228 = vmatpush2.xpose.msra.mxu0 0.0
        %3229 = vmatprep.subr.mxu0 0.0
        %3230 = vmatpush2.xpose.msra.mxu0 0.0
        %3231 = vmatprep.subr.mxu0 0.0
        %3232 = vmatpush2.xpose.msra.mxu0 0.0
        %3233 = vmatprep.subr.mxu0 0.0
        %3234 = vmatpush2.xpose.msra.mxu0 0.0
        %3235 = vmatprep.subr.mxu0 0.0
        %3236 = vmatpush2.xpose.msra.mxu0 0.0
        %3237 = vmatprep.subr.mxu0 0.0
        %3238 = vmatpush2.xpose.msra.mxu0 0.0
        %3239 = vmatprep.subr.mxu0 0.0
        %3240 = vmatpush2.xpose.msra.mxu0 0.0
        %3241 = vmatprep.subr.mxu0 0.0
        %3242 = vmatpush2.xpose.msra.mxu0 0.0
        %3243 = vmatprep.subr.mxu0 0.0
        %3244 = vmatpush2.xpose.msra.mxu0 0.0
        %3245 = vmatprep.subr.mxu0 0.0
        %3246 = vmatpush2.xpose.msra.mxu0 0.0
        %3247 = vmatprep.subr.mxu0 0.0
        %3248 = vmatpush2.xpose.msra.mxu0 0.0
        %3249 = vmatprep.subr.mxu0 0.0
        %3250 = vmatpush2.xpose.msra.mxu0 0.0
        %3251 = vmatprep.subr.mxu0 0.0
        %3252 = vmatpush2.xpose.msra.mxu0 0.0
        %3253 = vmatprep.mubr.f32.mxu0 0.0
        %3254 = vmatmul.mubr.f32.gmra.mxu0 %v3157
        %v3255 = vpop.f32.mrf.mxu0
        %v3256 = vadd.f32 0.0, %v3255
        %v3257 = vpop.f32.mrf.mxu0
        %3258 = vmatprep.mubr.f32.mxu0 0.0
        %3259 = vmatmul.mubr.f32.gmra.mxu0 %v3159
        %v3260 = vpop.f32.mrf.mxu0
        %v3261 = vadd.f32 0.0, %v3260
        %v3262 = vpop.f32.mrf.mxu0
        %3263 = vmatprep.mubr.f32.mxu0 0.0
        %3264 = vmatmul.mubr.f32.gmra.mxu0 %v3161
        %v3265 = vpop.f32.mrf.mxu0
        %v3266 = vadd.f32 0.0, %v3265
        %v3267 = vpop.f32.mrf.mxu0
        %3268 = vmatprep.mubr.f32.mxu0 0.0
        %3269 = vmatmul.mubr.f32.gmra.mxu0 %v3163
        %v3270 = vpop.f32.mrf.mxu0
        %v3271 = vadd.f32 0.0, %v3270
        %v3272 = vpop.f32.mrf.mxu0
        %3273 = vmatprep.mubr.f32.mxu0 0.0
        %3274 = vmatmul.mubr.f32.gmra.mxu0 %v3165
        %v3275 = vpop.f32.mrf.mxu0
        %v3276 = vadd.f32 0.0, %v3275
        %v3277 = vpop.f32.mrf.mxu0
        %3278 = vmatprep.mubr.f32.mxu0 0.0
        %3279 = vmatmul.mubr.f32.gmra.mxu0 %v3167
        %v3280 = vpop.f32.mrf.mxu0
        %v3281 = vadd.f32 0.0, %v3280
        %v3282 = vpop.f32.mrf.mxu0
        %3283 = vmatprep.mubr.f32.mxu0 0.0
        %3284 = vmatmul.mubr.f32.gmra.mxu0 %v3169
        %v3285 = vpop.f32.mrf.mxu0
        %v3286 = vadd.f32 0.0, %v3285
        %v3287 = vpop.f32.mrf.mxu0
        %3288 = vmatprep.mubr.f32.mxu0 0.0
        %3289 = vmatmul.mubr.f32.gmra.mxu0 %v3171
        %v3290 = vpop.f32.mrf.mxu0
        %v3291 = vadd.f32 0.0, %v3290
        %v3292 = vpop.f32.mrf.mxu0
        %3293 = vdwg.mxu0
        %v3294 = vsel %vm572, %v3256, -inf
        %3295 = vmax.xlane.f32.xlu0 %v3294
        %v3296 = vpop.xlane.xlu0 %3295
        %v3297 = vsel %vm572, %v3261, -inf
        %3298 = vmax.xlane.f32.xlu0 %v3297
        %v3299 = vpop.xlane.xlu0 %3298
        %v3300 = vsel %vm572, %v3266, -inf
        %3301 = vmax.xlane.f32.xlu0 %v3300
        %v3302 = vpop.xlane.xlu0 %3301
        %v3303 = vsel %vm572, %v3271, -inf
        %3304 = vmax.xlane.f32.xlu0 %v3303
        %v3305 = vpop.xlane.xlu0 %3304
        %v3306 = vsel %vm572, %v3276, -inf
        %3307 = vmax.xlane.f32.xlu0 %v3306
        %v3308 = vpop.xlane.xlu0 %3307
        %v3309 = vsel %vm572, %v3281, -inf
        %3310 = vmax.xlane.f32.xlu0 %v3309
        %v3311 = vpop.xlane.xlu0 %3310
        %v3312 = vsel %vm572, %v3286, -inf
        %3313 = vmax.xlane.f32.xlu0 %v3312
        %v3314 = vpop.xlane.xlu0 %3313
        %v3315 = vsel %vm572, %v3291, -inf
        %3316 = vmax.xlane.f32.xlu0 %v3315
        %v3317 = vpop.xlane.xlu0 %3316
        %v3318 = vsub.f32 %v3256, %v3296
        %v3319 = vsub.f32 %v3261, %v3299
        %v3320 = vsub.f32 %v3266, %v3302
        %v3321 = vsub.f32 %v3271, %v3305
        %v3322 = vsub.f32 %v3276, %v3308
        %v3323 = vsub.f32 %v3281, %v3311
        %v3324 = vsub.f32 %v3286, %v3314
        %v3325 = vsub.f32 %v3291, %v3317
        %v3326 = vmul.f32 %v3318, 1.442695
        %v3327 = vpow.pop %v3326
        %v3328 = vmul.f32 %v3319, 1.442695
        %v3329 = vpow.pop %v3328
        %v3330 = vmul.f32 %v3320, 1.442695
        %v3331 = vpow.pop %v3330
        %v3332 = vmul.f32 %v3321, 1.442695
        %v3333 = vpow.pop %v3332
        %v3334 = vmul.f32 %v3322, 1.442695
        %v3335 = vpow.pop %v3334
        %v3336 = vmul.f32 %v3323, 1.442695
        %v3337 = vpow.pop %v3336
        %v3338 = vmul.f32 %v3324, 1.442695
        %v3339 = vpow.pop %v3338
        %v3340 = vmul.f32 %v3325, 1.442695
        %v3341 = vpow.pop %v3340
        %v3342 = vsel %vm572, %v3327, 0.0
        %3343 = vadd.xlane.f32.xlu0 %v3342
        %v3344 = vpop.xlane.xlu0 %3343
        %v3345 = vsel %vm572, %v3329, 0.0
        %3346 = vadd.xlane.f32.xlu0 %v3345
        %v3347 = vpop.xlane.xlu0 %3346
        %v3348 = vsel %vm572, %v3331, 0.0
        %3349 = vadd.xlane.f32.xlu0 %v3348
        %v3350 = vpop.xlane.xlu0 %3349
        %v3351 = vsel %vm572, %v3333, 0.0
        %3352 = vadd.xlane.f32.xlu0 %v3351
        %v3353 = vpop.xlane.xlu0 %3352
        %v3354 = vsel %vm572, %v3335, 0.0
        %3355 = vadd.xlane.f32.xlu0 %v3354
        %v3356 = vpop.xlane.xlu0 %3355
        %v3357 = vsel %vm572, %v3337, 0.0
        %3358 = vadd.xlane.f32.xlu0 %v3357
        %v3359 = vpop.xlane.xlu0 %3358
        %v3360 = vsel %vm572, %v3339, 0.0
        %3361 = vadd.xlane.f32.xlu0 %v3360
        %v3362 = vpop.xlane.xlu0 %3361
        %v3363 = vsel %vm572, %v3341, 0.0
        %3364 = vadd.xlane.f32.xlu0 %v3363
        %v3365 = vpop.xlane.xlu0 %3364
        %v3366 = vrcp.pop %v3344
        %v3367 = vrcp.pop %v3347
        %v3368 = vrcp.pop %v3350
        %v3369 = vrcp.pop %v3353
        %v3370 = vrcp.pop %v3356
        %v3371 = vrcp.pop %v3359
        %v3372 = vrcp.pop %v3362
        %v3373 = vrcp.pop %v3365
        %v3374 = vmul.f32 %v3327, %v3366
        %v3375 = vmul.f32 %v3329, %v3367
        %v3376 = vmul.f32 %v3331, %v3368
        %v3377 = vmul.f32 %v3333, %v3369
        %v3378 = vmul.f32 %v3335, %v3370
        %v3379 = vmul.f32 %v3337, %v3371
        %v3380 = vmul.f32 %v3339, %v3372
        %v3381 = vmul.f32 %v3341, %v3373
        %v3382 = vadd.f32 %v2923, %v3374
        %v3383 = vadd.f32 %v2924, %v3375
        %v3384 = vadd.f32 %v2925, %v3376
        %v3385 = vadd.f32 %v2926, %v3377
        %v3386 = vadd.f32 %v2927, %v3378
        %v3387 = vadd.f32 %v2928, %v3379
        %v3388 = vadd.f32 %v2929, %v3380
        %v3389 = vadd.f32 %v2930, %v3381
        %3390 = vrot.lane.b32.xlu0 %v372, 40
        %v3391 = vpop.permute.xlu0 %3390
        %3392 = vrot.lane.b32.xlu0 %v377, 40
        %v3393 = vpop.permute.xlu0 %3392
        %3394 = vrot.lane.b32.xlu0 %v382, 40
        %v3395 = vpop.permute.xlu0 %3394
        %3396 = vrot.lane.b32.xlu0 %v387, 40
        %v3397 = vpop.permute.xlu0 %3396
        %3398 = vrot.lane.b32.xlu0 %v392, 40
        %v3399 = vpop.permute.xlu0 %3398
        %3400 = vrot.lane.b32.xlu0 %v397, 40
        %v3401 = vpop.permute.xlu0 %3400
        %3402 = vrot.lane.b32.xlu0 %v402, 40
        %v3403 = vpop.permute.xlu0 %3402
        %3404 = vrot.lane.b32.xlu0 %v407, 40
        %v3405 = vpop.permute.xlu0 %3404
        %v3415 = vsel %vm572, %v3374, 0
        %v3418 = vsel %vm572, %v3375, 0
        %v3421 = vsel %vm572, %v3376, 0
        %v3424 = vsel %vm572, %v3377, 0
        %v3427 = vsel %vm572, %v3378, 0
        %v3430 = vsel %vm572, %v3379, 0
        %v3433 = vsel %vm572, %v3380, 0
        %v3436 = vsel %vm572, %v3381, 0
        %3438 = vmatprep.subr.mxu0 0.0
        %3439 = vmatpush1.msra.mxu0 0.0
        %3440 = vmatprep.subr.mxu0 0.0
        %3441 = vmatpush1.msra.mxu0 0.0
        %3442 = vmatprep.subr.mxu0 0.0
        %3443 = vmatpush1.msra.mxu0 0.0
        %3444 = vmatprep.subr.mxu0 0.0
        %3445 = vmatpush1.msra.mxu0 0.0
        %3446 = vmatprep.subr.mxu0 0.0
        %3447 = vmatpush1.msra.mxu0 0.0
        %3448 = vmatprep.subr.mxu0 0.0
        %3449 = vmatpush1.msra.mxu0 0.0
        %3450 = vmatprep.subr.mxu0 0.0
        %3451 = vmatpush1.msra.mxu0 0.0
        %3452 = vmatprep.subr.mxu0 0.0
        %3453 = vmatpush1.msra.mxu0 0.0
        %3454 = vmatprep.subr.mxu0 0.0
        %3455 = vmatpush1.msra.mxu0 %v3405
        %3456 = vmatprep.subr.mxu0 0.0
        %3457 = vmatpush1.msra.mxu0 %v3403
        %3458 = vmatprep.subr.mxu0 0.0
        %3459 = vmatpush1.msra.mxu0 %v3401
        %3460 = vmatprep.subr.mxu0 0.0
        %3461 = vmatpush1.msra.mxu0 %v3399
        %3462 = vmatprep.subr.mxu0 0.0
        %3463 = vmatpush1.msra.mxu0 %v3397
        %3464 = vmatprep.subr.mxu0 0.0
        %3465 = vmatpush1.msra.mxu0 %v3395
        %3466 = vmatprep.subr.mxu0 0.0
        %3467 = vmatpush1.msra.mxu0 %v3393
        %3468 = vmatprep.subr.mxu0 0.0
        %3469 = vmatpush1.msra.mxu0 %v3391
        %3470 = vmatprep.subr.mxu0 0.0
        %3471 = vmatpush2.msra.mxu0 0.0
        %3472 = vmatprep.subr.mxu0 0.0
        %3473 = vmatpush2.msra.mxu0 0.0
        %3474 = vmatprep.subr.mxu0 0.0
        %3475 = vmatpush2.msra.mxu0 0.0
        %3476 = vmatprep.subr.mxu0 0.0
        %3477 = vmatpush2.msra.mxu0 0.0
        %3478 = vmatprep.subr.mxu0 0.0
        %3479 = vmatpush2.msra.mxu0 0.0
        %3480 = vmatprep.subr.mxu0 0.0
        %3481 = vmatpush2.msra.mxu0 0.0
        %3482 = vmatprep.subr.mxu0 0.0
        %3483 = vmatpush2.msra.mxu0 0.0
        %3484 = vmatprep.subr.mxu0 0.0
        %3485 = vmatpush2.msra.mxu0 0.0
        %3486 = vmatprep.subr.mxu0 0.0
        %3487 = vmatpush2.msra.mxu0 0.0
        %3488 = vmatprep.subr.mxu0 0.0
        %3489 = vmatpush2.msra.mxu0 0.0
        %3490 = vmatprep.subr.mxu0 0.0
        %3491 = vmatpush2.msra.mxu0 0.0
        %3492 = vmatprep.subr.mxu0 0.0
        %3493 = vmatpush2.msra.mxu0 0.0
        %3494 = vmatprep.subr.mxu0 0.0
        %3495 = vmatpush2.msra.mxu0 0.0
        %3496 = vmatprep.subr.mxu0 0.0
        %3497 = vmatpush2.msra.mxu0 0.0
        %3498 = vmatprep.subr.mxu0 0.0
        %3499 = vmatpush2.msra.mxu0 0.0
        %3500 = vmatprep.subr.mxu0 0.0
        %3501 = vmatpush2.msra.mxu0 0.0
        %3502 = vmatprep.mubr.f32.mxu0 0.0
        %3503 = vmatmul.mubr.f32.gmra.mxu0 %v3415
        %v3504 = vpop.f32.mrf.mxu0
        %v3505 = vadd.f32 0.0, %v3504
        %v3506 = vpop.f32.mrf.mxu0
        %3507 = vmatprep.mubr.f32.mxu0 0.0
        %3508 = vmatmul.mubr.f32.gmra.mxu0 %v3418
        %v3509 = vpop.f32.mrf.mxu0
        %v3510 = vadd.f32 0.0, %v3509
        %v3511 = vpop.f32.mrf.mxu0
        %3512 = vmatprep.mubr.f32.mxu0 0.0
        %3513 = vmatmul.mubr.f32.gmra.mxu0 %v3421
        %v3514 = vpop.f32.mrf.mxu0
        %v3515 = vadd.f32 0.0, %v3514
        %v3516 = vpop.f32.mrf.mxu0
        %3517 = vmatprep.mubr.f32.mxu0 0.0
        %3518 = vmatmul.mubr.f32.gmra.mxu0 %v3424
        %v3519 = vpop.f32.mrf.mxu0
        %v3520 = vadd.f32 0.0, %v3519
        %v3521 = vpop.f32.mrf.mxu0
        %3522 = vmatprep.mubr.f32.mxu0 0.0
        %3523 = vmatmul.mubr.f32.gmra.mxu0 %v3427
        %v3524 = vpop.f32.mrf.mxu0
        %v3525 = vadd.f32 0.0, %v3524
        %v3526 = vpop.f32.mrf.mxu0
        %3527 = vmatprep.mubr.f32.mxu0 0.0
        %3528 = vmatmul.mubr.f32.gmra.mxu0 %v3430
        %v3529 = vpop.f32.mrf.mxu0
        %v3530 = vadd.f32 0.0, %v3529
        %v3531 = vpop.f32.mrf.mxu0
        %3532 = vmatprep.mubr.f32.mxu0 0.0
        %3533 = vmatmul.mubr.f32.gmra.mxu0 %v3433
        %v3534 = vpop.f32.mrf.mxu0
        %v3535 = vadd.f32 0.0, %v3534
        %v3536 = vpop.f32.mrf.mxu0
        %3537 = vmatprep.mubr.f32.mxu0 0.0
        %3538 = vmatmul.mubr.f32.gmra.mxu0 %v3436
        %v3539 = vpop.f32.mrf.mxu0
        %v3540 = vadd.f32 0.0, %v3539
        %v3541 = vpop.f32.mrf.mxu0
        %3542 = vdwg.mxu0
        %3551 = vrot.lane.b32.xlu0 %v3505, 24
        %v3552 = vpop.permute.xlu0 %3551
        %3553 = vrot.lane.b32.xlu0 %v3510, 24
        %v3554 = vpop.permute.xlu0 %3553
        %3555 = vrot.lane.b32.xlu0 %v3515, 24
        %v3556 = vpop.permute.xlu0 %3555
        %3557 = vrot.lane.b32.xlu0 %v3520, 24
        %v3558 = vpop.permute.xlu0 %3557
        %3559 = vrot.lane.b32.xlu0 %v3525, 24
        %v3560 = vpop.permute.xlu0 %3559
        %3561 = vrot.lane.b32.xlu0 %v3530, 24
        %v3562 = vpop.permute.xlu0 %3561
        %3563 = vrot.lane.b32.xlu0 %v3535, 24
        %v3564 = vpop.permute.xlu0 %3563
        %3565 = vrot.lane.b32.xlu0 %v3540, 24
        %v3566 = vpop.permute.xlu0 %3565
        %vm3575 = vcmask 228544
        %3576 = vst.msk [vmem:[#allocation2] sm:$0xff] %vm3575, %v3552
        %3577 = vst.msk [vmem:[#allocation2 + $0x8] sm:$0xff] %vm3575, %v3554
        %3578 = vst.msk [vmem:[#allocation2 + $0x10] sm:$0xff] %vm3575, %v3556
        %3579 = vst.msk [vmem:[#allocation2 + $0x18] sm:$0xff] %vm3575, %v3558
        %3580 = vst.msk [vmem:[#allocation2 + $0x20] sm:$0xff] %vm3575, %v3560
        %3581 = vst.msk [vmem:[#allocation2 + $0x28] sm:$0xff] %vm3575, %v3562
        %3582 = vst.msk [vmem:[#allocation2 + $0x30] sm:$0xff] %vm3575, %v3564
        %3583 = vst.msk [vmem:[#allocation2 + $0x38] sm:$0xff] %vm3575, %v3566
        %3584 = vrot.lane.b32.xlu0 %v372, 100
        %v3585 = vpop.permute.xlu0 %3584
        %3586 = vrot.lane.b32.xlu0 %v377, 100
        %v3587 = vpop.permute.xlu0 %3586
        %3588 = vrot.lane.b32.xlu0 %v382, 100
        %v3589 = vpop.permute.xlu0 %3588
        %3590 = vrot.lane.b32.xlu0 %v387, 100
        %v3591 = vpop.permute.xlu0 %3590
        %3592 = vrot.lane.b32.xlu0 %v392, 100
        %v3593 = vpop.permute.xlu0 %3592
        %3594 = vrot.lane.b32.xlu0 %v397, 100
        %v3595 = vpop.permute.xlu0 %3594
        %3596 = vrot.lane.b32.xlu0 %v402, 100
        %v3597 = vpop.permute.xlu0 %3596
        %3598 = vrot.lane.b32.xlu0 %v407, 100
        %v3599 = vpop.permute.xlu0 %3598
        %3600 = vrot.lane.b32.xlu0 %v372, 68
        %v3601 = vpop.permute.xlu0 %3600
        %3602 = vrot.lane.b32.xlu0 %v377, 68
        %v3603 = vpop.permute.xlu0 %3602
        %3604 = vrot.lane.b32.xlu0 %v382, 68
        %v3605 = vpop.permute.xlu0 %3604
        %3606 = vrot.lane.b32.xlu0 %v387, 68
        %v3607 = vpop.permute.xlu0 %3606
        %3608 = vrot.lane.b32.xlu0 %v392, 68
        %v3609 = vpop.permute.xlu0 %3608
        %3610 = vrot.lane.b32.xlu0 %v397, 68
        %v3611 = vpop.permute.xlu0 %3610
        %3612 = vrot.lane.b32.xlu0 %v402, 68
        %v3613 = vpop.permute.xlu0 %3612
        %3614 = vrot.lane.b32.xlu0 %v407, 68
        %v3615 = vpop.permute.xlu0 %3614
        %v3616 = vsel %vm434, %v3585, 0
        %v3618 = vsel %vm434, %v3587, 0
        %v3620 = vsel %vm434, %v3589, 0
        %v3622 = vsel %vm434, %v3591, 0
        %v3624 = vsel %vm434, %v3593, 0
        %v3626 = vsel %vm434, %v3595, 0
        %v3628 = vsel %vm434, %v3597, 0
        %v3630 = vsel %vm434, %v3599, 0
        %v3632 = vsel %vm434, %v3601, 0
        %v3634 = vsel %vm434, %v3603, 0
        %v3636 = vsel %vm434, %v3605, 0
        %v3638 = vsel %vm434, %v3607, 0
        %v3640 = vsel %vm434, %v3609, 0
        %v3642 = vsel %vm434, %v3611, 0
        %v3644 = vsel %vm434, %v3613, 0
        %v3646 = vsel %vm434, %v3615, 0
        %3648 = vmatprep.subr.mxu0 0.0
        %3649 = vmatpush1.xpose.msra.mxu0 0.0
        %3650 = vmatprep.subr.mxu0 0.0
        %3651 = vmatpush1.xpose.msra.mxu0 0.0
        %3652 = vmatprep.subr.mxu0 0.0
        %3653 = vmatpush1.xpose.msra.mxu0 0.0
        %3654 = vmatprep.subr.mxu0 0.0
        %3655 = vmatpush1.xpose.msra.mxu0 0.0
        %3656 = vmatprep.subr.mxu0 0.0
        %3657 = vmatpush1.xpose.msra.mxu0 0.0
        %3658 = vmatprep.subr.mxu0 0.0
        %3659 = vmatpush1.xpose.msra.mxu0 0.0
        %3660 = vmatprep.subr.mxu0 0.0
        %3661 = vmatpush1.xpose.msra.mxu0 0.0
        %3662 = vmatprep.subr.mxu0 0.0
        %3663 = vmatpush1.xpose.msra.mxu0 0.0
        %3664 = vmatprep.subr.mxu0 0.0
        %3665 = vmatpush1.xpose.msra.mxu0 %v3646
        %3666 = vmatprep.subr.mxu0 0.0
        %3667 = vmatpush1.xpose.msra.mxu0 %v3644
        %3668 = vmatprep.subr.mxu0 0.0
        %3669 = vmatpush1.xpose.msra.mxu0 %v3642
        %3670 = vmatprep.subr.mxu0 0.0
        %3671 = vmatpush1.xpose.msra.mxu0 %v3640
        %3672 = vmatprep.subr.mxu0 0.0
        %3673 = vmatpush1.xpose.msra.mxu0 %v3638
        %3674 = vmatprep.subr.mxu0 0.0
        %3675 = vmatpush1.xpose.msra.mxu0 %v3636
        %3676 = vmatprep.subr.mxu0 0.0
        %3677 = vmatpush1.xpose.msra.mxu0 %v3634
        %3678 = vmatprep.subr.mxu0 0.0
        %3679 = vmatpush1.xpose.msra.mxu0 %v3632
        %3680 = vmatprep.subr.mxu0 0.0
        %3681 = vmatpush2.xpose.msra.mxu0 0.0
        %3682 = vmatprep.subr.mxu0 0.0
        %3683 = vmatpush2.xpose.msra.mxu0 0.0
        %3684 = vmatprep.subr.mxu0 0.0
        %3685 = vmatpush2.xpose.msra.mxu0 0.0
        %3686 = vmatprep.subr.mxu0 0.0
        %3687 = vmatpush2.xpose.msra.mxu0 0.0
        %3688 = vmatprep.subr.mxu0 0.0
        %3689 = vmatpush2.xpose.msra.mxu0 0.0
        %3690 = vmatprep.subr.mxu0 0.0
        %3691 = vmatpush2.xpose.msra.mxu0 0.0
        %3692 = vmatprep.subr.mxu0 0.0
        %3693 = vmatpush2.xpose.msra.mxu0 0.0
        %3694 = vmatprep.subr.mxu0 0.0
        %3695 = vmatpush2.xpose.msra.mxu0 0.0
        %3696 = vmatprep.subr.mxu0 0.0
        %3697 = vmatpush2.xpose.msra.mxu0 0.0
        %3698 = vmatprep.subr.mxu0 0.0
        %3699 = vmatpush2.xpose.msra.mxu0 0.0
        %3700 = vmatprep.subr.mxu0 0.0
        %3701 = vmatpush2.xpose.msra.mxu0 0.0
        %3702 = vmatprep.subr.mxu0 0.0
        %3703 = vmatpush2.xpose.msra.mxu0 0.0
        %3704 = vmatprep.subr.mxu0 0.0
        %3705 = vmatpush2.xpose.msra.mxu0 0.0
        %3706 = vmatprep.subr.mxu0 0.0
        %3707 = vmatpush2.xpose.msra.mxu0 0.0
        %3708 = vmatprep.subr.mxu0 0.0
        %3709 = vmatpush2.xpose.msra.mxu0 0.0
        %3710 = vmatprep.subr.mxu0 0.0
        %3711 = vmatpush2.xpose.msra.mxu0 0.0
        %3712 = vmatprep.mubr.f32.mxu0 0.0
        %3713 = vmatmul.mubr.f32.gmra.mxu0 %v3616
        %v3714 = vpop.f32.mrf.mxu0
        %v3715 = vadd.f32 0.0, %v3714
        %v3716 = vpop.f32.mrf.mxu0
        %3717 = vmatprep.mubr.f32.mxu0 0.0
        %3718 = vmatmul.mubr.f32.gmra.mxu0 %v3618
        %v3719 = vpop.f32.mrf.mxu0
        %v3720 = vadd.f32 0.0, %v3719
        %v3721 = vpop.f32.mrf.mxu0
        %3722 = vmatprep.mubr.f32.mxu0 0.0
        %3723 = vmatmul.mubr.f32.gmra.mxu0 %v3620
        %v3724 = vpop.f32.mrf.mxu0
        %v3725 = vadd.f32 0.0, %v3724
        %v3726 = vpop.f32.mrf.mxu0
        %3727 = vmatprep.mubr.f32.mxu0 0.0
        %3728 = vmatmul.mubr.f32.gmra.mxu0 %v3622
        %v3729 = vpop.f32.mrf.mxu0
        %v3730 = vadd.f32 0.0, %v3729
        %v3731 = vpop.f32.mrf.mxu0
        %3732 = vmatprep.mubr.f32.mxu0 0.0
        %3733 = vmatmul.mubr.f32.gmra.mxu0 %v3624
        %v3734 = vpop.f32.mrf.mxu0
        %v3735 = vadd.f32 0.0, %v3734
        %v3736 = vpop.f32.mrf.mxu0
        %3737 = vmatprep.mubr.f32.mxu0 0.0
        %3738 = vmatmul.mubr.f32.gmra.mxu0 %v3626
        %v3739 = vpop.f32.mrf.mxu0
        %v3740 = vadd.f32 0.0, %v3739
        %v3741 = vpop.f32.mrf.mxu0
        %3742 = vmatprep.mubr.f32.mxu0 0.0
        %3743 = vmatmul.mubr.f32.gmra.mxu0 %v3628
        %v3744 = vpop.f32.mrf.mxu0
        %v3745 = vadd.f32 0.0, %v3744
        %v3746 = vpop.f32.mrf.mxu0
        %3747 = vmatprep.mubr.f32.mxu0 0.0
        %3748 = vmatmul.mubr.f32.gmra.mxu0 %v3630
        %v3749 = vpop.f32.mrf.mxu0
        %v3750 = vadd.f32 0.0, %v3749
        %v3751 = vpop.f32.mrf.mxu0
        %3752 = vdwg.mxu0
        %v3753 = vsel %vm572, %v3715, -inf
        %3754 = vmax.xlane.f32.xlu0 %v3753
        %v3755 = vpop.xlane.xlu0 %3754
        %v3756 = vsel %vm572, %v3720, -inf
        %3757 = vmax.xlane.f32.xlu0 %v3756
        %v3758 = vpop.xlane.xlu0 %3757
        %v3759 = vsel %vm572, %v3725, -inf
        %3760 = vmax.xlane.f32.xlu0 %v3759
        %v3761 = vpop.xlane.xlu0 %3760
        %v3762 = vsel %vm572, %v3730, -inf
        %3763 = vmax.xlane.f32.xlu0 %v3762
        %v3764 = vpop.xlane.xlu0 %3763
        %v3765 = vsel %vm572, %v3735, -inf
        %3766 = vmax.xlane.f32.xlu0 %v3765
        %v3767 = vpop.xlane.xlu0 %3766
        %v3768 = vsel %vm572, %v3740, -inf
        %3769 = vmax.xlane.f32.xlu0 %v3768
        %v3770 = vpop.xlane.xlu0 %3769
        %v3771 = vsel %vm572, %v3745, -inf
        %3772 = vmax.xlane.f32.xlu0 %v3771
        %v3773 = vpop.xlane.xlu0 %3772
        %v3774 = vsel %vm572, %v3750, -inf
        %3775 = vmax.xlane.f32.xlu0 %v3774
        %v3776 = vpop.xlane.xlu0 %3775
        %v3777 = vsub.f32 %v3715, %v3755
        %v3778 = vsub.f32 %v3720, %v3758
        %v3779 = vsub.f32 %v3725, %v3761
        %v3780 = vsub.f32 %v3730, %v3764
        %v3781 = vsub.f32 %v3735, %v3767
        %v3782 = vsub.f32 %v3740, %v3770
        %v3783 = vsub.f32 %v3745, %v3773
        %v3784 = vsub.f32 %v3750, %v3776
        %v3785 = vmul.f32 %v3777, 1.442695
        %v3786 = vpow.pop %v3785
        %v3787 = vmul.f32 %v3778, 1.442695
        %v3788 = vpow.pop %v3787
        %v3789 = vmul.f32 %v3779, 1.442695
        %v3790 = vpow.pop %v3789
        %v3791 = vmul.f32 %v3780, 1.442695
        %v3792 = vpow.pop %v3791
        %v3793 = vmul.f32 %v3781, 1.442695
        %v3794 = vpow.pop %v3793
        %v3795 = vmul.f32 %v3782, 1.442695
        %v3796 = vpow.pop %v3795
        %v3797 = vmul.f32 %v3783, 1.442695
        %v3798 = vpow.pop %v3797
        %v3799 = vmul.f32 %v3784, 1.442695
        %v3800 = vpow.pop %v3799
        %v3801 = vsel %vm572, %v3786, 0.0
        %3802 = vadd.xlane.f32.xlu0 %v3801
        %v3803 = vpop.xlane.xlu0 %3802
        %v3804 = vsel %vm572, %v3788, 0.0
        %3805 = vadd.xlane.f32.xlu0 %v3804
        %v3806 = vpop.xlane.xlu0 %3805
        %v3807 = vsel %vm572, %v3790, 0.0
        %3808 = vadd.xlane.f32.xlu0 %v3807
        %v3809 = vpop.xlane.xlu0 %3808
        %v3810 = vsel %vm572, %v3792, 0.0
        %3811 = vadd.xlane.f32.xlu0 %v3810
        %v3812 = vpop.xlane.xlu0 %3811
        %v3813 = vsel %vm572, %v3794, 0.0
        %3814 = vadd.xlane.f32.xlu0 %v3813
        %v3815 = vpop.xlane.xlu0 %3814
        %v3816 = vsel %vm572, %v3796, 0.0
        %3817 = vadd.xlane.f32.xlu0 %v3816
        %v3818 = vpop.xlane.xlu0 %3817
        %v3819 = vsel %vm572, %v3798, 0.0
        %3820 = vadd.xlane.f32.xlu0 %v3819
        %v3821 = vpop.xlane.xlu0 %3820
        %v3822 = vsel %vm572, %v3800, 0.0
        %3823 = vadd.xlane.f32.xlu0 %v3822
        %v3824 = vpop.xlane.xlu0 %3823
        %v3825 = vrcp.pop %v3803
        %v3826 = vrcp.pop %v3806
        %v3827 = vrcp.pop %v3809
        %v3828 = vrcp.pop %v3812
        %v3829 = vrcp.pop %v3815
        %v3830 = vrcp.pop %v3818
        %v3831 = vrcp.pop %v3821
        %v3832 = vrcp.pop %v3824
        %v3833 = vmul.f32 %v3786, %v3825
        %v3834 = vmul.f32 %v3788, %v3826
        %v3835 = vmul.f32 %v3790, %v3827
        %v3836 = vmul.f32 %v3792, %v3828
        %v3837 = vmul.f32 %v3794, %v3829
        %v3838 = vmul.f32 %v3796, %v3830
        %v3839 = vmul.f32 %v3798, %v3831
        %v3840 = vmul.f32 %v3800, %v3832
        %v3841 = vadd.f32 %v3382, %v3833
        %v3842 = vadd.f32 %v3383, %v3834
        %v3843 = vadd.f32 %v3384, %v3835
        %v3844 = vadd.f32 %v3385, %v3836
        %v3845 = vadd.f32 %v3386, %v3837
        %v3846 = vadd.f32 %v3387, %v3838
        %v3847 = vadd.f32 %v3388, %v3839
        %v3848 = vadd.f32 %v3389, %v3840
        %3849 = vrot.lane.b32.xlu0 %v372, 36
        %v3850 = vpop.permute.xlu0 %3849
        %3851 = vrot.lane.b32.xlu0 %v377, 36
        %v3852 = vpop.permute.xlu0 %3851
        %3853 = vrot.lane.b32.xlu0 %v382, 36
        %v3854 = vpop.permute.xlu0 %3853
        %3855 = vrot.lane.b32.xlu0 %v387, 36
        %v3856 = vpop.permute.xlu0 %3855
        %3857 = vrot.lane.b32.xlu0 %v392, 36
        %v3858 = vpop.permute.xlu0 %3857
        %3859 = vrot.lane.b32.xlu0 %v397, 36
        %v3860 = vpop.permute.xlu0 %3859
        %3861 = vrot.lane.b32.xlu0 %v402, 36
        %v3862 = vpop.permute.xlu0 %3861
        %3863 = vrot.lane.b32.xlu0 %v407, 36
        %v3864 = vpop.permute.xlu0 %3863
        %v3874 = vsel %vm572, %v3833, 0
        %v3877 = vsel %vm572, %v3834, 0
        %v3880 = vsel %vm572, %v3835, 0
        %v3883 = vsel %vm572, %v3836, 0
        %v3886 = vsel %vm572, %v3837, 0
        %v3889 = vsel %vm572, %v3838, 0
        %v3892 = vsel %vm572, %v3839, 0
        %v3895 = vsel %vm572, %v3840, 0
        %3897 = vmatprep.subr.mxu0 0.0
        %3898 = vmatpush1.msra.mxu0 0.0
        %3899 = vmatprep.subr.mxu0 0.0
        %3900 = vmatpush1.msra.mxu0 0.0
        %3901 = vmatprep.subr.mxu0 0.0
        %3902 = vmatpush1.msra.mxu0 0.0
        %3903 = vmatprep.subr.mxu0 0.0
        %3904 = vmatpush1.msra.mxu0 0.0
        %3905 = vmatprep.subr.mxu0 0.0
        %3906 = vmatpush1.msra.mxu0 0.0
        %3907 = vmatprep.subr.mxu0 0.0
        %3908 = vmatpush1.msra.mxu0 0.0
        %3909 = vmatprep.subr.mxu0 0.0
        %3910 = vmatpush1.msra.mxu0 0.0
        %3911 = vmatprep.subr.mxu0 0.0
        %3912 = vmatpush1.msra.mxu0 0.0
        %3913 = vmatprep.subr.mxu0 0.0
        %3914 = vmatpush1.msra.mxu0 %v3864
        %3915 = vmatprep.subr.mxu0 0.0
        %3916 = vmatpush1.msra.mxu0 %v3862
        %3917 = vmatprep.subr.mxu0 0.0
        %3918 = vmatpush1.msra.mxu0 %v3860
        %3919 = vmatprep.subr.mxu0 0.0
        %3920 = vmatpush1.msra.mxu0 %v3858
        %3921 = vmatprep.subr.mxu0 0.0
        %3922 = vmatpush1.msra.mxu0 %v3856
        %3923 = vmatprep.subr.mxu0 0.0
        %3924 = vmatpush1.msra.mxu0 %v3854
        %3925 = vmatprep.subr.mxu0 0.0
        %3926 = vmatpush1.msra.mxu0 %v3852
        %3927 = vmatprep.subr.mxu0 0.0
        %3928 = vmatpush1.msra.mxu0 %v3850
        %3929 = vmatprep.subr.mxu0 0.0
        %3930 = vmatpush2.msra.mxu0 0.0
        %3931 = vmatprep.subr.mxu0 0.0
        %3932 = vmatpush2.msra.mxu0 0.0
        %3933 = vmatprep.subr.mxu0 0.0
        %3934 = vmatpush2.msra.mxu0 0.0
        %3935 = vmatprep.subr.mxu0 0.0
        %3936 = vmatpush2.msra.mxu0 0.0
        %3937 = vmatprep.subr.mxu0 0.0
        %3938 = vmatpush2.msra.mxu0 0.0
        %3939 = vmatprep.subr.mxu0 0.0
        %3940 = vmatpush2.msra.mxu0 0.0
        %3941 = vmatprep.subr.mxu0 0.0
        %3942 = vmatpush2.msra.mxu0 0.0
        %3943 = vmatprep.subr.mxu0 0.0
        %3944 = vmatpush2.msra.mxu0 0.0
        %3945 = vmatprep.subr.mxu0 0.0
        %3946 = vmatpush2.msra.mxu0 0.0
        %3947 = vmatprep.subr.mxu0 0.0
        %3948 = vmatpush2.msra.mxu0 0.0
        %3949 = vmatprep.subr.mxu0 0.0
        %3950 = vmatpush2.msra.mxu0 0.0
        %3951 = vmatprep.subr.mxu0 0.0
        %3952 = vmatpush2.msra.mxu0 0.0
        %3953 = vmatprep.subr.mxu0 0.0
        %3954 = vmatpush2.msra.mxu0 0.0
        %3955 = vmatprep.subr.mxu0 0.0
        %3956 = vmatpush2.msra.mxu0 0.0
        %3957 = vmatprep.subr.mxu0 0.0
        %3958 = vmatpush2.msra.mxu0 0.0
        %3959 = vmatprep.subr.mxu0 0.0
        %3960 = vmatpush2.msra.mxu0 0.0
        %3961 = vmatprep.mubr.f32.mxu0 0.0
        %3962 = vmatmul.mubr.f32.gmra.mxu0 %v3874
        %v3963 = vpop.f32.mrf.mxu0
        %v3964 = vadd.f32 0.0, %v3963
        %v3965 = vpop.f32.mrf.mxu0
        %3966 = vmatprep.mubr.f32.mxu0 0.0
        %3967 = vmatmul.mubr.f32.gmra.mxu0 %v3877
        %v3968 = vpop.f32.mrf.mxu0
        %v3969 = vadd.f32 0.0, %v3968
        %v3970 = vpop.f32.mrf.mxu0
        %3971 = vmatprep.mubr.f32.mxu0 0.0
        %3972 = vmatmul.mubr.f32.gmra.mxu0 %v3880
        %v3973 = vpop.f32.mrf.mxu0
        %v3974 = vadd.f32 0.0, %v3973
        %v3975 = vpop.f32.mrf.mxu0
        %3976 = vmatprep.mubr.f32.mxu0 0.0
        %3977 = vmatmul.mubr.f32.gmra.mxu0 %v3883
        %v3978 = vpop.f32.mrf.mxu0
        %v3979 = vadd.f32 0.0, %v3978
        %v3980 = vpop.f32.mrf.mxu0
        %3981 = vmatprep.mubr.f32.mxu0 0.0
        %3982 = vmatmul.mubr.f32.gmra.mxu0 %v3886
        %v3983 = vpop.f32.mrf.mxu0
        %v3984 = vadd.f32 0.0, %v3983
        %v3985 = vpop.f32.mrf.mxu0
        %3986 = vmatprep.mubr.f32.mxu0 0.0
        %3987 = vmatmul.mubr.f32.gmra.mxu0 %v3889
        %v3988 = vpop.f32.mrf.mxu0
        %v3989 = vadd.f32 0.0, %v3988
        %v3990 = vpop.f32.mrf.mxu0
        %3991 = vmatprep.mubr.f32.mxu0 0.0
        %3992 = vmatmul.mubr.f32.gmra.mxu0 %v3892
        %v3993 = vpop.f32.mrf.mxu0
        %v3994 = vadd.f32 0.0, %v3993
        %v3995 = vpop.f32.mrf.mxu0
        %3996 = vmatprep.mubr.f32.mxu0 0.0
        %3997 = vmatmul.mubr.f32.gmra.mxu0 %v3895
        %v3998 = vpop.f32.mrf.mxu0
        %v3999 = vadd.f32 0.0, %v3998
        %v4000 = vpop.f32.mrf.mxu0
        %4001 = vdwg.mxu0
        %4010 = vrot.lane.b32.xlu0 %v3964, 28
        %v4011 = vpop.permute.xlu0 %4010
        %4012 = vrot.lane.b32.xlu0 %v3969, 28
        %v4013 = vpop.permute.xlu0 %4012
        %4014 = vrot.lane.b32.xlu0 %v3974, 28
        %v4015 = vpop.permute.xlu0 %4014
        %4016 = vrot.lane.b32.xlu0 %v3979, 28
        %v4017 = vpop.permute.xlu0 %4016
        %4018 = vrot.lane.b32.xlu0 %v3984, 28
        %v4019 = vpop.permute.xlu0 %4018
        %4020 = vrot.lane.b32.xlu0 %v3989, 28
        %v4021 = vpop.permute.xlu0 %4020
        %4022 = vrot.lane.b32.xlu0 %v3994, 28
        %v4023 = vpop.permute.xlu0 %4022
        %4024 = vrot.lane.b32.xlu0 %v3999, 28
        %v4025 = vpop.permute.xlu0 %4024
        %vm4034 = vcmask 261344
        %4035 = vst.msk [vmem:[#allocation2] sm:$0xff] %vm4034, %v4011
        %4036 = vst.msk [vmem:[#allocation2 + $0x8] sm:$0xff] %vm4034, %v4013
        %4037 = vst.msk [vmem:[#allocation2 + $0x10] sm:$0xff] %vm4034, %v4015
        %4038 = vst.msk [vmem:[#allocation2 + $0x18] sm:$0xff] %vm4034, %v4017
        %4039 = vst.msk [vmem:[#allocation2 + $0x20] sm:$0xff] %vm4034, %v4019
        %4040 = vst.msk [vmem:[#allocation2 + $0x28] sm:$0xff] %vm4034, %v4021
        %4041 = vst.msk [vmem:[#allocation2 + $0x30] sm:$0xff] %vm4034, %v4023
        %4042 = vst.msk [vmem:[#allocation2 + $0x38] sm:$0xff] %vm4034, %v4025
        %v4043 = vld [vmem:[#allocation2] sm:$0xff]
        %v4044 = vld [vmem:[#allocation2 + $0x8] sm:$0xff]
        %v4045 = vld [vmem:[#allocation2 + $0x10] sm:$0xff]
        %v4046 = vld [vmem:[#allocation2 + $0x18] sm:$0xff]
        %v4047 = vld [vmem:[#allocation2 + $0x20] sm:$0xff]
        %v4048 = vld [vmem:[#allocation2 + $0x28] sm:$0xff]
        %v4049 = vld [vmem:[#allocation2 + $0x30] sm:$0xff]
        %v4050 = vld [vmem:[#allocation2 + $0x38] sm:$0xff]
        %v4051 = vld [vmem:[%s3] sm:$0xff]
        %v4052 = vld [vmem:[%s3 + $0x8] sm:$0xff]
        %v4053 = vld [vmem:[%s3 + $0x10] sm:$0xff]
        %v4054 = vld [vmem:[%s3 + $0x18] sm:$0xff]
        %v4055 = vld [vmem:[%s4] sm:$0x1]
        %v4057 = vlaneseq
        %v4058 = vshrl.u32 %v4057, 7
        %v4059 = vsub.s32 0, %v4058
        %v4060 = vrot.slane %v4055, %v4059
        %v4063 = vsel %vm280, %v4043, 0
        %v4066 = vsel %vm280, %v4044, 0
        %v4069 = vsel %vm280, %v4045, 0
        %v4072 = vsel %vm280, %v4046, 0
        %v4075 = vsel %vm280, %v4047, 0
        %v4078 = vsel %vm280, %v4048, 0
        %v4081 = vsel %vm280, %v4049, 0
        %v4084 = vsel %vm280, %v4050, 0
        %4086 = vmatprep.subr.mxu0 0.0
        %4087 = vmatpush1.msra.mxu0 0.0
        %4088 = vmatprep.subr.mxu0 0.0
        %4089 = vmatpush1.msra.mxu0 0.0
        %4090 = vmatprep.subr.mxu0 0.0
        %4091 = vmatpush1.msra.mxu0 0.0
        %4092 = vmatprep.subr.mxu0 0.0
        %4093 = vmatpush1.msra.mxu0 0.0
        %4094 = vmatprep.subr.mxu0 0.0
        %4095 = vmatpush1.msra.mxu0 0.0
        %4096 = vmatprep.subr.mxu0 0.0
        %4097 = vmatpush1.msra.mxu0 0.0
        %4098 = vmatprep.subr.mxu0 0.0
        %4099 = vmatpush1.msra.mxu0 0.0
        %4100 = vmatprep.subr.mxu0 0.0
        %4101 = vmatpush1.msra.mxu0 0.0
        %4102 = vmatprep.subr.mxu0 0.0
        %4103 = vmatpush1.msra.mxu0 0.0
        %4104 = vmatprep.subr.mxu0 0.0
        %4105 = vmatpush1.msra.mxu0 0.0
        %4106 = vmatprep.subr.mxu0 0.0
        %4107 = vmatpush1.msra.mxu0 0.0
        %4108 = vmatprep.subr.mxu0 0.0
        %4109 = vmatpush1.msra.mxu0 0.0
        %4110 = vmatprep.subr.mxu0 0.0
        %4111 = vmatpush1.msra.mxu0 %v4054
        %4112 = vmatprep.subr.mxu0 0.0
        %4113 = vmatpush1.msra.mxu0 %v4053
        %4114 = vmatprep.subr.mxu0 0.0
        %4115 = vmatpush1.msra.mxu0 %v4052
        %4116 = vmatprep.subr.mxu0 0.0
        %4117 = vmatpush1.msra.mxu0 %v4051
        %4118 = vmatprep.subr.mxu0 0.0
        %4119 = vmatpush2.msra.mxu0 0.0
        %4120 = vmatprep.subr.mxu0 0.0
        %4121 = vmatpush2.msra.mxu0 0.0
        %4122 = vmatprep.subr.mxu0 0.0
        %4123 = vmatpush2.msra.mxu0 0.0
        %4124 = vmatprep.subr.mxu0 0.0
        %4125 = vmatpush2.msra.mxu0 0.0
        %4126 = vmatprep.subr.mxu0 0.0
        %4127 = vmatpush2.msra.mxu0 0.0
        %4128 = vmatprep.subr.mxu0 0.0
        %4129 = vmatpush2.msra.mxu0 0.0
        %4130 = vmatprep.subr.mxu0 0.0
        %4131 = vmatpush2.msra.mxu0 0.0
        %4132 = vmatprep.subr.mxu0 0.0
        %4133 = vmatpush2.msra.mxu0 0.0
        %4134 = vmatprep.subr.mxu0 0.0
        %4135 = vmatpush2.msra.mxu0 0.0
        %4136 = vmatprep.subr.mxu0 0.0
        %4137 = vmatpush2.msra.mxu0 0.0
        %4138 = vmatprep.subr.mxu0 0.0
        %4139 = vmatpush2.msra.mxu0 0.0
        %4140 = vmatprep.subr.mxu0 0.0
        %4141 = vmatpush2.msra.mxu0 0.0
        %4142 = vmatprep.subr.mxu0 0.0
        %4143 = vmatpush2.msra.mxu0 0.0
        %4144 = vmatprep.subr.mxu0 0.0
        %4145 = vmatpush2.msra.mxu0 0.0
        %4146 = vmatprep.subr.mxu0 0.0
        %4147 = vmatpush2.msra.mxu0 0.0
        %4148 = vmatprep.subr.mxu0 0.0
        %4149 = vmatpush2.msra.mxu0 0.0
        %4150 = vmatprep.mubr.f32.mxu0 0.0
        %4151 = vmatmul.mubr.f32.gmra.mxu0 %v4063
        %v4152 = vpop.f32.mrf.mxu0
        %v4153 = vadd.f32 %v4060, %v4152
        %v4154 = vpop.f32.mrf.mxu0
        %4155 = vmatprep.mubr.f32.mxu0 0.0
        %4156 = vmatmul.mubr.f32.gmra.mxu0 %v4066
        %v4157 = vpop.f32.mrf.mxu0
        %v4158 = vadd.f32 %v4060, %v4157
        %v4159 = vpop.f32.mrf.mxu0
        %4160 = vmatprep.mubr.f32.mxu0 0.0
        %4161 = vmatmul.mubr.f32.gmra.mxu0 %v4069
        %v4162 = vpop.f32.mrf.mxu0
        %v4163 = vadd.f32 %v4060, %v4162
        %v4164 = vpop.f32.mrf.mxu0
        %4165 = vmatprep.mubr.f32.mxu0 0.0
        %4166 = vmatmul.mubr.f32.gmra.mxu0 %v4072
        %v4167 = vpop.f32.mrf.mxu0
        %v4168 = vadd.f32 %v4060, %v4167
        %v4169 = vpop.f32.mrf.mxu0
        %4170 = vmatprep.mubr.f32.mxu0 0.0
        %4171 = vmatmul.mubr.f32.gmra.mxu0 %v4075
        %v4172 = vpop.f32.mrf.mxu0
        %v4173 = vadd.f32 %v4060, %v4172
        %v4174 = vpop.f32.mrf.mxu0
        %4175 = vmatprep.mubr.f32.mxu0 0.0
        %4176 = vmatmul.mubr.f32.gmra.mxu0 %v4078
        %v4177 = vpop.f32.mrf.mxu0
        %v4178 = vadd.f32 %v4060, %v4177
        %v4179 = vpop.f32.mrf.mxu0
        %4180 = vmatprep.mubr.f32.mxu0 0.0
        %4181 = vmatmul.mubr.f32.gmra.mxu0 %v4081
        %v4182 = vpop.f32.mrf.mxu0
        %v4183 = vadd.f32 %v4060, %v4182
        %v4184 = vpop.f32.mrf.mxu0
        %4185 = vmatprep.mubr.f32.mxu0 0.0
        %4186 = vmatmul.mubr.f32.gmra.mxu0 %v4084
        %v4187 = vpop.f32.mrf.mxu0
        %v4188 = vadd.f32 %v4060, %v4187
        %v4189 = vpop.f32.mrf.mxu0
        %4190 = vdwg.mxu0
        %4191 = vst.msk [vmem:[%s248] sm:$0xff] %vm280, %v4153
        %4192 = vst.msk [vmem:[%s248 + $0x8] sm:$0xff] %vm280, %v4158
        %4193 = vst.msk [vmem:[%s248 + $0x10] sm:$0xff] %vm280, %v4163
        %4194 = vst.msk [vmem:[%s248 + $0x18] sm:$0xff] %vm280, %v4168
        %4195 = vst.msk [vmem:[%s248 + $0x20] sm:$0xff] %vm280, %v4173
        %4196 = vst.msk [vmem:[%s248 + $0x28] sm:$0xff] %vm280, %v4178
        %4197 = vst.msk [vmem:[%s248 + $0x30] sm:$0xff] %vm280, %v4183
        %4198 = vst.msk [vmem:[%s248 + $0x38] sm:$0xff] %vm280, %v4188
        %v4199 = vmul.f32 %v3841, 0.125
        %v4200 = vmul.f32 %v3842, 0.125
        %v4201 = vmul.f32 %v3843, 0.125
        %v4202 = vmul.f32 %v3844, 0.125
        %v4203 = vmul.f32 %v3845, 0.125
        %v4204 = vmul.f32 %v3846, 0.125
        %v4205 = vmul.f32 %v3847, 0.125
        %v4206 = vmul.f32 %v3848, 0.125
        %4207 = vst.msk [vmem:[%s255] sm:$0xff] %vm572, %v4199
        %4208 = vst.msk [vmem:[%s255 + $0x8] sm:$0xff] %vm572, %v4200
        %4209 = vst.msk [vmem:[%s255 + $0x10] sm:$0xff] %vm572, %v4201
        %4210 = vst.msk [vmem:[%s255 + $0x18] sm:$0xff] %vm572, %v4202
        %4211 = vst.msk [vmem:[%s255 + $0x20] sm:$0xff] %vm572, %v4203
        %4212 = vst.msk [vmem:[%s255 + $0x28] sm:$0xff] %vm572, %v4204
        %4213 = vst.msk [vmem:[%s255 + $0x30] sm:$0xff] %vm572, %v4205
        %4214 = vst.msk [vmem:[%s255 + $0x38] sm:$0xff] %vm572, %v4206
        %s4215 = sand.u32 %s142, 1
        %s4216 = scalar_lea.sflag [#allocation4], %s4215
        %s4217 = sand.u32 %s142, 1
        %s4218 = smul.addr %s4217, 64
        %s4219 = scalar_lea.vmem [#allocation3], %s4218
        %s4220 = sand.u32 %s168, 1
        %s4221 = scalar_lea.sflag [#allocation6], %s4220
        %s4222 = sand.u32 %s168, 1
        %s4223 = smul.addr %s4222, 64
        %s4224 = scalar_lea.vmem [#allocation5], %s4223
        // Predicated region
        $region41: #{self_attention_forward.1} parent=39 // pred_check
          %p4225 = pneg %p152
        $region42: #{self_attention_forward.1} parent=39 // pred_check_branch
          %4227 = sbr.rel (%p4225) target = $region44
        $region43: #{self_attention_forward.1} parent=39 // pred_region
          %s4229 = ssub.s32 1024, 1024
          %4230 = vsyncadd %s4216, %s4229
          %s4231 = smul.addr %s24, 8
          %s4232 = smul.addr %s4231, 128
          %s4233 = scalar_lea.hbm %s5, %s4232
          %s4234 = sshll.u32 %s4219, 4
          %s4235 = int_to_ptr.vmem [resolvable:$true] %s4234
          %4240 = dma.vmem_to_hbm [thread:$0]  %s4235, 1024, %s4233, %s4216, 128, 128, 8
        $region44: #{self_attention_forward.1} parent=39 // pred_fallthru
          _
        // Predicated region
        $region45: #{self_attention_forward.1} parent=39 // pred_check
          %p4241 = pneg %p178
        $region46: #{self_attention_forward.1} parent=39 // pred_check_branch
          %4243 = sbr.rel (%p4241) target = $region48
        $region47: #{self_attention_forward.1} parent=39 // pred_region
          %s4245 = ssub.s32 1024, 1024
          %4246 = vsyncadd %s4221, %s4245
          %s4247 = smul.addr %s24, 8
          %s4248 = smul.addr %s4247, 128
          %s4249 = scalar_lea.hbm %s6, %s4248
          %s4250 = sshll.u32 %s4224, 4
          %s4251 = int_to_ptr.vmem [resolvable:$true] %s4250
          %4256 = dma.vmem_to_hbm [thread:$0]  %s4251, 1024, %s4249, %s4221, 128, 128, 8
        $region48: #{self_attention_forward.1} parent=39 // pred_fallthru
          _
      $region40: #{self_attention_forward.1} parent=5 // pred_fallthru
        _
      %p4257 = scmp.le.s32.totalorder 2, %s19
      // Predicated region
      $region49: #{self_attention_forward.1} parent=5 // pred_check
        %p4258 = pneg %p4257
      $region50: #{self_attention_forward.1} parent=5 // pred_check_branch
        %4260 = sbr.rel (%p4258) target = $region52
      $region51: #{self_attention_forward.1} parent=5 // pred_region
        %s4261 = ssub.s32 %s19, 2
        // Predicated region
        $region53: #{self_attention_forward.1} parent=51 // pred_check
          %p4262 = pneg %p158
        $region54: #{self_attention_forward.1} parent=51 // pred_check_branch
          %4264 = sbr.rel (%p4262) target = $region56
        $region55: #{self_attention_forward.1} parent=51 // pred_region
          %s4265 = sand.u32 %s143, 1
          %s4266 = scalar_lea.sflag [#allocation4], %s4265
          %s4267 = sand.u32 %s143, 1
          %s4268 = smul.addr %s4267, 64
          %s4269 = scalar_lea.vmem [#allocation3], %s4268
          %4270 = dma.done %s4266, 1024
        $region56: #{self_attention_forward.1} parent=51 // pred_fallthru
          _
        // Predicated region
        $region57: #{self_attention_forward.1} parent=51 // pred_check
          %p4271 = pneg %p184
        $region58: #{self_attention_forward.1} parent=51 // pred_check_branch
          %4273 = sbr.rel (%p4271) target = $region60
        $region59: #{self_attention_forward.1} parent=51 // pred_region
          %s4274 = sand.u32 %s169, 1
          %s4275 = scalar_lea.sflag [#allocation6], %s4274
          %s4276 = sand.u32 %s169, 1
          %s4277 = smul.addr %s4276, 64
          %s4278 = scalar_lea.vmem [#allocation5], %s4277
          %4279 = dma.done %s4275, 1024
        $region60: #{self_attention_forward.1} parent=51 // pred_fallthru
          _
      $region52: #{self_attention_forward.1} parent=5 // pred_fallthru
        _
    $region6: #{self_attention_forward.1} parent=1 // loop_footer
      %s23 = sadd.s32 1, %s19
    $region7: #{self_attention_forward.1} parent=1 // loop_footer_branch
      %18 = sbr.rel target = $region3
    $region8: #{self_attention_forward.1} parent=1 // loop_exit
      _
    %4280 = vsyncpa [#allocation4], 1
    %s4281 = scalar_lea.sflag [#allocation4], 1
    %4282 = vsyncpa %s4281, 1
    %4283 = vsyncpa [#allocation6], 1
    %s4284 = scalar_lea.sflag [#allocation6], 1
    %4285 = vsyncpa %s4284, 1

</llo_original>
